<compile_context>
chip_gen: v5e
topology: v5e:2x2
jax: 0.10.0
libtpu: 0.0.40
codegen_flags: <defaults>
</compile_context>

<pallas_src>
import jax
import jax.numpy as jnp
from jax import lax
from jax.experimental import pallas as pl
from jax.experimental.pallas import tpu as pltpu

BN_EPS = 1e-6   # norm_cfg=dict(type='BN', eps=1e-06)
LANES = 128


def _round_up(x, m):
    return (x + m - 1) // m * m


# ----------------------------------------------------------------------------
# Pallas kernel: depthwise KxK "same" conv on one (batch, channel-tile, H-tile).
# ----------------------------------------------------------------------------
def _make_dw_kernel(K, TH, W8, TW, TC):
    """Kernel for one (n, c, h) grid step.

    Per step:
      - manual DMA of the (TH + K - 1, Wp, TC) halo'd input strip HBM -> VMEM,
      - per output row r and W-tile: K aligned strip loads (one per kh),
        <=8 sublane shifts per strip (one per kw residue), fp32 accumulation in
        two independent (span//8, 8, TC) register-resident accumulators,
      - lane-dense (span, TC) stores into the BlockSpec-pipelined output block.
    """
    n_wt = -(-W8 // TW)          # static number of W tiles
    RROWS = TH + K - 1
    n_res = min(8, K)            # kw residues mod 8

    def kernel(x_hbm, w_ref, b_ref, o_ref, xbuf, sem):
        n = pl.program_id(0)
        c = pl.program_id(1)
        h = pl.program_id(2)

        # Manual DMA of this step's halo'd H-strip (input stays in HBM/ANY).
        # TODO(synk): cross-step prefetch (double-buffered xbuf) would hide this
        # DMA, but needs the H axis marked "arbitrary"; exposure is ~3-6% for
        # K=13 so we keep all axes "parallel" (2 TCs on v7x) instead.
        cp = pltpu.make_async_copy(
            x_hbm.at[n, c, pl.ds(h * TH, RROWS), :, :], xbuf, sem)
        cp.start()
        bias = b_ref[...]        # (8, TC) fp32, one vreg, hoisted
        cp.wait()

        def row_body(r, carry):
            # TODO(synk): if W8 >= 256 convert this static loop to lax.fori_loop
            # (static Python unrolling does not bound live ranges).
            for wt in range(n_wt):
                w0 = wt * TW                       # static, multiple of 8
                span = min(TW, W8 - w0)            # multiple of 8
                nv = span // 8
                acc0 = jnp.zeros((nv, 8, TC), jnp.float32)
                acc1 = jnp.zeros((nv, 8, TC), jnp.float32)
                for kh in range(K):
                    # One aligned strip load per kh (K loads per row-tile).
                    strip = xbuf[r + kh, pl.ds(w0, span + K - 1), :]
                    strip = strip.astype(jnp.float32)          # (span+K-1, TC)
                    for s in range(n_res):
                        m_max = (K - 1 - s) // 8
                        L = span + 8 * m_max
                        # One sublane shift per residue, materialized once ...
                        sh3 = strip[s:s + L, :].reshape(L // 8, 8, TC)
                        for m in range(m_max + 1):
                            kw = s + 8 * m
                            # ... reused via a free whole-vreg leading-dim slice.
                            tap = sh3[m:m + nv]
                            # Weight: one aligned vld of a full (8,128) vreg,
                            # broadcast over the leading dim (free vreg reuse).
                            wv = w_ref[kh * K + kw][None]      # (1, 8, TC)
                            if (kh & 1) == 0:
                                acc0 = acc0 + tap * wv
                            else:
                                acc1 = acc1 + tap * wv
                res = (acc0 + acc1) + bias[None]
                o_ref[0, r, pl.ds(w0, span), :] = (
                    res.reshape(span, TC).astype(o_ref.dtype))
            return carry

        lax.fori_loop(0, TH, row_body, jnp.int32(0))

    return kernel


# ----------------------------------------------------------------------------
# Wrapper: layout (lane packing), padding, pallas_call.
# ----------------------------------------------------------------------------
def dilated_reparam_conv(x_nchw, w_ckk, bias_c, *, storage_dtype=None,
                         tile_h=32, tile_w=64):
    """Depthwise 'same' conv (stride 1, dilation 1) of the folded reparam block.

    x_nchw: (N, C, H, W); w_ckk: (C, K, K); bias_c: (C,).
    storage_dtype: HBM/VMEM storage dtype for activations (e.g. bf16 on
    v6e/v7x). Weights/bias always stay fp32; accumulation is always fp32.
    """
    N, C, H, W = x_nchw.shape
    K = int(w_ckk.shape[-1])
    P = K // 2
    sdt = jnp.dtype(storage_dtype) if storage_dtype is not None else x_nchw.dtype
    TC = LANES

    # Lane packing: fold G batch images into the lane axis when C < 128 so the
    # VPU lanes are not mostly zero-padded channels.
    # TODO(synk): for N == 1 with tiny C, fold groups of W columns into lanes.
    G = 1
    if C < TC and N > 1:
        gmax = max(1, TC // C)
        for g in range(min(N, gmax), 0, -1):
            if N % g == 0:
                G = g
                break
    NG, CG = N // G, G * C

    # NCHW -> (NG, H, W, G*C): lane packing fused into the NHWC transpose.
    # TODO(synk): keep the surrounding network NHWC (C multiple of 128) to
    # remove these wrapper transposes / pad / slice HBM passes entirely.
    x_nhwc = jnp.transpose(x_nchw.reshape(NG, G, C, H, W),
                           (0, 3, 4, 1, 2)).reshape(NG, H, W, CG)

    # Folded weights/bias: fp32, tiled across the packed batch group, and
    # pre-broadcast to a full (8, lane) vreg per tap.
    w_kkc = jnp.tile(jnp.transpose(w_ckk, (1, 2, 0)).astype(jnp.float32),
                     (1, 1, G))                                   # (K, K, CG)
    b_c = jnp.tile(bias_c.astype(jnp.float32), (G,))              # (CG,)

    C_pad = _round_up(CG, TC)
    Ct = C_pad // TC
    W8 = _round_up(W, 8)
    TW = max(8, min(_round_up(tile_w, 8), W8))
    TH = max(1, min(int(tile_h), H))
    Ht = -(-H // TH)
    H8 = Ht * TH
    Hp, Wp = H8 + K - 1, W8 + K - 1
    RROWS = TH + K - 1

    # Single pad: spatial halo + spatial round-up + channel pad to lane multiple.
    xpad = jnp.pad(x_nhwc.astype(sdt),
                   ((0, 0), (P, Hp - H - P), (P, Wp - W - P), (0, C_pad - CG)))
    # (NG, Ct, Hp, Wp, TC): channel tiles as a leading dim so the per-step DMA
    # slices only leading dims (free reshape when Ct == 1, the common case).
    x5 = jnp.transpose(xpad.reshape(NG, Hp, Wp, Ct, TC), (0, 3, 1, 2, 4))

    w_p = jnp.broadcast_to(
        jnp.pad(w_kkc, ((0, 0), (0, 0), (0, C_pad - CG))).reshape(K * K, 1, C_pad),
        (K * K, 8, C_pad))
    b_p = jnp.broadcast_to(
        jnp.pad(b_c, (0, C_pad - CG)).reshape(1, C_pad), (8, C_pad))

    kernel = _make_dw_kernel(K, TH, W8, TW, TC)

    # VMEM budget from actual block sizes; clamp to the queried device capacity.
    itemsize = jnp.dtype(sdt).itemsize
    need = (RROWS * Wp * TC * itemsize          # input strip scratch
            + 2 * TH * W8 * TC * itemsize       # output block (double-buffered)
            + 2 * K * K * 8 * TC * 4            # weights
            + 2 * 8 * TC * 4)                   # bias
    try:
        cap = int(pltpu.get_tpu_info().vmem_capacity_bytes)
    except Exception:
        cap = 128 << 20
    vmem_limit = int(min(int(cap * 0.9), max(32 << 20, need + (4 << 20))))

    out = pl.pallas_call(
        kernel,
        out_shape=jax.ShapeDtypeStruct((NG, H8, W8, C_pad), sdt),
        grid_spec=pltpu.PrefetchScalarGridSpec(
            num_scalar_prefetch=0,
            grid=(NG, Ct, Ht),
            in_specs=[
                pl.BlockSpec(memory_space=pl.ANY),                      # x (HBM)
                pl.BlockSpec((K * K, 8, TC), lambda n, c, h: (0, 0, c)),  # weights
                pl.BlockSpec((8, TC), lambda n, c, h: (0, c)),            # bias
            ],
            out_specs=pl.BlockSpec((1, TH, W8, TC), lambda n, c, h: (n, h, 0, c)),
            scratch_shapes=[
                pltpu.VMEM((RROWS, Wp, TC), sdt),     # halo'd input strip
                pltpu.SemaphoreType.DMA,
            ],
        ),
        compiler_params=pltpu.CompilerParams(
            dimension_semantics=("parallel", "parallel", "parallel"),
            vmem_limit_bytes=vmem_limit,
        ),
    )(x5, w_p, b_p)

    out = out[:, :H, :W, :CG]                               # drop padding
    out = out.reshape(NG, H, W, G, C)
    return jnp.transpose(out, (0, 3, 4, 1, 2)).reshape(N, C, H, W)


# ----------------------------------------------------------------------------
# Parameter folding (glue, mirrors the PyTorch reparam math exactly).
# NOTE: valid only with BN running statistics (eval / inference mode).
# ----------------------------------------------------------------------------
def fuse_bn(w_ckk, gamma, beta, mean, var, eps=BN_EPS):
    # conv has no bias in this block (bias=deploy=False / bias=False).
    std = jnp.sqrt(var + eps)
    scale = gamma / std
    return w_ckk * scale[:, None, None], beta - mean * scale


def dilated_to_nondilated(w_ckk, r):
    # equivalent of F.conv_transpose2d(kernel, ones(1,1,1,1), stride=r)
    C, k, _ = w_ckk.shape
    eq = r * (k - 1) + 1
    out = jnp.zeros((C, eq, eq), w_ckk.dtype)
    return out.at[:, ::r, ::r].set(w_ckk)


def embed_into_large(w_eq, K):
    C, e, _ = w_eq.shape
    pad = K // 2 - e // 2
    return jnp.pad(w_eq, ((0, 0), (pad, pad), (pad, pad)))


def branch_config(kernel_size):
    return {
        17: ([5, 9, 3, 3, 3], [1, 2, 4, 5, 7]),
        15: ([5, 7, 3, 3, 3], [1, 2, 3, 5, 7]),
        13: ([5, 7, 3, 3, 3], [1, 2, 3, 4, 5]),
        11: ([5, 5, 3, 3, 3], [1, 2, 3, 4, 5]),
        9: ([5, 5, 3, 3], [1, 2, 3, 4]),
        7: ([5, 3, 3], [1, 2, 3]),
        5: ([3, 3], [1, 2]),
    }[kernel_size]


def init_params(channels, kernel_size, key):
    ks, dils = branch_config(kernel_size)
    keys = jax.random.split(key, 2 + 6 * len(ks) + 4)
    it = iter(keys)

    def bn_params():
        gamma = 1.0 + 0.1 * jax.random.normal(next(it), (channels,), jnp.float32)
        beta = 0.1 * jax.random.normal(next(it), (channels,), jnp.float32)
        mean = 0.1 * jax.random.normal(next(it), (channels,), jnp.float32)
        var = jax.random.uniform(next(it), (channels,), jnp.float32, 0.5, 1.5)
        return gamma, beta, mean, var

    lk_w = 0.2 * jax.random.normal(next(it), (channels, kernel_size, kernel_size),
                                   jnp.float32)
    origin_bn = bn_params()
    branches = []
    for k, r in zip(ks, dils):
        w = 0.2 * jax.random.normal(next(it), (channels, k, k), jnp.float32)
        branches.append((k, r, w, bn_params()))
    return lk_w, origin_bn, branches


def merge_block(kernel_size, lk_w, origin_bn, branches):
    """Fold all branches + BNs into one (C,K,K) kernel and (C,) bias."""
    origin_k, origin_b = fuse_bn(lk_w, *origin_bn)
    for k, r, w, bnp in branches:
        bk, bb = fuse_bn(w, *bnp)
        eq = dilated_to_nondilated(bk, r)
        origin_k = origin_k + embed_into_large(eq, kernel_size)
        origin_b = origin_b + bb
    return origin_k, origin_b


# ----------------------------------------------------------------------------
# Public forward (NCHW in / NCHW out, matching the PyTorch module).
# ----------------------------------------------------------------------------
def dilated_reparam_block_forward(x_nchw, kernel_size, lk_w, origin_bn, branches,
                                  *, merged=None, storage_dtype=None,
                                  tile_h=32, tile_w=64):
    # Weight folding is pure weight-only work -> compute once outside the
    # per-forward path and pass it in via `merged`.
    if merged is None:
        merged = merge_block(kernel_size, lk_w, origin_bn, branches)
    merged_k, merged_b = merged
    return dilated_reparam_conv(x_nchw, merged_k, merged_b,
                                storage_dtype=storage_dtype,
                                tile_h=tile_h, tile_w=tile_w)


# ----------------------------------------------------------------------------
# Pure-JAX reference (literal branch-by-branch forward) for verification.
# ----------------------------------------------------------------------------
def reference_forward(x_nchw, kernel_size, lk_w, origin_bn, branches):
    C = x_nchw.shape[1]

    def dwconv(x, w_ckk, dil, pad):
        w = w_ckk[:, None, :, :]  # (C,1,k,k)
        return jax.lax.conv_general_dilated(
            x, w, window_strides=(1, 1),
            padding=[(pad, pad), (pad, pad)],
            rhs_dilation=(dil, dil),
            dimension_numbers=("NCHW", "OIHW", "NCHW"),
            feature_group_count=C)

    def bn(y, gamma, beta, mean, var, eps=BN_EPS):
        scale = (gamma / jnp.sqrt(var + eps))[None, :, None, None]
        return (y - mean[None, :, None, None]) * scale + beta[None, :, None, None]

    out = bn(dwconv(x_nchw, lk_w, 1, kernel_size // 2), *origin_bn)
    for k, r, w, bnp in branches:
        pad = (r * (k - 1) + 1) // 2
        out = out + bn(dwconv(x_nchw, w, r, pad), *bnp)
    return out


if __name__ == "__main__":
    kernel_size = 13
    key = jax.random.PRNGKey(0)
    k_x, k_p, k_x2 = jax.random.split(key, 3)

    # ---- main test: N=2, C=8 (exercises batch->lane packing, G=2) ----------
    N, C, H, W = 2, 8, 16, 16
    x = jax.random.normal(k_x, (N, C, H, W), jnp.float32)
    lk_w, origin_bn, branches = init_params(C, kernel_size, k_p)
    merged = merge_block(kernel_size, lk_w, origin_bn, branches)

    fwd = jax.jit(lambda xx: dilated_reparam_block_forward(
        xx, kernel_size, lk_w, origin_bn, branches, merged=merged))
    out = jax.block_until_ready(fwd(x))
    ref = jax.block_until_ready(
        reference_forward(x, kernel_size, lk_w, origin_bn, branches))
    assert out.shape == (N, C, H, W), out.shape
    if not jnp.allclose(out, ref, atol=1e-3, rtol=1e-3):
        max_err = float(jnp.max(jnp.abs(out - ref)))
        raise AssertionError(f"fp32 mismatch vs reference, max abs err = {max_err}")

    # ---- second test: exercises H-tiling (Ht>1), multiple W tiles, padding --
    N2, C2, H2, W2 = 1, 8, 20, 36
    x2 = jax.random.normal(k_x2, (N2, C2, H2, W2), jnp.float32)
    fwd2 = jax.jit(lambda xx: dilated_reparam_block_forward(
        xx, kernel_size, lk_w, origin_bn, branches, merged=merged,
        tile_h=8, tile_w=16))
    out2 = jax.block_until_ready(fwd2(x2))
    ref2 = jax.block_until_ready(
        reference_forward(x2, kernel_size, lk_w, origin_bn, branches))
    if not jnp.allclose(out2, ref2, atol=1e-3, rtol=1e-3):
        max_err = float(jnp.max(jnp.abs(out2 - ref2)))
        raise AssertionError(f"tiled fp32 mismatch vs reference, max abs err = {max_err}")

    # ---- bf16-storage path (fp32 weights + fp32 accumulation inside) -------
    fwd_bf16 = jax.jit(lambda xx: dilated_reparam_block_forward(
        xx, kernel_size, lk_w, origin_bn, branches, merged=merged,
        storage_dtype=jnp.bfloat16))
    out_bf16 = jax.block_until_ready(fwd_bf16(x))
    max_err_bf16 = float(jnp.max(jnp.abs(out_bf16.astype(jnp.float32) - ref)))
    if max_err_bf16 > 0.35:
        raise AssertionError(f"bf16 path deviates too much: {max_err_bf16}")

    print("KERNEL_OK")
</pallas_src>

<mosaic_0001>
module attributes {stable_mosaic.version = 11 : i64} {
  func.func @kernel(%arg0: i32, %arg1: i32, %arg2: i32, %arg3: memref<1x1x28x28x128xf32, #tpu.memory_space<any>>, %arg4: memref<169x8x128xf32, #tpu.memory_space<vmem>>, %arg5: memref<8x128xf32, #tpu.memory_space<vmem>>, %arg6: memref<1x16x16x128xf32, #tpu.memory_space<vmem>>, %arg7: memref<28x28x128xf32, #tpu.memory_space<vmem>>, %arg8: memref<!tpu.dma_semaphore, #tpu.memory_space<semaphore_mem>>) attributes {dimension_semantics = [#tpu.dimension_semantics<parallel>, #tpu.dimension_semantics<parallel>, #tpu.dimension_semantics<parallel>], iteration_bounds = array<i64: 1, 1, 1>, scalar_prefetch = 0 : i64, scratch_operands = 2 : i64, tpu.core_type = #tpu.core_type<tc>, window_params = [{}, {transform_indices = @transform_1, window_bounds = array<i64: 169, 8, 128>}, {transform_indices = @transform_2, window_bounds = array<i64: 8, 128>}, {transform_indices = @transform_3, window_bounds = array<i64: 1, 16, 16, 128>}]} {
    %c16_i32 = arith.constant 16 : i32
    %0 = arith.muli %arg2, %c16_i32 : i32
    %c0_i32 = arith.constant 0 : i32
    %c0_i32_0 = arith.constant 0 : i32
    %1 = tpu.memref_slice %arg3[%arg0, %arg1, %0, %c0_i32, %c0_i32_0] : memref<1x1x28x28x128xf32, #tpu.memory_space<any>> -> memref<1x1x28x28x128xf32, #tpu.memory_space<any>>
    %2 = tpu.memref_squeeze %1 : memref<1x1x28x28x128xf32, #tpu.memory_space<any>> -> memref<28x28x128xf32, #tpu.memory_space<any>>
    tpu.enqueue_dma source(%2 : memref<28x28x128xf32, #tpu.memory_space<any>>) target(%arg7 : memref<28x28x128xf32, #tpu.memory_space<vmem>>) target_semaphore(%arg8 : memref<!tpu.dma_semaphore, #tpu.memory_space<semaphore_mem>>)
    %c0 = arith.constant 0 : index
    %c0_1 = arith.constant 0 : index
    %3 = vector.load %arg5[%c0, %c0_1] : memref<8x128xf32, #tpu.memory_space<vmem>>, vector<8x128xf32>
    %c0_i32_2 = arith.constant 0 : i32
    %c0_i32_3 = arith.constant 0 : i32
    %4 = tpu.memref_slice %arg3[%arg0, %arg1, %0, %c0_i32_2, %c0_i32_3] : memref<1x1x28x28x128xf32, #tpu.memory_space<any>> -> memref<1x1x28x28x128xf32, #tpu.memory_space<any>>
    %5 = tpu.memref_squeeze %4 : memref<1x1x28x28x128xf32, #tpu.memory_space<any>> -> memref<28x28x128xf32, #tpu.memory_space<any>>
    tpu.wait_dma2 semaphore(%arg8 : memref<!tpu.dma_semaphore, #tpu.memory_space<semaphore_mem>>) src(%5 : memref<28x28x128xf32, #tpu.memory_space<any>>) dst(%arg7 : memref<28x28x128xf32, #tpu.memory_space<vmem>>)
    %c0_i32_4 = arith.constant 0 : i32
    %c16_i32_5 = arith.constant 16 : i32
    %6 = arith.addi %c0_i32_4, %c16_i32_5 : i32
    %c1_i32 = arith.constant 1 : i32
    scf.for %arg9 = %c0_i32_4 to %6 step %c1_i32  : i32 {
      %cst = arith.constant 0.000000e+00 : f32
      %7 = vector.broadcast %cst : f32 to vector<2x8x128xf32>
      %cst_7 = arith.constant 0.000000e+00 : f32
      %8 = vector.broadcast %cst_7 : f32 to vector<2x8x128xf32>
      %c0_i32_8 = arith.constant 0 : i32
      %9 = arith.addi %arg9, %c0_i32_8 : i32
      %10 = arith.index_cast %9 : i32 to index
      %c0_9 = arith.constant 0 : index
      %c0_10 = arith.constant 0 : index
      %11 = vector.load %arg7[%10, %c0_9, %c0_10] : memref<28x28x128xf32, #tpu.memory_space<vmem>>, vector<1x28x128xf32>
      %12 = vector.shape_cast %11 : vector<1x28x128xf32> to vector<28x128xf32>
      %13 = vector.extract_strided_slice %12 {offsets = [0, 0], sizes = [24, 128], strides = [1, 1]} : vector<28x128xf32> to vector<24x128xf32>
      %14 = vector.shape_cast %13 : vector<24x128xf32> to vector<3x8x128xf32>
      %15 = vector.extract_strided_slice %14 {offsets = [0, 0, 0], sizes = [2, 8, 128], strides = [1, 1, 1]} : vector<3x8x128xf32> to vector<2x8x128xf32>
      %c0_11 = arith.constant 0 : index
      %c0_12 = arith.constant 0 : index
      %c0_13 = arith.constant 0 : index
      %16 = vector.load %arg4[%c0_11, %c0_12, %c0_13] : memref<169x8x128xf32, #tpu.memory_space<vmem>>, vector<1x8x128xf32>
      %17 = vector.shape_cast %16 : vector<1x8x128xf32> to vector<8x128xf32>
      %18 = vector.shape_cast %17 : vector<8x128xf32> to vector<1x8x128xf32>
      %19 = vector.broadcast %18 : vector<1x8x128xf32> to vector<2x8x128xf32>
      %20 = arith.mulf %15, %19 : vector<2x8x128xf32>
      %21 = arith.addf %7, %20 : vector<2x8x128xf32>
      %22 = vector.extract_strided_slice %14 {offsets = [1, 0, 0], sizes = [2, 8, 128], strides = [1, 1, 1]} : vector<3x8x128xf32> to vector<2x8x128xf32>
      %c8 = arith.constant 8 : index
      %c0_14 = arith.constant 0 : index
      %c0_15 = arith.constant 0 : index
      %23 = vector.load %arg4[%c8, %c0_14, %c0_15] : memref<169x8x128xf32, #tpu.memory_space<vmem>>, vector<1x8x128xf32>
      %24 = vector.shape_cast %23 : vector<1x8x128xf32> to vector<8x128xf32>
      %25 = vector.shape_cast %24 : vector<8x128xf32> to vector<1x8x128xf32>
      %26 = vector.broadcast %25 : vector<1x8x128xf32> to vector<2x8x128xf32>
      %27 = arith.mulf %22, %26 : vector<2x8x128xf32>
      %28 = arith.addf %21, %27 : vector<2x8x128xf32>
      %29 = vector.extract_strided_slice %12 {offsets = [1, 0], sizes = [24, 128], strides = [1, 1]} : vector<28x128xf32> to vector<24x128xf32>
      %30 = vector.shape_cast %29 : vector<24x128xf32> to vector<3x8x128xf32>
      %31 = vector.extract_strided_slice %30 {offsets = [0, 0, 0], sizes = [2, 8, 128], strides = [1, 1, 1]} : vector<3x8x128xf32> to vector<2x8x128xf32>
      %c1 = arith.constant 1 : index
      %c0_16 = arith.constant 0 : index
      %c0_17 = arith.constant 0 : index
      %32 = vector.load %arg4[%c1, %c0_16, %c0_17] : memref<169x8x128xf32, #tpu.memory_space<vmem>>, vector<1x8x128xf32>
      %33 = vector.shape_cast %32 : vector<1x8x128xf32> to vector<8x128xf32>
      %34 = vector.shape_cast %33 : vector<8x128xf32> to vector<1x8x128xf32>
      %35 = vector.broadcast %34 : vector<1x8x128xf32> to vector<2x8x128xf32>
      %36 = arith.mulf %31, %35 : vector<2x8x128xf32>
      %37 = arith.addf %28, %36 : vector<2x8x128xf32>
      %38 = vector.extract_strided_slice %30 {offsets = [1, 0, 0], sizes = [2, 8, 128], strides = [1, 1, 1]} : vector<3x8x128xf32> to vector<2x8x128xf32>
      %c9 = arith.constant 9 : index
      %c0_18 = arith.constant 0 : index
      %c0_19 = arith.constant 0 : index
      %39 = vector.load %arg4[%c9, %c0_18, %c0_19] : memref<169x8x128xf32, #tpu.memory_space<vmem>>, vector<1x8x128xf32>
      %40 = vector.shape_cast %39 : vector<1x8x128xf32> to vector<8x128xf32>
      %41 = vector.shape_cast %40 : vector<8x128xf32> to vector<1x8x128xf32>
      %42 = vector.broadcast %41 : vector<1x8x128xf32> to vector<2x8x128xf32>
      %43 = arith.mulf %38, %42 : vector<2x8x128xf32>
      %44 = arith.addf %37, %43 : vector<2x8x128xf32>
      %45 = vector.extract_strided_slice %12 {offsets = [2, 0], sizes = [24, 128], strides = [1, 1]} : vector<28x128xf32> to vector<24x128xf32>
      %46 = vector.shape_cast %45 : vector<24x128xf32> to vector<3x8x128xf32>
      %47 = vector.extract_strided_slice %46 {offsets = [0, 0, 0], sizes = [2, 8, 128], strides = [1, 1, 1]} : vector<3x8x128xf32> to vector<2x8x128xf32>
      %c2 = arith.constant 2 : index
      %c0_20 = arith.constant 0 : index
      %c0_21 = arith.constant 0 : index
      %48 = vector.load %arg4[%c2, %c0_20, %c0_21] : memref<169x8x128xf32, #tpu.memory_space<vmem>>, vector<1x8x128xf32>
      %49 = vector.shape_cast %48 : vector<1x8x128xf32> to vector<8x128xf32>
      %50 = vector.shape_cast %49 : vector<8x128xf32> to vector<1x8x128xf32>
      %51 = vector.broadcast %50 : vector<1x8x128xf32> to vector<2x8x128xf32>
      %52 = arith.mulf %47, %51 : vector<2x8x128xf32>
      %53 = arith.addf %44, %52 : vector<2x8x128xf32>
      %54 = vector.extract_strided_slice %46 {offsets = [1, 0, 0], sizes = [2, 8, 128], strides = [1, 1, 1]} : vector<3x8x128xf32> to vector<2x8x128xf32>
      %c10 = arith.constant 10 : index
      %c0_22 = arith.constant 0 : index
      %c0_23 = arith.constant 0 : index
      %55 = vector.load %arg4[%c10, %c0_22, %c0_23] : memref<169x8x128xf32, #tpu.memory_space<vmem>>, vector<1x8x128xf32>
      %56 = vector.shape_cast %55 : vector<1x8x128xf32> to vector<8x128xf32>
      %57 = vector.shape_cast %56 : vector<8x128xf32> to vector<1x8x128xf32>
      %58 = vector.broadcast %57 : vector<1x8x128xf32> to vector<2x8x128xf32>
      %59 = arith.mulf %54, %58 : vector<2x8x128xf32>
      %60 = arith.addf %53, %59 : vector<2x8x128xf32>
      %61 = vector.extract_strided_slice %12 {offsets = [3, 0], sizes = [24, 128], strides = [1, 1]} : vector<28x128xf32> to vector<24x128xf32>
      %62 = vector.shape_cast %61 : vector<24x128xf32> to vector<3x8x128xf32>
      %63 = vector.extract_strided_slice %62 {offsets = [0, 0, 0], sizes = [2, 8, 128], strides = [1, 1, 1]} : vector<3x8x128xf32> to vector<2x8x128xf32>
      %c3 = arith.constant 3 : index
      %c0_24 = arith.constant 0 : index
      %c0_25 = arith.constant 0 : index
      %64 = vector.load %arg4[%c3, %c0_24, %c0_25] : memref<169x8x128xf32, #tpu.memory_space<vmem>>, vector<1x8x128xf32>
      %65 = vector.shape_cast %64 : vector<1x8x128xf32> to vector<8x128xf32>
      %66 = vector.shape_cast %65 : vector<8x128xf32> to vector<1x8x128xf32>
      %67 = vector.broadcast %66 : vector<1x8x128xf32> to vector<2x8x128xf32>
      %68 = arith.mulf %63, %67 : vector<2x8x128xf32>
      %69 = arith.addf %60, %68 : vector<2x8x128xf32>
      %70 = vector.extract_strided_slice %62 {offsets = [1, 0, 0], sizes = [2, 8, 128], strides = [1, 1, 1]} : vector<3x8x128xf32> to vector<2x8x128xf32>
      %c11 = arith.constant 11 : index
      %c0_26 = arith.constant 0 : index
      %c0_27 = arith.constant 0 : index
      %71 = vector.load %arg4[%c11, %c0_26, %c0_27] : memref<169x8x128xf32, #tpu.memory_space<vmem>>, vector<1x8x128xf32>
      %72 = vector.shape_cast %71 : vector<1x8x128xf32> to vector<8x128xf32>
      %73 = vector.shape_cast %72 : vector<8x128xf32> to vector<1x8x128xf32>
      %74 = vector.broadcast %73 : vector<1x8x128xf32> to vector<2x8x128xf32>
      %75 = arith.mulf %70, %74 : vector<2x8x128xf32>
      %76 = arith.addf %69, %75 : vector<2x8x128xf32>
      %77 = vector.extract_strided_slice %12 {offsets = [4, 0], sizes = [24, 128], strides = [1, 1]} : vector<28x128xf32> to vector<24x128xf32>
      %78 = vector.shape_cast %77 : vector<24x128xf32> to vector<3x8x128xf32>
      %79 = vector.extract_strided_slice %78 {offsets = [0, 0, 0], sizes = [2, 8, 128], strides = [1, 1, 1]} : vector<3x8x128xf32> to vector<2x8x128xf32>
      %c4 = arith.constant 4 : index
      %c0_28 = arith.constant 0 : index
      %c0_29 = arith.constant 0 : index
      %80 = vector.load %arg4[%c4, %c0_28, %c0_29] : memref<169x8x128xf32, #tpu.memory_space<vmem>>, vector<1x8x128xf32>
      %81 = vector.shape_cast %80 : vector<1x8x128xf32> to vector<8x128xf32>
      %82 = vector.shape_cast %81 : vector<8x128xf32> to vector<1x8x128xf32>
      %83 = vector.broadcast %82 : vector<1x8x128xf32> to vector<2x8x128xf32>
      %84 = arith.mulf %79, %83 : vector<2x8x128xf32>
      %85 = arith.addf %76, %84 : vector<2x8x128xf32>
      %86 = vector.extract_strided_slice %78 {offsets = [1, 0, 0], sizes = [2, 8, 128], strides = [1, 1, 1]} : vector<3x8x128xf32> to vector<2x8x128xf32>
      %c12 = arith.constant 12 : index
      %c0_30 = arith.constant 0 : index
      %c0_31 = arith.constant 0 : index
      %87 = vector.load %arg4[%c12, %c0_30, %c0_31] : memref<169x8x128xf32, #tpu.memory_space<vmem>>, vector<1x8x128xf32>
      %88 = vector.shape_cast %87 : vector<1x8x128xf32> to vector<8x128xf32>
      %89 = vector.shape_cast %88 : vector<8x128xf32> to vector<1x8x128xf32>
      %90 = vector.broadcast %89 : vector<1x8x128xf32> to vector<2x8x128xf32>
      %91 = arith.mulf %86, %90 : vector<2x8x128xf32>
      %92 = arith.addf %85, %91 : vector<2x8x128xf32>
      %93 = vector.extract_strided_slice %12 {offsets = [5, 0], sizes = [16, 128], strides = [1, 1]} : vector<28x128xf32> to vector<16x128xf32>
      %94 = vector.shape_cast %93 : vector<16x128xf32> to vector<2x8x128xf32>
      %c5 = arith.constant 5 : index
      %c0_32 = arith.constant 0 : index
      %c0_33 = arith.constant 0 : index
      %95 = vector.load %arg4[%c5, %c0_32, %c0_33] : memref<169x8x128xf32, #tpu.memory_space<vmem>>, vector<1x8x128xf32>
      %96 = vector.shape_cast %95 : vector<1x8x128xf32> to vector<8x128xf32>
      %97 = vector.shape_cast %96 : vector<8x128xf32> to vector<1x8x128xf32>
      %98 = vector.broadcast %97 : vector<1x8x128xf32> to vector<2x8x128xf32>
      %99 = arith.mulf %94, %98 : vector<2x8x128xf32>
      %100 = arith.addf %92, %99 : vector<2x8x128xf32>
      %101 = vector.extract_strided_slice %12 {offsets = [6, 0], sizes = [16, 128], strides = [1, 1]} : vector<28x128xf32> to vector<16x128xf32>
      %102 = vector.shape_cast %101 : vector<16x128xf32> to vector<2x8x128xf32>
      %c6 = arith.constant 6 : index
      %c0_34 = arith.constant 0 : index
      %c0_35 = arith.constant 0 : index
      %103 = vector.load %arg4[%c6, %c0_34, %c0_35] : memref<169x8x128xf32, #tpu.memory_space<vmem>>, vector<1x8x128xf32>
      %104 = vector.shape_cast %103 : vector<1x8x128xf32> to vector<8x128xf32>
      %105 = vector.shape_cast %104 : vector<8x128xf32> to vector<1x8x128xf32>
      %106 = vector.broadcast %105 : vector<1x8x128xf32> to vector<2x8x128xf32>
      %107 = arith.mulf %102, %106 : vector<2x8x128xf32>
      %108 = arith.addf %100, %107 : vector<2x8x128xf32>
      %109 = vector.extract_strided_slice %12 {offsets = [7, 0], sizes = [16, 128], strides = [1, 1]} : vector<28x128xf32> to vector<16x128xf32>
      %110 = vector.shape_cast %109 : vector<16x128xf32> to vector<2x8x128xf32>
      %c7 = arith.constant 7 : index
      %c0_36 = arith.constant 0 : index
      %c0_37 = arith.constant 0 : index
      %111 = vector.load %arg4[%c7, %c0_36, %c0_37] : memref<169x8x128xf32, #tpu.memory_space<vmem>>, vector<1x8x128xf32>
      %112 = vector.shape_cast %111 : vector<1x8x128xf32> to vector<8x128xf32>
      %113 = vector.shape_cast %112 : vector<8x128xf32> to vector<1x8x128xf32>
      %114 = vector.broadcast %113 : vector<1x8x128xf32> to vector<2x8x128xf32>
      %115 = arith.mulf %110, %114 : vector<2x8x128xf32>
      %116 = arith.addf %108, %115 : vector<2x8x128xf32>
      %c1_i32_38 = arith.constant 1 : i32
      %117 = arith.addi %arg9, %c1_i32_38 : i32
      %118 = arith.index_cast %117 : i32 to index
      %c0_39 = arith.constant 0 : index
      %c0_40 = arith.constant 0 : index
      %119 = vector.load %arg7[%118, %c0_39, %c0_40] : memref<28x28x128xf32, #tpu.memory_space<vmem>>, vector<1x28x128xf32>
      %120 = vector.shape_cast %119 : vector<1x28x128xf32> to vector<28x128xf32>
      %121 = vector.extract_strided_slice %120 {offsets = [0, 0], sizes = [24, 128], strides = [1, 1]} : vector<28x128xf32> to vector<24x128xf32>
      %122 = vector.shape_cast %121 : vector<24x128xf32> to vector<3x8x128xf32>
      %123 = vector.extract_strided_slice %122 {offsets = [0, 0, 0], sizes = [2, 8, 128], strides = [1, 1, 1]} : vector<3x8x128xf32> to vector<2x8x128xf32>
      %c13 = arith.constant 13 : index
      %c0_41 = arith.constant 0 : index
      %c0_42 = arith.constant 0 : index
      %124 = vector.load %arg4[%c13, %c0_41, %c0_42] : memref<169x8x128xf32, #tpu.memory_space<vmem>>, vector<1x8x128xf32>
      %125 = vector.shape_cast %124 : vector<1x8x128xf32> to vector<8x128xf32>
      %126 = vector.shape_cast %125 : vector<8x128xf32> to vector<1x8x128xf32>
      %127 = vector.broadcast %126 : vector<1x8x128xf32> to vector<2x8x128xf32>
      %128 = arith.mulf %123, %127 : vector<2x8x128xf32>
      %129 = arith.addf %8, %128 : vector<2x8x128xf32>
      %130 = vector.extract_strided_slice %122 {offsets = [1, 0, 0], sizes = [2, 8, 128], strides = [1, 1, 1]} : vector<3x8x128xf32> to vector<2x8x128xf32>
      %c21 = arith.constant 21 : index
      %c0_43 = arith.constant 0 : index
      %c0_44 = arith.constant 0 : index
      %131 = vector.load %arg4[%c21, %c0_43, %c0_44] : memref<169x8x128xf32, #tpu.memory_space<vmem>>, vector<1x8x128xf32>
      %132 = vector.shape_cast %131 : vector<1x8x128xf32> to vector<8x128xf32>
      %133 = vector.shape_cast %132 : vector<8x128xf32> to vector<1x8x128xf32>
      %134 = vector.broadcast %133 : vector<1x8x128xf32> to vector<2x8x128xf32>
      %135 = arith.mulf %130, %134 : vector<2x8x128xf32>
      %136 = arith.addf %129, %135 : vector<2x8x128xf32>
      %137 = vector.extract_strided_slice %120 {offsets = [1, 0], sizes = [24, 128], strides = [1, 1]} : vector<28x128xf32> to vector<24x128xf32>
      %138 = vector.shape_cast %137 : vector<24x128xf32> to vector<3x8x128xf32>
      %139 = vector.extract_strided_slice %138 {offsets = [0, 0, 0], sizes = [2, 8, 128], strides = [1, 1, 1]} : vector<3x8x128xf32> to vector<2x8x128xf32>
      %c14 = arith.constant 14 : index
      %c0_45 = arith.constant 0 : index
      %c0_46 = arith.constant 0 : index
      %140 = vector.load %arg4[%c14, %c0_45, %c0_46] : memref<169x8x128xf32, #tpu.memory_space<vmem>>, vector<1x8x128xf32>
      %141 = vector.shape_cast %140 : vector<1x8x128xf32> to vector<8x128xf32>
      %142 = vector.shape_cast %141 : vector<8x128xf32> to vector<1x8x128xf32>
      %143 = vector.broadcast %142 : vector<1x8x128xf32> to vector<2x8x128xf32>
      %144 = arith.mulf %139, %143 : vector<2x8x128xf32>
      %145 = arith.addf %136, %144 : vector<2x8x128xf32>
      %146 = vector.extract_strided_slice %138 {offsets = [1, 0, 0], sizes = [2, 8, 128], strides = [1, 1, 1]} : vector<3x8x128xf32> to vector<2x8x128xf32>
      %c22 = arith.constant 22 : index
      %c0_47 = arith.constant 0 : index
      %c0_48 = arith.constant 0 : index
      %147 = vector.load %arg4[%c22, %c0_47, %c0_48] : memref<169x8x128xf32, #tpu.memory_space<vmem>>, vector<1x8x128xf32>
      %148 = vector.shape_cast %147 : vector<1x8x128xf32> to vector<8x128xf32>
      %149 = vector.shape_cast %148 : vector<8x128xf32> to vector<1x8x128xf32>
      %150 = vector.broadcast %149 : vector<1x8x128xf32> to vector<2x8x128xf32>
      %151 = arith.mulf %146, %150 : vector<2x8x128xf32>
      %152 = arith.addf %145, %151 : vector<2x8x128xf32>
      %153 = vector.extract_strided_slice %120 {offsets = [2, 0], sizes = [24, 128], strides = [1, 1]} : vector<28x128xf32> to vector<24x128xf32>
      %154 = vector.shape_cast %153 : vector<24x128xf32> to vector<3x8x128xf32>
      %155 = vector.extract_strided_slice %154 {offsets = [0, 0, 0], sizes = [2, 8, 128], strides = [1, 1, 1]} : vector<3x8x128xf32> to vector<2x8x128xf32>
      %c15 = arith.constant 15 : index
      %c0_49 = arith.constant 0 : index
      %c0_50 = arith.constant 0 : index
      %156 = vector.load %arg4[%c15, %c0_49, %c0_50] : memref<169x8x128xf32, #tpu.memory_space<vmem>>, vector<1x8x128xf32>
      %157 = vector.shape_cast %156 : vector<1x8x128xf32> to vector<8x128xf32>
      %158 = vector.shape_cast %157 : vector<8x128xf32> to vector<1x8x128xf32>
      %159 = vector.broadcast %158 : vector<1x8x128xf32> to vector<2x8x128xf32>
      %160 = arith.mulf %155, %159 : vector<2x8x128xf32>
      %161 = arith.addf %152, %160 : vector<2x8x128xf32>
      %162 = vector.extract_strided_slice %154 {offsets = [1, 0, 0], sizes = [2, 8, 128], strides = [1, 1, 1]} : vector<3x8x128xf32> to vector<2x8x128xf32>
      %c23 = arith.constant 23 : index
      %c0_51 = arith.constant 0 : index
      %c0_52 = arith.constant 0 : index
      %163 = vector.load %arg4[%c23, %c0_51, %c0_52] : memref<169x8x128xf32, #tpu.memory_space<vmem>>, vector<1x8x128xf32>
      %164 = vector.shape_cast %163 : vector<1x8x128xf32> to vector<8x128xf32>
      %165 = vector.shape_cast %164 : vector<8x128xf32> to vector<1x8x128xf32>
      %166 = vector.broadcast %165 : vector<1x8x128xf32> to vector<2x8x128xf32>
      %167 = arith.mulf %162, %166 : vector<2x8x128xf32>
      %168 = arith.addf %161, %167 : vector<2x8x128xf32>
      %169 = vector.extract_strided_slice %120 {offsets = [3, 0], sizes = [24, 128], strides = [1, 1]} : vector<28x128xf32> to vector<24x128xf32>
      %170 = vector.shape_cast %169 : vector<24x128xf32> to vector<3x8x128xf32>
      %171 = vector.extract_strided_slice %170 {offsets = [0, 0, 0], sizes = [2, 8, 128], strides = [1, 1, 1]} : vector<3x8x128xf32> to vector<2x8x128xf32>
      %c16 = arith.constant 16 : index
      %c0_53 = arith.constant 0 : index
      %c0_54 = arith.constant 0 : index
      %172 = vector.load %arg4[%c16, %c0_53, %c0_54] : memref<169x8x128xf32, #tpu.memory_space<vmem>>, vector<1x8x128xf32>
      %173 = vector.shape_cast %172 : vector<1x8x128xf32> to vector<8x128xf32>
      %174 = vector.shape_cast %173 : vector<8x128xf32> to vector<1x8x128xf32>
      %175 = vector.broadcast %174 : vector<1x8x128xf32> to vector<2x8x128xf32>
      %176 = arith.mulf %171, %175 : vector<2x8x128xf32>
      %177 = arith.addf %168, %176 : vector<2x8x128xf32>
      %178 = vector.extract_strided_slice %170 {offsets = [1, 0, 0], sizes = [2, 8, 128], strides = [1, 1, 1]} : vector<3x8x128xf32> to vector<2x8x128xf32>
      %c24 = arith.constant 24 : index
      %c0_55 = arith.constant 0 : index
      %c0_56 = arith.constant 0 : index
      %179 = vector.load %arg4[%c24, %c0_55, %c0_56] : memref<169x8x128xf32, #tpu.memory_space<vmem>>, vector<1x8x128xf32>
      %180 = vector.shape_cast %179 : vector<1x8x128xf32> to vector<8x128xf32>
      %181 = vector.shape_cast %180 : vector<8x128xf32> to vector<1x8x128xf32>
      %182 = vector.broadcast %181 : vector<1x8x128xf32> to vector<2x8x128xf32>
      %183 = arith.mulf %178, %182 : vector<2x8x128xf32>
      %184 = arith.addf %177, %183 : vector<2x8x128xf32>
      %185 = vector.extract_strided_slice %120 {offsets = [4, 0], sizes = [24, 128], strides = [1, 1]} : vector<28x128xf32> to vector<24x128xf32>
      %186 = vector.shape_cast %185 : vector<24x128xf32> to vector<3x8x128xf32>
      %187 = vector.extract_strided_slice %186 {offsets = [0, 0, 0], sizes = [2, 8, 128], strides = [1, 1, 1]} : vector<3x8x128xf32> to vector<2x8x128xf32>
      %c17 = arith.constant 17 : index
      %c0_57 = arith.constant 0 : index
      %c0_58 = arith.constant 0 : index
      %188 = vector.load %arg4[%c17, %c0_57, %c0_58] : memref<169x8x128xf32, #tpu.memory_space<vmem>>, vector<1x8x128xf32>
      %189 = vector.shape_cast %188 : vector<1x8x128xf32> to vector<8x128xf32>
      %190 = vector.shape_cast %189 : vector<8x128xf32> to vector<1x8x128xf32>
      %191 = vector.broadcast %190 : vector<1x8x128xf32> to vector<2x8x128xf32>
      %192 = arith.mulf %187, %191 : vector<2x8x128xf32>
      %193 = arith.addf %184, %192 : vector<2x8x128xf32>
      %194 = vector.extract_strided_slice %186 {offsets = [1, 0, 0], sizes = [2, 8, 128], strides = [1, 1, 1]} : vector<3x8x128xf32> to vector<2x8x128xf32>
      %c25 = arith.constant 25 : index
      %c0_59 = arith.constant 0 : index
      %c0_60 = arith.constant 0 : index
      %195 = vector.load %arg4[%c25, %c0_59, %c0_60] : memref<169x8x128xf32, #tpu.memory_space<vmem>>, vector<1x8x128xf32>
      %196 = vector.shape_cast %195 : vector<1x8x128xf32> to vector<8x128xf32>
      %197 = vector.shape_cast %196 : vector<8x128xf32> to vector<1x8x128xf32>
      %198 = vector.broadcast %197 : vector<1x8x128xf32> to vector<2x8x128xf32>
      %199 = arith.mulf %194, %198 : vector<2x8x128xf32>
      %200 = arith.addf %193, %199 : vector<2x8x128xf32>
      %201 = vector.extract_strided_slice %120 {offsets = [5, 0], sizes = [16, 128], strides = [1, 1]} : vector<28x128xf32> to vector<16x128xf32>
      %202 = vector.shape_cast %201 : vector<16x128xf32> to vector<2x8x128xf32>
      %c18 = arith.constant 18 : index
      %c0_61 = arith.constant 0 : index
      %c0_62 = arith.constant 0 : index
      %203 = vector.load %arg4[%c18, %c0_61, %c0_62] : memref<169x8x128xf32, #tpu.memory_space<vmem>>, vector<1x8x128xf32>
      %204 = vector.shape_cast %203 : vector<1x8x128xf32> to vector<8x128xf32>
      %205 = vector.shape_cast %204 : vector<8x128xf32> to vector<1x8x128xf32>
      %206 = vector.broadcast %205 : vector<1x8x128xf32> to vector<2x8x128xf32>
      %207 = arith.mulf %202, %206 : vector<2x8x128xf32>
      %208 = arith.addf %200, %207 : vector<2x8x128xf32>
      %209 = vector.extract_strided_slice %120 {offsets = [6, 0], sizes = [16, 128], strides = [1, 1]} : vector<28x128xf32> to vector<16x128xf32>
      %210 = vector.shape_cast %209 : vector<16x128xf32> to vector<2x8x128xf32>
      %c19 = arith.constant 19 : index
      %c0_63 = arith.constant 0 : index
      %c0_64 = arith.constant 0 : index
      %211 = vector.load %arg4[%c19, %c0_63, %c0_64] : memref<169x8x128xf32, #tpu.memory_space<vmem>>, vector<1x8x128xf32>
      %212 = vector.shape_cast %211 : vector<1x8x128xf32> to vector<8x128xf32>
      %213 = vector.shape_cast %212 : vector<8x128xf32> to vector<1x8x128xf32>
      %214 = vector.broadcast %213 : vector<1x8x128xf32> to vector<2x8x128xf32>
      %215 = arith.mulf %210, %214 : vector<2x8x128xf32>
      %216 = arith.addf %208, %215 : vector<2x8x128xf32>
      %217 = vector.extract_strided_slice %120 {offsets = [7, 0], sizes = [16, 128], strides = [1, 1]} : vector<28x128xf32> to vector<16x128xf32>
      %218 = vector.shape_cast %217 : vector<16x128xf32> to vector<2x8x128xf32>
      %c20 = arith.constant 20 : index
      %c0_65 = arith.constant 0 : index
      %c0_66 = arith.constant 0 : index
      %219 = vector.load %arg4[%c20, %c0_65, %c0_66] : memref<169x8x128xf32, #tpu.memory_space<vmem>>, vector<1x8x128xf32>
      %220 = vector.shape_cast %219 : vector<1x8x128xf32> to vector<8x128xf32>
      %221 = vector.shape_cast %220 : vector<8x128xf32> to vector<1x8x128xf32>
      %222 = vector.broadcast %221 : vector<1x8x128xf32> to vector<2x8x128xf32>
      %223 = arith.mulf %218, %222 : vector<2x8x128xf32>
      %224 = arith.addf %216, %223 : vector<2x8x128xf32>
      %c2_i32 = arith.constant 2 : i32
      %225 = arith.addi %arg9, %c2_i32 : i32
      %226 = arith.index_cast %225 : i32 to index
      %c0_67 = arith.constant 0 : index
      %c0_68 = arith.constant 0 : index
      %227 = vector.load %arg7[%226, %c0_67, %c0_68] : memref<28x28x128xf32, #tpu.memory_space<vmem>>, vector<1x28x128xf32>
      %228 = vector.shape_cast %227 : vector<1x28x128xf32> to vector<28x128xf32>
      %229 = vector.extract_strided_slice %228 {offsets = [0, 0], sizes = [24, 128], strides = [1, 1]} : vector<28x128xf32> to vector<24x128xf32>
      %230 = vector.shape_cast %229 : vector<24x128xf32> to vector<3x8x128xf32>
      %231 = vector.extract_strided_slice %230 {offsets = [0, 0, 0], sizes = [2, 8, 128], strides = [1, 1, 1]} : vector<3x8x128xf32> to vector<2x8x128xf32>
      %c26 = arith.constant 26 : index
      %c0_69 = arith.constant 0 : index
      %c0_70 = arith.constant 0 : index
      %232 = vector.load %arg4[%c26, %c0_69, %c0_70] : memref<169x8x128xf32, #tpu.memory_space<vmem>>, vector<1x8x128xf32>
      %233 = vector.shape_cast %232 : vector<1x8x128xf32> to vector<8x128xf32>
      %234 = vector.shape_cast %233 : vector<8x128xf32> to vector<1x8x128xf32>
      %235 = vector.broadcast %234 : vector<1x8x128xf32> to vector<2x8x128xf32>
      %236 = arith.mulf %231, %235 : vector<2x8x128xf32>
      %237 = arith.addf %116, %236 : vector<2x8x128xf32>
      %238 = vector.extract_strided_slice %230 {offsets = [1, 0, 0], sizes = [2, 8, 128], strides = [1, 1, 1]} : vector<3x8x128xf32> to vector<2x8x128xf32>
      %c34 = arith.constant 34 : index
      %c0_71 = arith.constant 0 : index
      %c0_72 = arith.constant 0 : index
      %239 = vector.load %arg4[%c34, %c0_71, %c0_72] : memref<169x8x128xf32, #tpu.memory_space<vmem>>, vector<1x8x128xf32>
      %240 = vector.shape_cast %239 : vector<1x8x128xf32> to vector<8x128xf32>
      %241 = vector.shape_cast %240 : vector<8x128xf32> to vector<1x8x128xf32>
      %242 = vector.broadcast %241 : vector<1x8x128xf32> to vector<2x8x128xf32>
      %243 = arith.mulf %238, %242 : vector<2x8x128xf32>
      %244 = arith.addf %237, %243 : vector<2x8x128xf32>
      %245 = vector.extract_strided_slice %228 {offsets = [1, 0], sizes = [24, 128], strides = [1, 1]} : vector<28x128xf32> to vector<24x128xf32>
      %246 = vector.shape_cast %245 : vector<24x128xf32> to vector<3x8x128xf32>
      %247 = vector.extract_strided_slice %246 {offsets = [0, 0, 0], sizes = [2, 8, 128], strides = [1, 1, 1]} : vector<3x8x128xf32> to vector<2x8x128xf32>
      %c27 = arith.constant 27 : index
      %c0_73 = arith.constant 0 : index
      %c0_74 = arith.constant 0 : index
      %248 = vector.load %arg4[%c27, %c0_73, %c0_74] : memref<169x8x128xf32, #tpu.memory_space<vmem>>, vector<1x8x128xf32>
      %249 = vector.shape_cast %248 : vector<1x8x128xf32> to vector<8x128xf32>
      %250 = vector.shape_cast %249 : vector<8x128xf32> to vector<1x8x128xf32>
      %251 = vector.broadcast %250 : vector<1x8x128xf32> to vector<2x8x128xf32>
      %252 = arith.mulf %247, %251 : vector<2x8x128xf32>
      %253 = arith.addf %244, %252 : vector<2x8x128xf32>
      %254 = vector.extract_strided_slice %246 {offsets = [1, 0, 0], sizes = [2, 8, 128], strides = [1, 1, 1]} : vector<3x8x128xf32> to vector<2x8x128xf32>
      %c35 = arith.constant 35 : index
      %c0_75 = arith.constant 0 : index
      %c0_76 = arith.constant 0 : index
      %255 = vector.load %arg4[%c35, %c0_75, %c0_76] : memref<169x8x128xf32, #tpu.memory_space<vmem>>, vector<1x8x128xf32>
      %256 = vector.shape_cast %255 : vector<1x8x128xf32> to vector<8x128xf32>
      %257 = vector.shape_cast %256 : vector<8x128xf32> to vector<1x8x128xf32>
      %258 = vector.broadcast %257 : vector<1x8x128xf32> to vector<2x8x128xf32>
      %259 = arith.mulf %254, %258 : vector<2x8x128xf32>
      %260 = arith.addf %253, %259 : vector<2x8x128xf32>
      %261 = vector.extract_strided_slice %228 {offsets = [2, 0], sizes = [24, 128], strides = [1, 1]} : vector<28x128xf32> to vector<24x128xf32>
      %262 = vector.shape_cast %261 : vector<24x128xf32> to vector<3x8x128xf32>
      %263 = vector.extract_strided_slice %262 {offsets = [0, 0, 0], sizes = [2, 8, 128], strides = [1, 1, 1]} : vector<3x8x128xf32> to vector<2x8x128xf32>
      %c28 = arith.constant 28 : index
      %c0_77 = arith.constant 0 : index
      %c0_78 = arith.constant 0 : index
      %264 = vector.load %arg4[%c28, %c0_77, %c0_78] : memref<169x8x128xf32, #tpu.memory_space<vmem>>, vector<1x8x128xf32>
      %265 = vector.shape_cast %264 : vector<1x8x128xf32> to vector<8x128xf32>
      %266 = vector.shape_cast %265 : vector<8x128xf32> to vector<1x8x128xf32>
      %267 = vector.broadcast %266 : vector<1x8x128xf32> to vector<2x8x128xf32>
      %268 = arith.mulf %263, %267 : vector<2x8x128xf32>
      %269 = arith.addf %260, %268 : vector<2x8x128xf32>
      %270 = vector.extract_strided_slice %262 {offsets = [1, 0, 0], sizes = [2, 8, 128], strides = [1, 1, 1]} : vector<3x8x128xf32> to vector<2x8x128xf32>
      %c36 = arith.constant 36 : index
      %c0_79 = arith.constant 0 : index
      %c0_80 = arith.constant 0 : index
      %271 = vector.load %arg4[%c36, %c0_79, %c0_80] : memref<169x8x128xf32, #tpu.memory_space<vmem>>, vector<1x8x128xf32>
      %272 = vector.shape_cast %271 : vector<1x8x128xf32> to vector<8x128xf32>
      %273 = vector.shape_cast %272 : vector<8x128xf32> to vector<1x8x128xf32>
      %274 = vector.broadcast %273 : vector<1x8x128xf32> to vector<2x8x128xf32>
      %275 = arith.mulf %270, %274 : vector<2x8x128xf32>
      %276 = arith.addf %269, %275 : vector<2x8x128xf32>
      %277 = vector.extract_strided_slice %228 {offsets = [3, 0], sizes = [24, 128], strides = [1, 1]} : vector<28x128xf32> to vector<24x128xf32>
      %278 = vector.shape_cast %277 : vector<24x128xf32> to vector<3x8x128xf32>
      %279 = vector.extract_strided_slice %278 {offsets = [0, 0, 0], sizes = [2, 8, 128], strides = [1, 1, 1]} : vector<3x8x128xf32> to vector<2x8x128xf32>
      %c29 = arith.constant 29 : index
      %c0_81 = arith.constant 0 : index
      %c0_82 = arith.constant 0 : index
      %280 = vector.load %arg4[%c29, %c0_81, %c0_82] : memref<169x8x128xf32, #tpu.memory_space<vmem>>, vector<1x8x128xf32>
      %281 = vector.shape_cast %280 : vector<1x8x128xf32> to vector<8x128xf32>
      %282 = vector.shape_cast %281 : vector<8x128xf32> to vector<1x8x128xf32>
      %283 = vector.broadcast %282 : vector<1x8x128xf32> to vector<2x8x128xf32>
      %284 = arith.mulf %279, %283 : vector<2x8x128xf32>
      %285 = arith.addf %276, %284 : vector<2x8x128xf32>
      %286 = vector.extract_strided_slice %278 {offsets = [1, 0, 0], sizes = [2, 8, 128], strides = [1, 1, 1]} : vector<3x8x128xf32> to vector<2x8x128xf32>
      %c37 = arith.constant 37 : index
      %c0_83 = arith.constant 0 : index
      %c0_84 = arith.constant 0 : index
      %287 = vector.load %arg4[%c37, %c0_83, %c0_84] : memref<169x8x128xf32, #tpu.memory_space<vmem>>, vector<1x8x128xf32>
      %288 = vector.shape_cast %287 : vector<1x8x128xf32> to vector<8x128xf32>
      %289 = vector.shape_cast %288 : vector<8x128xf32> to vector<1x8x128xf32>
      %290 = vector.broadcast %289 : vector<1x8x128xf32> to vector<2x8x128xf32>
      %291 = arith.mulf %286, %290 : vector<2x8x128xf32>
      %292 = arith.addf %285, %291 : vector<2x8x128xf32>
      %293 = vector.extract_strided_slice %228 {offsets = [4, 0], sizes = [24, 128], strides = [1, 1]} : vector<28x128xf32> to vector<24x128xf32>
      %294 = vector.shape_cast %293 : vector<24x128xf32> to vector<3x8x128xf32>
      %295 = vector.extract_strided_slice %294 {offsets = [0, 0, 0], sizes = [2, 8, 128], strides = [1, 1, 1]} : vector<3x8x128xf32> to vector<2x8x128xf32>
      %c30 = arith.constant 30 : index
      %c0_85 = arith.constant 0 : index
      %c0_86 = arith.constant 0 : index
      %296 = vector.load %arg4[%c30, %c0_85, %c0_86] : memref<169x8x128xf32, #tpu.memory_space<vmem>>, vector<1x8x128xf32>
      %297 = vector.shape_cast %296 : vector<1x8x128xf32> to vector<8x128xf32>
      %298 = vector.shape_cast %297 : vector<8x128xf32> to vector<1x8x128xf32>
      %299 = vector.broadcast %298 : vector<1x8x128xf32> to vector<2x8x128xf32>
      %300 = arith.mulf %295, %299 : vector<2x8x128xf32>
      %301 = arith.addf %292, %300 : vector<2x8x128xf32>
      %302 = vector.extract_strided_slice %294 {offsets = [1, 0, 0], sizes = [2, 8, 128], strides = [1, 1, 1]} : vector<3x8x128xf32> to vector<2x8x128xf32>
      %c38 = arith.constant 38 : index
      %c0_87 = arith.constant 0 : index
      %c0_88 = arith.constant 0 : index
      %303 = vector.load %arg4[%c38, %c0_87, %c0_88] : memref<169x8x128xf32, #tpu.memory_space<vmem>>, vector<1x8x128xf32>
      %304 = vector.shape_cast %303 : vector<1x8x128xf32> to vector<8x128xf32>
      %305 = vector.shape_cast %304 : vector<8x128xf32> to vector<1x8x128xf32>
      %306 = vector.broadcast %305 : vector<1x8x128xf32> to vector<2x8x128xf32>
      %307 = arith.mulf %302, %306 : vector<2x8x128xf32>
      %308 = arith.addf %301, %307 : vector<2x8x128xf32>
      %309 = vector.extract_strided_slice %228 {offsets = [5, 0], sizes = [16, 128], strides = [1, 1]} : vector<28x128xf32> to vector<16x128xf32>
      %310 = vector.shape_cast %309 : vector<16x128xf32> to vector<2x8x128xf32>
      %c31 = arith.constant 31 : index
      %c0_89 = arith.constant 0 : index
      %c0_90 = arith.constant 0 : index
      %311 = vector.load %arg4[%c31, %c0_89, %c0_90] : memref<169x8x128xf32, #tpu.memory_space<vmem>>, vector<1x8x128xf32>
      %312 = vector.shape_cast %311 : vector<1x8x128xf32> to vector<8x128xf32>
      %313 = vector.shape_cast %312 : vector<8x128xf32> to vector<1x8x128xf32>
      %314 = vector.broadcast %313 : vector<1x8x128xf32> to vector<2x8x128xf32>
      %315 = arith.mulf %310, %314 : vector<2x8x128xf32>
      %316 = arith.addf %308, %315 : vector<2x8x128xf32>
      %317 = vector.extract_strided_slice %228 {offsets = [6, 0], sizes = [16, 128], strides = [1, 1]} : vector<28x128xf32> to vector<16x128xf32>
      %318 = vector.shape_cast %317 : vector<16x128xf32> to vector<2x8x128xf32>
      %c32 = arith.constant 32 : index
      %c0_91 = arith.constant 0 : index
      %c0_92 = arith.constant 0 : index
      %319 = vector.load %arg4[%c32, %c0_91, %c0_92] : memref<169x8x128xf32, #tpu.memory_space<vmem>>, vector<1x8x128xf32>
      %320 = vector.shape_cast %319 : vector<1x8x128xf32> to vector<8x128xf32>
      %321 = vector.shape_cast %320 : vector<8x128xf32> to vector<1x8x128xf32>
      %322 = vector.broadcast %321 : vector<1x8x128xf32> to vector<2x8x128xf32>
      %323 = arith.mulf %318, %322 : vector<2x8x128xf32>
      %324 = arith.addf %316, %323 : vector<2x8x128xf32>
      %325 = vector.extract_strided_slice %228 {offsets = [7, 0], sizes = [16, 128], strides = [1, 1]} : vector<28x128xf32> to vector<16x128xf32>
      %326 = vector.shape_cast %325 : vector<16x128xf32> to vector<2x8x128xf32>
      %c33 = arith.constant 33 : index
      %c0_93 = arith.constant 0 : index
      %c0_94 = arith.constant 0 : index
      %327 = vector.load %arg4[%c33, %c0_93, %c0_94] : memref<169x8x128xf32, #tpu.memory_space<vmem>>, vector<1x8x128xf32>
      %328 = vector.shape_cast %327 : vector<1x8x128xf32> to vector<8x128xf32>
      %329 = vector.shape_cast %328 : vector<8x128xf32> to vector<1x8x128xf32>
      %330 = vector.broadcast %329 : vector<1x8x128xf32> to vector<2x8x128xf32>
      %331 = arith.mulf %326, %330 : vector<2x8x128xf32>
      %332 = arith.addf %324, %331 : vector<2x8x128xf32>
      %c3_i32 = arith.constant 3 : i32
      %333 = arith.addi %arg9, %c3_i32 : i32
      %334 = arith.index_cast %333 : i32 to index
      %c0_95 = arith.constant 0 : index
      %c0_96 = arith.constant 0 : index
      %335 = vector.load %arg7[%334, %c0_95, %c0_96] : memref<28x28x128xf32, #tpu.memory_space<vmem>>, vector<1x28x128xf32>
      %336 = vector.shape_cast %335 : vector<1x28x128xf32> to vector<28x128xf32>
      %337 = vector.extract_strided_slice %336 {offsets = [0, 0], sizes = [24, 128], strides = [1, 1]} : vector<28x128xf32> to vector<24x128xf32>
      %338 = vector.shape_cast %337 : vector<24x128xf32> to vector<3x8x128xf32>
      %339 = vector.extract_strided_slice %338 {offsets = [0, 0, 0], sizes = [2, 8, 128], strides = [1, 1, 1]} : vector<3x8x128xf32> to vector<2x8x128xf32>
      %c39 = arith.constant 39 : index
      %c0_97 = arith.constant 0 : index
      %c0_98 = arith.constant 0 : index
      %340 = vector.load %arg4[%c39, %c0_97, %c0_98] : memref<169x8x128xf32, #tpu.memory_space<vmem>>, vector<1x8x128xf32>
      %341 = vector.shape_cast %340 : vector<1x8x128xf32> to vector<8x128xf32>
      %342 = vector.shape_cast %341 : vector<8x128xf32> to vector<1x8x128xf32>
      %343 = vector.broadcast %342 : vector<1x8x128xf32> to vector<2x8x128xf32>
      %344 = arith.mulf %339, %343 : vector<2x8x128xf32>
      %345 = arith.addf %224, %344 : vector<2x8x128xf32>
      %346 = vector.extract_strided_slice %338 {offsets = [1, 0, 0], sizes = [2, 8, 128], strides = [1, 1, 1]} : vector<3x8x128xf32> to vector<2x8x128xf32>
      %c47 = arith.constant 47 : index
      %c0_99 = arith.constant 0 : index
      %c0_100 = arith.constant 0 : index
      %347 = vector.load %arg4[%c47, %c0_99, %c0_100] : memref<169x8x128xf32, #tpu.memory_space<vmem>>, vector<1x8x128xf32>
      %348 = vector.shape_cast %347 : vector<1x8x128xf32> to vector<8x128xf32>
      %349 = vector.shape_cast %348 : vector<8x128xf32> to vector<1x8x128xf32>
      %350 = vector.broadcast %349 : vector<1x8x128xf32> to vector<2x8x128xf32>
      %351 = arith.mulf %346, %350 : vector<2x8x128xf32>
      %352 = arith.addf %345, %351 : vector<2x8x128xf32>
      %353 = vector.extract_strided_slice %336 {offsets = [1, 0], sizes = [24, 128], strides = [1, 1]} : vector<28x128xf32> to vector<24x128xf32>
      %354 = vector.shape_cast %353 : vector<24x128xf32> to vector<3x8x128xf32>
      %355 = vector.extract_strided_slice %354 {offsets = [0, 0, 0], sizes = [2, 8, 128], strides = [1, 1, 1]} : vector<3x8x128xf32> to vector<2x8x128xf32>
      %c40 = arith.constant 40 : index
      %c0_101 = arith.constant 0 : index
      %c0_102 = arith.constant 0 : index
      %356 = vector.load %arg4[%c40, %c0_101, %c0_102] : memref<169x8x128xf32, #tpu.memory_space<vmem>>, vector<1x8x128xf32>
      %357 = vector.shape_cast %356 : vector<1x8x128xf32> to vector<8x128xf32>
      %358 = vector.shape_cast %357 : vector<8x128xf32> to vector<1x8x128xf32>
      %359 = vector.broadcast %358 : vector<1x8x128xf32> to vector<2x8x128xf32>
      %360 = arith.mulf %355, %359 : vector<2x8x128xf32>
      %361 = arith.addf %352, %360 : vector<2x8x128xf32>
      %362 = vector.extract_strided_slice %354 {offsets = [1, 0, 0], sizes = [2, 8, 128], strides = [1, 1, 1]} : vector<3x8x128xf32> to vector<2x8x128xf32>
      %c48 = arith.constant 48 : index
      %c0_103 = arith.constant 0 : index
      %c0_104 = arith.constant 0 : index
      %363 = vector.load %arg4[%c48, %c0_103, %c0_104] : memref<169x8x128xf32, #tpu.memory_space<vmem>>, vector<1x8x128xf32>
      %364 = vector.shape_cast %363 : vector<1x8x128xf32> to vector<8x128xf32>
      %365 = vector.shape_cast %364 : vector<8x128xf32> to vector<1x8x128xf32>
      %366 = vector.broadcast %365 : vector<1x8x128xf32> to vector<2x8x128xf32>
      %367 = arith.mulf %362, %366 : vector<2x8x128xf32>
      %368 = arith.addf %361, %367 : vector<2x8x128xf32>
      %369 = vector.extract_strided_slice %336 {offsets = [2, 0], sizes = [24, 128], strides = [1, 1]} : vector<28x128xf32> to vector<24x128xf32>
      %370 = vector.shape_cast %369 : vector<24x128xf32> to vector<3x8x128xf32>
      %371 = vector.extract_strided_slice %370 {offsets = [0, 0, 0], sizes = [2, 8, 128], strides = [1, 1, 1]} : vector<3x8x128xf32> to vector<2x8x128xf32>
      %c41 = arith.constant 41 : index
      %c0_105 = arith.constant 0 : index
      %c0_106 = arith.constant 0 : index
      %372 = vector.load %arg4[%c41, %c0_105, %c0_106] : memref<169x8x128xf32, #tpu.memory_space<vmem>>, vector<1x8x128xf32>
      %373 = vector.shape_cast %372 : vector<1x8x128xf32> to vector<8x128xf32>
      %374 = vector.shape_cast %373 : vector<8x128xf32> to vector<1x8x128xf32>
      %375 = vector.broadcast %374 : vector<1x8x128xf32> to vector<2x8x128xf32>
      %376 = arith.mulf %371, %375 : vector<2x8x128xf32>
      %377 = arith.addf %368, %376 : vector<2x8x128xf32>
      %378 = vector.extract_strided_slice %370 {offsets = [1, 0, 0], sizes = [2, 8, 128], strides = [1, 1, 1]} : vector<3x8x128xf32> to vector<2x8x128xf32>
      %c49 = arith.constant 49 : index
      %c0_107 = arith.constant 0 : index
      %c0_108 = arith.constant 0 : index
      %379 = vector.load %arg4[%c49, %c0_107, %c0_108] : memref<169x8x128xf32, #tpu.memory_space<vmem>>, vector<1x8x128xf32>
      %380 = vector.shape_cast %379 : vector<1x8x128xf32> to vector<8x128xf32>
      %381 = vector.shape_cast %380 : vector<8x128xf32> to vector<1x8x128xf32>
      %382 = vector.broadcast %381 : vector<1x8x128xf32> to vector<2x8x128xf32>
      %383 = arith.mulf %378, %382 : vector<2x8x128xf32>
      %384 = arith.addf %377, %383 : vector<2x8x128xf32>
      %385 = vector.extract_strided_slice %336 {offsets = [3, 0], sizes = [24, 128], strides = [1, 1]} : vector<28x128xf32> to vector<24x128xf32>
      %386 = vector.shape_cast %385 : vector<24x128xf32> to vector<3x8x128xf32>
      %387 = vector.extract_strided_slice %386 {offsets = [0, 0, 0], sizes = [2, 8, 128], strides = [1, 1, 1]} : vector<3x8x128xf32> to vector<2x8x128xf32>
      %c42 = arith.constant 42 : index
      %c0_109 = arith.constant 0 : index
      %c0_110 = arith.constant 0 : index
      %388 = vector.load %arg4[%c42, %c0_109, %c0_110] : memref<169x8x128xf32, #tpu.memory_space<vmem>>, vector<1x8x128xf32>
      %389 = vector.shape_cast %388 : vector<1x8x128xf32> to vector<8x128xf32>
      %390 = vector.shape_cast %389 : vector<8x128xf32> to vector<1x8x128xf32>
      %391 = vector.broadcast %390 : vector<1x8x128xf32> to vector<2x8x128xf32>
      %392 = arith.mulf %387, %391 : vector<2x8x128xf32>
      %393 = arith.addf %384, %392 : vector<2x8x128xf32>
      %394 = vector.extract_strided_slice %386 {offsets = [1, 0, 0], sizes = [2, 8, 128], strides = [1, 1, 1]} : vector<3x8x128xf32> to vector<2x8x128xf32>
      %c50 = arith.constant 50 : index
      %c0_111 = arith.constant 0 : index
      %c0_112 = arith.constant 0 : index
      %395 = vector.load %arg4[%c50, %c0_111, %c0_112] : memref<169x8x128xf32, #tpu.memory_space<vmem>>, vector<1x8x128xf32>
      %396 = vector.shape_cast %395 : vector<1x8x128xf32> to vector<8x128xf32>
      %397 = vector.shape_cast %396 : vector<8x128xf32> to vector<1x8x128xf32>
      %398 = vector.broadcast %397 : vector<1x8x128xf32> to vector<2x8x128xf32>
      %399 = arith.mulf %394, %398 : vector<2x8x128xf32>
      %400 = arith.addf %393, %399 : vector<2x8x128xf32>
      %401 = vector.extract_strided_slice %336 {offsets = [4, 0], sizes = [24, 128], strides = [1, 1]} : vector<28x128xf32> to vector<24x128xf32>
      %402 = vector.shape_cast %401 : vector<24x128xf32> to vector<3x8x128xf32>
      %403 = vector.extract_strided_slice %402 {offsets = [0, 0, 0], sizes = [2, 8, 128], strides = [1, 1, 1]} : vector<3x8x128xf32> to vector<2x8x128xf32>
      %c43 = arith.constant 43 : index
      %c0_113 = arith.constant 0 : index
      %c0_114 = arith.constant 0 : index
      %404 = vector.load %arg4[%c43, %c0_113, %c0_114] : memref<169x8x128xf32, #tpu.memory_space<vmem>>, vector<1x8x128xf32>
      %405 = vector.shape_cast %404 : vector<1x8x128xf32> to vector<8x128xf32>
      %406 = vector.shape_cast %405 : vector<8x128xf32> to vector<1x8x128xf32>
      %407 = vector.broadcast %406 : vector<1x8x128xf32> to vector<2x8x128xf32>
      %408 = arith.mulf %403, %407 : vector<2x8x128xf32>
      %409 = arith.addf %400, %408 : vector<2x8x128xf32>
      %410 = vector.extract_strided_slice %402 {offsets = [1, 0, 0], sizes = [2, 8, 128], strides = [1, 1, 1]} : vector<3x8x128xf32> to vector<2x8x128xf32>
      %c51 = arith.constant 51 : index
      %c0_115 = arith.constant 0 : index
      %c0_116 = arith.constant 0 : index
      %411 = vector.load %arg4[%c51, %c0_115, %c0_116] : memref<169x8x128xf32, #tpu.memory_space<vmem>>, vector<1x8x128xf32>
      %412 = vector.shape_cast %411 : vector<1x8x128xf32> to vector<8x128xf32>
      %413 = vector.shape_cast %412 : vector<8x128xf32> to vector<1x8x128xf32>
      %414 = vector.broadcast %413 : vector<1x8x128xf32> to vector<2x8x128xf32>
      %415 = arith.mulf %410, %414 : vector<2x8x128xf32>
      %416 = arith.addf %409, %415 : vector<2x8x128xf32>
      %417 = vector.extract_strided_slice %336 {offsets = [5, 0], sizes = [16, 128], strides = [1, 1]} : vector<28x128xf32> to vector<16x128xf32>
      %418 = vector.shape_cast %417 : vector<16x128xf32> to vector<2x8x128xf32>
      %c44 = arith.constant 44 : index
      %c0_117 = arith.constant 0 : index
      %c0_118 = arith.constant 0 : index
      %419 = vector.load %arg4[%c44, %c0_117, %c0_118] : memref<169x8x128xf32, #tpu.memory_space<vmem>>, vector<1x8x128xf32>
      %420 = vector.shape_cast %419 : vector<1x8x128xf32> to vector<8x128xf32>
      %421 = vector.shape_cast %420 : vector<8x128xf32> to vector<1x8x128xf32>
      %422 = vector.broadcast %421 : vector<1x8x128xf32> to vector<2x8x128xf32>
      %423 = arith.mulf %418, %422 : vector<2x8x128xf32>
      %424 = arith.addf %416, %423 : vector<2x8x128xf32>
      %425 = vector.extract_strided_slice %336 {offsets = [6, 0], sizes = [16, 128], strides = [1, 1]} : vector<28x128xf32> to vector<16x128xf32>
      %426 = vector.shape_cast %425 : vector<16x128xf32> to vector<2x8x128xf32>
      %c45 = arith.constant 45 : index
      %c0_119 = arith.constant 0 : index
      %c0_120 = arith.constant 0 : index
      %427 = vector.load %arg4[%c45, %c0_119, %c0_120] : memref<169x8x128xf32, #tpu.memory_space<vmem>>, vector<1x8x128xf32>
      %428 = vector.shape_cast %427 : vector<1x8x128xf32> to vector<8x128xf32>
      %429 = vector.shape_cast %428 : vector<8x128xf32> to vector<1x8x128xf32>
      %430 = vector.broadcast %429 : vector<1x8x128xf32> to vector<2x8x128xf32>
      %431 = arith.mulf %426, %430 : vector<2x8x128xf32>
      %432 = arith.addf %424, %431 : vector<2x8x128xf32>
      %433 = vector.extract_strided_slice %336 {offsets = [7, 0], sizes = [16, 128], strides = [1, 1]} : vector<28x128xf32> to vector<16x128xf32>
      %434 = vector.shape_cast %433 : vector<16x128xf32> to vector<2x8x128xf32>
      %c46 = arith.constant 46 : index
      %c0_121 = arith.constant 0 : index
      %c0_122 = arith.constant 0 : index
      %435 = vector.load %arg4[%c46, %c0_121, %c0_122] : memref<169x8x128xf32, #tpu.memory_space<vmem>>, vector<1x8x128xf32>
      %436 = vector.shape_cast %435 : vector<1x8x128xf32> to vector<8x128xf32>
      %437 = vector.shape_cast %436 : vector<8x128xf32> to vector<1x8x128xf32>
      %438 = vector.broadcast %437 : vector<1x8x128xf32> to vector<2x8x128xf32>
      %439 = arith.mulf %434, %438 : vector<2x8x128xf32>
      %440 = arith.addf %432, %439 : vector<2x8x128xf32>
      %c4_i32 = arith.constant 4 : i32
      %441 = arith.addi %arg9, %c4_i32 : i32
      %442 = arith.index_cast %441 : i32 to index
      %c0_123 = arith.constant 0 : index
      %c0_124 = arith.constant 0 : index
      %443 = vector.load %arg7[%442, %c0_123, %c0_124] : memref<28x28x128xf32, #tpu.memory_space<vmem>>, vector<1x28x128xf32>
      %444 = vector.shape_cast %443 : vector<1x28x128xf32> to vector<28x128xf32>
      %445 = vector.extract_strided_slice %444 {offsets = [0, 0], sizes = [24, 128], strides = [1, 1]} : vector<28x128xf32> to vector<24x128xf32>
      %446 = vector.shape_cast %445 : vector<24x128xf32> to vector<3x8x128xf32>
      %447 = vector.extract_strided_slice %446 {offsets = [0, 0, 0], sizes = [2, 8, 128], strides = [1, 1, 1]} : vector<3x8x128xf32> to vector<2x8x128xf32>
      %c52 = arith.constant 52 : index
      %c0_125 = arith.constant 0 : index
      %c0_126 = arith.constant 0 : index
      %448 = vector.load %arg4[%c52, %c0_125, %c0_126] : memref<169x8x128xf32, #tpu.memory_space<vmem>>, vector<1x8x128xf32>
      %449 = vector.shape_cast %448 : vector<1x8x128xf32> to vector<8x128xf32>
      %450 = vector.shape_cast %449 : vector<8x128xf32> to vector<1x8x128xf32>
      %451 = vector.broadcast %450 : vector<1x8x128xf32> to vector<2x8x128xf32>
      %452 = arith.mulf %447, %451 : vector<2x8x128xf32>
      %453 = arith.addf %332, %452 : vector<2x8x128xf32>
      %454 = vector.extract_strided_slice %446 {offsets = [1, 0, 0], sizes = [2, 8, 128], strides = [1, 1, 1]} : vector<3x8x128xf32> to vector<2x8x128xf32>
      %c60 = arith.constant 60 : index
      %c0_127 = arith.constant 0 : index
      %c0_128 = arith.constant 0 : index
      %455 = vector.load %arg4[%c60, %c0_127, %c0_128] : memref<169x8x128xf32, #tpu.memory_space<vmem>>, vector<1x8x128xf32>
      %456 = vector.shape_cast %455 : vector<1x8x128xf32> to vector<8x128xf32>
      %457 = vector.shape_cast %456 : vector<8x128xf32> to vector<1x8x128xf32>
      %458 = vector.broadcast %457 : vector<1x8x128xf32> to vector<2x8x128xf32>
      %459 = arith.mulf %454, %458 : vector<2x8x128xf32>
      %460 = arith.addf %453, %459 : vector<2x8x128xf32>
      %461 = vector.extract_strided_slice %444 {offsets = [1, 0], sizes = [24, 128], strides = [1, 1]} : vector<28x128xf32> to vector<24x128xf32>
      %462 = vector.shape_cast %461 : vector<24x128xf32> to vector<3x8x128xf32>
      %463 = vector.extract_strided_slice %462 {offsets = [0, 0, 0], sizes = [2, 8, 128], strides = [1, 1, 1]} : vector<3x8x128xf32> to vector<2x8x128xf32>
      %c53 = arith.constant 53 : index
      %c0_129 = arith.constant 0 : index
      %c0_130 = arith.constant 0 : index
      %464 = vector.load %arg4[%c53, %c0_129, %c0_130] : memref<169x8x128xf32, #tpu.memory_space<vmem>>, vector<1x8x128xf32>
      %465 = vector.shape_cast %464 : vector<1x8x128xf32> to vector<8x128xf32>
      %466 = vector.shape_cast %465 : vector<8x128xf32> to vector<1x8x128xf32>
      %467 = vector.broadcast %466 : vector<1x8x128xf32> to vector<2x8x128xf32>
      %468 = arith.mulf %463, %467 : vector<2x8x128xf32>
      %469 = arith.addf %460, %468 : vector<2x8x128xf32>
      %470 = vector.extract_strided_slice %462 {offsets = [1, 0, 0], sizes = [2, 8, 128], strides = [1, 1, 1]} : vector<3x8x128xf32> to vector<2x8x128xf32>
      %c61 = arith.constant 61 : index
      %c0_131 = arith.constant 0 : index
      %c0_132 = arith.constant 0 : index
      %471 = vector.load %arg4[%c61, %c0_131, %c0_132] : memref<169x8x128xf32, #tpu.memory_space<vmem>>, vector<1x8x128xf32>
      %472 = vector.shape_cast %471 : vector<1x8x128xf32> to vector<8x128xf32>
      %473 = vector.shape_cast %472 : vector<8x128xf32> to vector<1x8x128xf32>
      %474 = vector.broadcast %473 : vector<1x8x128xf32> to vector<2x8x128xf32>
      %475 = arith.mulf %470, %474 : vector<2x8x128xf32>
      %476 = arith.addf %469, %475 : vector<2x8x128xf32>
      %477 = vector.extract_strided_slice %444 {offsets = [2, 0], sizes = [24, 128], strides = [1, 1]} : vector<28x128xf32> to vector<24x128xf32>
      %478 = vector.shape_cast %477 : vector<24x128xf32> to vector<3x8x128xf32>
      %479 = vector.extract_strided_slice %478 {offsets = [0, 0, 0], sizes = [2, 8, 128], strides = [1, 1, 1]} : vector<3x8x128xf32> to vector<2x8x128xf32>
      %c54 = arith.constant 54 : index
      %c0_133 = arith.constant 0 : index
      %c0_134 = arith.constant 0 : index
      %480 = vector.load %arg4[%c54, %c0_133, %c0_134] : memref<169x8x128xf32, #tpu.memory_space<vmem>>, vector<1x8x128xf32>
      %481 = vector.shape_cast %480 : vector<1x8x128xf32> to vector<8x128xf32>
      %482 = vector.shape_cast %481 : vector<8x128xf32> to vector<1x8x128xf32>
      %483 = vector.broadcast %482 : vector<1x8x128xf32> to vector<2x8x128xf32>
      %484 = arith.mulf %479, %483 : vector<2x8x128xf32>
      %485 = arith.addf %476, %484 : vector<2x8x128xf32>
      %486 = vector.extract_strided_slice %478 {offsets = [1, 0, 0], sizes = [2, 8, 128], strides = [1, 1, 1]} : vector<3x8x128xf32> to vector<2x8x128xf32>
      %c62 = arith.constant 62 : index
      %c0_135 = arith.constant 0 : index
      %c0_136 = arith.constant 0 : index
      %487 = vector.load %arg4[%c62, %c0_135, %c0_136] : memref<169x8x128xf32, #tpu.memory_space<vmem>>, vector<1x8x128xf32>
      %488 = vector.shape_cast %487 : vector<1x8x128xf32> to vector<8x128xf32>
      %489 = vector.shape_cast %488 : vector<8x128xf32> to vector<1x8x128xf32>
      %490 = vector.broadcast %489 : vector<1x8x128xf32> to vector<2x8x128xf32>
      %491 = arith.mulf %486, %490 : vector<2x8x128xf32>
      %492 = arith.addf %485, %491 : vector<2x8x128xf32>
      %493 = vector.extract_strided_slice %444 {offsets = [3, 0], sizes = [24, 128], strides = [1, 1]} : vector<28x128xf32> to vector<24x128xf32>
      %494 = vector.shape_cast %493 : vector<24x128xf32> to vector<3x8x128xf32>
      %495 = vector.extract_strided_slice %494 {offsets = [0, 0, 0], sizes = [2, 8, 128], strides = [1, 1, 1]} : vector<3x8x128xf32> to vector<2x8x128xf32>
      %c55 = arith.constant 55 : index
      %c0_137 = arith.constant 0 : index
      %c0_138 = arith.constant 0 : index
      %496 = vector.load %arg4[%c55, %c0_137, %c0_138] : memref<169x8x128xf32, #tpu.memory_space<vmem>>, vector<1x8x128xf32>
      %497 = vector.shape_cast %496 : vector<1x8x128xf32> to vector<8x128xf32>
      %498 = vector.shape_cast %497 : vector<8x128xf32> to vector<1x8x128xf32>
      %499 = vector.broadcast %498 : vector<1x8x128xf32> to vector<2x8x128xf32>
      %500 = arith.mulf %495, %499 : vector<2x8x128xf32>
      %501 = arith.addf %492, %500 : vector<2x8x128xf32>
      %502 = vector.extract_strided_slice %494 {offsets = [1, 0, 0], sizes = [2, 8, 128], strides = [1, 1, 1]} : vector<3x8x128xf32> to vector<2x8x128xf32>
      %c63 = arith.constant 63 : index
      %c0_139 = arith.constant 0 : index
      %c0_140 = arith.constant 0 : index
      %503 = vector.load %arg4[%c63, %c0_139, %c0_140] : memref<169x8x128xf32, #tpu.memory_space<vmem>>, vector<1x8x128xf32>
      %504 = vector.shape_cast %503 : vector<1x8x128xf32> to vector<8x128xf32>
      %505 = vector.shape_cast %504 : vector<8x128xf32> to vector<1x8x128xf32>
      %506 = vector.broadcast %505 : vector<1x8x128xf32> to vector<2x8x128xf32>
      %507 = arith.mulf %502, %506 : vector<2x8x128xf32>
      %508 = arith.addf %501, %507 : vector<2x8x128xf32>
      %509 = vector.extract_strided_slice %444 {offsets = [4, 0], sizes = [24, 128], strides = [1, 1]} : vector<28x128xf32> to vector<24x128xf32>
      %510 = vector.shape_cast %509 : vector<24x128xf32> to vector<3x8x128xf32>
      %511 = vector.extract_strided_slice %510 {offsets = [0, 0, 0], sizes = [2, 8, 128], strides = [1, 1, 1]} : vector<3x8x128xf32> to vector<2x8x128xf32>
      %c56 = arith.constant 56 : index
      %c0_141 = arith.constant 0 : index
      %c0_142 = arith.constant 0 : index
      %512 = vector.load %arg4[%c56, %c0_141, %c0_142] : memref<169x8x128xf32, #tpu.memory_space<vmem>>, vector<1x8x128xf32>
      %513 = vector.shape_cast %512 : vector<1x8x128xf32> to vector<8x128xf32>
      %514 = vector.shape_cast %513 : vector<8x128xf32> to vector<1x8x128xf32>
      %515 = vector.broadcast %514 : vector<1x8x128xf32> to vector<2x8x128xf32>
      %516 = arith.mulf %511, %515 : vector<2x8x128xf32>
      %517 = arith.addf %508, %516 : vector<2x8x128xf32>
      %518 = vector.extract_strided_slice %510 {offsets = [1, 0, 0], sizes = [2, 8, 128], strides = [1, 1, 1]} : vector<3x8x128xf32> to vector<2x8x128xf32>
      %c64 = arith.constant 64 : index
      %c0_143 = arith.constant 0 : index
      %c0_144 = arith.constant 0 : index
      %519 = vector.load %arg4[%c64, %c0_143, %c0_144] : memref<169x8x128xf32, #tpu.memory_space<vmem>>, vector<1x8x128xf32>
      %520 = vector.shape_cast %519 : vector<1x8x128xf32> to vector<8x128xf32>
      %521 = vector.shape_cast %520 : vector<8x128xf32> to vector<1x8x128xf32>
      %522 = vector.broadcast %521 : vector<1x8x128xf32> to vector<2x8x128xf32>
      %523 = arith.mulf %518, %522 : vector<2x8x128xf32>
      %524 = arith.addf %517, %523 : vector<2x8x128xf32>
      %525 = vector.extract_strided_slice %444 {offsets = [5, 0], sizes = [16, 128], strides = [1, 1]} : vector<28x128xf32> to vector<16x128xf32>
      %526 = vector.shape_cast %525 : vector<16x128xf32> to vector<2x8x128xf32>
      %c57 = arith.constant 57 : index
      %c0_145 = arith.constant 0 : index
      %c0_146 = arith.constant 0 : index
      %527 = vector.load %arg4[%c57, %c0_145, %c0_146] : memref<169x8x128xf32, #tpu.memory_space<vmem>>, vector<1x8x128xf32>
      %528 = vector.shape_cast %527 : vector<1x8x128xf32> to vector<8x128xf32>
      %529 = vector.shape_cast %528 : vector<8x128xf32> to vector<1x8x128xf32>
      %530 = vector.broadcast %529 : vector<1x8x128xf32> to vector<2x8x128xf32>
      %531 = arith.mulf %526, %530 : vector<2x8x128xf32>
      %532 = arith.addf %524, %531 : vector<2x8x128xf32>
      %533 = vector.extract_strided_slice %444 {offsets = [6, 0], sizes = [16, 128], strides = [1, 1]} : vector<28x128xf32> to vector<16x128xf32>
      %534 = vector.shape_cast %533 : vector<16x128xf32> to vector<2x8x128xf32>
      %c58 = arith.constant 58 : index
      %c0_147 = arith.constant 0 : index
      %c0_148 = arith.constant 0 : index
      %535 = vector.load %arg4[%c58, %c0_147, %c0_148] : memref<169x8x128xf32, #tpu.memory_space<vmem>>, vector<1x8x128xf32>
      %536 = vector.shape_cast %535 : vector<1x8x128xf32> to vector<8x128xf32>
      %537 = vector.shape_cast %536 : vector<8x128xf32> to vector<1x8x128xf32>
      %538 = vector.broadcast %537 : vector<1x8x128xf32> to vector<2x8x128xf32>
      %539 = arith.mulf %534, %538 : vector<2x8x128xf32>
      %540 = arith.addf %532, %539 : vector<2x8x128xf32>
      %541 = vector.extract_strided_slice %444 {offsets = [7, 0], sizes = [16, 128], strides = [1, 1]} : vector<28x128xf32> to vector<16x128xf32>
      %542 = vector.shape_cast %541 : vector<16x128xf32> to vector<2x8x128xf32>
      %c59 = arith.constant 59 : index
      %c0_149 = arith.constant 0 : index
      %c0_150 = arith.constant 0 : index
      %543 = vector.load %arg4[%c59, %c0_149, %c0_150] : memref<169x8x128xf32, #tpu.memory_space<vmem>>, vector<1x8x128xf32>
      %544 = vector.shape_cast %543 : vector<1x8x128xf32> to vector<8x128xf32>
      %545 = vector.shape_cast %544 : vector<8x128xf32> to vector<1x8x128xf32>
      %546 = vector.broadcast %545 : vector<1x8x128xf32> to vector<2x8x128xf32>
      %547 = arith.mulf %542, %546 : vector<2x8x128xf32>
      %548 = arith.addf %540, %547 : vector<2x8x128xf32>
      %c5_i32 = arith.constant 5 : i32
      %549 = arith.addi %arg9, %c5_i32 : i32
      %550 = arith.index_cast %549 : i32 to index
      %c0_151 = arith.constant 0 : index
      %c0_152 = arith.constant 0 : index
      %551 = vector.load %arg7[%550, %c0_151, %c0_152] : memref<28x28x128xf32, #tpu.memory_space<vmem>>, vector<1x28x128xf32>
      %552 = vector.shape_cast %551 : vector<1x28x128xf32> to vector<28x128xf32>
      %553 = vector.extract_strided_slice %552 {offsets = [0, 0], sizes = [24, 128], strides = [1, 1]} : vector<28x128xf32> to vector<24x128xf32>
      %554 = vector.shape_cast %553 : vector<24x128xf32> to vector<3x8x128xf32>
      %555 = vector.extract_strided_slice %554 {offsets = [0, 0, 0], sizes = [2, 8, 128], strides = [1, 1, 1]} : vector<3x8x128xf32> to vector<2x8x128xf32>
      %c65 = arith.constant 65 : index
      %c0_153 = arith.constant 0 : index
      %c0_154 = arith.constant 0 : index
      %556 = vector.load %arg4[%c65, %c0_153, %c0_154] : memref<169x8x128xf32, #tpu.memory_space<vmem>>, vector<1x8x128xf32>
      %557 = vector.shape_cast %556 : vector<1x8x128xf32> to vector<8x128xf32>
      %558 = vector.shape_cast %557 : vector<8x128xf32> to vector<1x8x128xf32>
      %559 = vector.broadcast %558 : vector<1x8x128xf32> to vector<2x8x128xf32>
      %560 = arith.mulf %555, %559 : vector<2x8x128xf32>
      %561 = arith.addf %440, %560 : vector<2x8x128xf32>
      %562 = vector.extract_strided_slice %554 {offsets = [1, 0, 0], sizes = [2, 8, 128], strides = [1, 1, 1]} : vector<3x8x128xf32> to vector<2x8x128xf32>
      %c73 = arith.constant 73 : index
      %c0_155 = arith.constant 0 : index
      %c0_156 = arith.constant 0 : index
      %563 = vector.load %arg4[%c73, %c0_155, %c0_156] : memref<169x8x128xf32, #tpu.memory_space<vmem>>, vector<1x8x128xf32>
      %564 = vector.shape_cast %563 : vector<1x8x128xf32> to vector<8x128xf32>
      %565 = vector.shape_cast %564 : vector<8x128xf32> to vector<1x8x128xf32>
      %566 = vector.broadcast %565 : vector<1x8x128xf32> to vector<2x8x128xf32>
      %567 = arith.mulf %562, %566 : vector<2x8x128xf32>
      %568 = arith.addf %561, %567 : vector<2x8x128xf32>
      %569 = vector.extract_strided_slice %552 {offsets = [1, 0], sizes = [24, 128], strides = [1, 1]} : vector<28x128xf32> to vector<24x128xf32>
      %570 = vector.shape_cast %569 : vector<24x128xf32> to vector<3x8x128xf32>
      %571 = vector.extract_strided_slice %570 {offsets = [0, 0, 0], sizes = [2, 8, 128], strides = [1, 1, 1]} : vector<3x8x128xf32> to vector<2x8x128xf32>
      %c66 = arith.constant 66 : index
      %c0_157 = arith.constant 0 : index
      %c0_158 = arith.constant 0 : index
      %572 = vector.load %arg4[%c66, %c0_157, %c0_158] : memref<169x8x128xf32, #tpu.memory_space<vmem>>, vector<1x8x128xf32>
      %573 = vector.shape_cast %572 : vector<1x8x128xf32> to vector<8x128xf32>
      %574 = vector.shape_cast %573 : vector<8x128xf32> to vector<1x8x128xf32>
      %575 = vector.broadcast %574 : vector<1x8x128xf32> to vector<2x8x128xf32>
      %576 = arith.mulf %571, %575 : vector<2x8x128xf32>
      %577 = arith.addf %568, %576 : vector<2x8x128xf32>
      %578 = vector.extract_strided_slice %570 {offsets = [1, 0, 0], sizes = [2, 8, 128], strides = [1, 1, 1]} : vector<3x8x128xf32> to vector<2x8x128xf32>
      %c74 = arith.constant 74 : index
      %c0_159 = arith.constant 0 : index
      %c0_160 = arith.constant 0 : index
      %579 = vector.load %arg4[%c74, %c0_159, %c0_160] : memref<169x8x128xf32, #tpu.memory_space<vmem>>, vector<1x8x128xf32>
      %580 = vector.shape_cast %579 : vector<1x8x128xf32> to vector<8x128xf32>
      %581 = vector.shape_cast %580 : vector<8x128xf32> to vector<1x8x128xf32>
      %582 = vector.broadcast %581 : vector<1x8x128xf32> to vector<2x8x128xf32>
      %583 = arith.mulf %578, %582 : vector<2x8x128xf32>
      %584 = arith.addf %577, %583 : vector<2x8x128xf32>
      %585 = vector.extract_strided_slice %552 {offsets = [2, 0], sizes = [24, 128], strides = [1, 1]} : vector<28x128xf32> to vector<24x128xf32>
      %586 = vector.shape_cast %585 : vector<24x128xf32> to vector<3x8x128xf32>
      %587 = vector.extract_strided_slice %586 {offsets = [0, 0, 0], sizes = [2, 8, 128], strides = [1, 1, 1]} : vector<3x8x128xf32> to vector<2x8x128xf32>
      %c67 = arith.constant 67 : index
      %c0_161 = arith.constant 0 : index
      %c0_162 = arith.constant 0 : index
      %588 = vector.load %arg4[%c67, %c0_161, %c0_162] : memref<169x8x128xf32, #tpu.memory_space<vmem>>, vector<1x8x128xf32>
      %589 = vector.shape_cast %588 : vector<1x8x128xf32> to vector<8x128xf32>
      %590 = vector.shape_cast %589 : vector<8x128xf32> to vector<1x8x128xf32>
      %591 = vector.broadcast %590 : vector<1x8x128xf32> to vector<2x8x128xf32>
      %592 = arith.mulf %587, %591 : vector<2x8x128xf32>
      %593 = arith.addf %584, %592 : vector<2x8x128xf32>
      %594 = vector.extract_strided_slice %586 {offsets = [1, 0, 0], sizes = [2, 8, 128], strides = [1, 1, 1]} : vector<3x8x128xf32> to vector<2x8x128xf32>
      %c75 = arith.constant 75 : index
      %c0_163 = arith.constant 0 : index
      %c0_164 = arith.constant 0 : index
      %595 = vector.load %arg4[%c75, %c0_163, %c0_164] : memref<169x8x128xf32, #tpu.memory_space<vmem>>, vector<1x8x128xf32>
      %596 = vector.shape_cast %595 : vector<1x8x128xf32> to vector<8x128xf32>
      %597 = vector.shape_cast %596 : vector<8x128xf32> to vector<1x8x128xf32>
      %598 = vector.broadcast %597 : vector<1x8x128xf32> to vector<2x8x128xf32>
      %599 = arith.mulf %594, %598 : vector<2x8x128xf32>
      %600 = arith.addf %593, %599 : vector<2x8x128xf32>
      %601 = vector.extract_strided_slice %552 {offsets = [3, 0], sizes = [24, 128], strides = [1, 1]} : vector<28x128xf32> to vector<24x128xf32>
      %602 = vector.shape_cast %601 : vector<24x128xf32> to vector<3x8x128xf32>
      %603 = vector.extract_strided_slice %602 {offsets = [0, 0, 0], sizes = [2, 8, 128], strides = [1, 1, 1]} : vector<3x8x128xf32> to vector<2x8x128xf32>
      %c68 = arith.constant 68 : index
      %c0_165 = arith.constant 0 : index
      %c0_166 = arith.constant 0 : index
      %604 = vector.load %arg4[%c68, %c0_165, %c0_166] : memref<169x8x128xf32, #tpu.memory_space<vmem>>, vector<1x8x128xf32>
      %605 = vector.shape_cast %604 : vector<1x8x128xf32> to vector<8x128xf32>
      %606 = vector.shape_cast %605 : vector<8x128xf32> to vector<1x8x128xf32>
      %607 = vector.broadcast %606 : vector<1x8x128xf32> to vector<2x8x128xf32>
      %608 = arith.mulf %603, %607 : vector<2x8x128xf32>
      %609 = arith.addf %600, %608 : vector<2x8x128xf32>
      %610 = vector.extract_strided_slice %602 {offsets = [1, 0, 0], sizes = [2, 8, 128], strides = [1, 1, 1]} : vector<3x8x128xf32> to vector<2x8x128xf32>
      %c76 = arith.constant 76 : index
      %c0_167 = arith.constant 0 : index
      %c0_168 = arith.constant 0 : index
      %611 = vector.load %arg4[%c76, %c0_167, %c0_168] : memref<169x8x128xf32, #tpu.memory_space<vmem>>, vector<1x8x128xf32>
      %612 = vector.shape_cast %611 : vector<1x8x128xf32> to vector<8x128xf32>
      %613 = vector.shape_cast %612 : vector<8x128xf32> to vector<1x8x128xf32>
      %614 = vector.broadcast %613 : vector<1x8x128xf32> to vector<2x8x128xf32>
      %615 = arith.mulf %610, %614 : vector<2x8x128xf32>
      %616 = arith.addf %609, %615 : vector<2x8x128xf32>
      %617 = vector.extract_strided_slice %552 {offsets = [4, 0], sizes = [24, 128], strides = [1, 1]} : vector<28x128xf32> to vector<24x128xf32>
      %618 = vector.shape_cast %617 : vector<24x128xf32> to vector<3x8x128xf32>
      %619 = vector.extract_strided_slice %618 {offsets = [0, 0, 0], sizes = [2, 8, 128], strides = [1, 1, 1]} : vector<3x8x128xf32> to vector<2x8x128xf32>
      %c69 = arith.constant 69 : index
      %c0_169 = arith.constant 0 : index
      %c0_170 = arith.constant 0 : index
      %620 = vector.load %arg4[%c69, %c0_169, %c0_170] : memref<169x8x128xf32, #tpu.memory_space<vmem>>, vector<1x8x128xf32>
      %621 = vector.shape_cast %620 : vector<1x8x128xf32> to vector<8x128xf32>
      %622 = vector.shape_cast %621 : vector<8x128xf32> to vector<1x8x128xf32>
      %623 = vector.broadcast %622 : vector<1x8x128xf32> to vector<2x8x128xf32>
      %624 = arith.mulf %619, %623 : vector<2x8x128xf32>
      %625 = arith.addf %616, %624 : vector<2x8x128xf32>
      %626 = vector.extract_strided_slice %618 {offsets = [1, 0, 0], sizes = [2, 8, 128], strides = [1, 1, 1]} : vector<3x8x128xf32> to vector<2x8x128xf32>
      %c77 = arith.constant 77 : index
      %c0_171 = arith.constant 0 : index
      %c0_172 = arith.constant 0 : index
      %627 = vector.load %arg4[%c77, %c0_171, %c0_172] : memref<169x8x128xf32, #tpu.memory_space<vmem>>, vector<1x8x128xf32>
      %628 = vector.shape_cast %627 : vector<1x8x128xf32> to vector<8x128xf32>
      %629 = vector.shape_cast %628 : vector<8x128xf32> to vector<1x8x128xf32>
      %630 = vector.broadcast %629 : vector<1x8x128xf32> to vector<2x8x128xf32>
      %631 = arith.mulf %626, %630 : vector<2x8x128xf32>
      %632 = arith.addf %625, %631 : vector<2x8x128xf32>
      %633 = vector.extract_strided_slice %552 {offsets = [5, 0], sizes = [16, 128], strides = [1, 1]} : vector<28x128xf32> to vector<16x128xf32>
      %634 = vector.shape_cast %633 : vector<16x128xf32> to vector<2x8x128xf32>
      %c70 = arith.constant 70 : index
      %c0_173 = arith.constant 0 : index
      %c0_174 = arith.constant 0 : index
      %635 = vector.load %arg4[%c70, %c0_173, %c0_174] : memref<169x8x128xf32, #tpu.memory_space<vmem>>, vector<1x8x128xf32>
      %636 = vector.shape_cast %635 : vector<1x8x128xf32> to vector<8x128xf32>
      %637 = vector.shape_cast %636 : vector<8x128xf32> to vector<1x8x128xf32>
      %638 = vector.broadcast %637 : vector<1x8x128xf32> to vector<2x8x128xf32>
      %639 = arith.mulf %634, %638 : vector<2x8x128xf32>
      %640 = arith.addf %632, %639 : vector<2x8x128xf32>
      %641 = vector.extract_strided_slice %552 {offsets = [6, 0], sizes = [16, 128], strides = [1, 1]} : vector<28x128xf32> to vector<16x128xf32>
      %642 = vector.shape_cast %641 : vector<16x128xf32> to vector<2x8x128xf32>
      %c71 = arith.constant 71 : index
      %c0_175 = arith.constant 0 : index
      %c0_176 = arith.constant 0 : index
      %643 = vector.load %arg4[%c71, %c0_175, %c0_176] : memref<169x8x128xf32, #tpu.memory_space<vmem>>, vector<1x8x128xf32>
      %644 = vector.shape_cast %643 : vector<1x8x128xf32> to vector<8x128xf32>
      %645 = vector.shape_cast %644 : vector<8x128xf32> to vector<1x8x128xf32>
      %646 = vector.broadcast %645 : vector<1x8x128xf32> to vector<2x8x128xf32>
      %647 = arith.mulf %642, %646 : vector<2x8x128xf32>
      %648 = arith.addf %640, %647 : vector<2x8x128xf32>
      %649 = vector.extract_strided_slice %552 {offsets = [7, 0], sizes = [16, 128], strides = [1, 1]} : vector<28x128xf32> to vector<16x128xf32>
      %650 = vector.shape_cast %649 : vector<16x128xf32> to vector<2x8x128xf32>
      %c72 = arith.constant 72 : index
      %c0_177 = arith.constant 0 : index
      %c0_178 = arith.constant 0 : index
      %651 = vector.load %arg4[%c72, %c0_177, %c0_178] : memref<169x8x128xf32, #tpu.memory_space<vmem>>, vector<1x8x128xf32>
      %652 = vector.shape_cast %651 : vector<1x8x128xf32> to vector<8x128xf32>
      %653 = vector.shape_cast %652 : vector<8x128xf32> to vector<1x8x128xf32>
      %654 = vector.broadcast %653 : vector<1x8x128xf32> to vector<2x8x128xf32>
      %655 = arith.mulf %650, %654 : vector<2x8x128xf32>
      %656 = arith.addf %648, %655 : vector<2x8x128xf32>
      %c6_i32 = arith.constant 6 : i32
      %657 = arith.addi %arg9, %c6_i32 : i32
      %658 = arith.index_cast %657 : i32 to index
      %c0_179 = arith.constant 0 : index
      %c0_180 = arith.constant 0 : index
      %659 = vector.load %arg7[%658, %c0_179, %c0_180] : memref<28x28x128xf32, #tpu.memory_space<vmem>>, vector<1x28x128xf32>
      %660 = vector.shape_cast %659 : vector<1x28x128xf32> to vector<28x128xf32>
      %661 = vector.extract_strided_slice %660 {offsets = [0, 0], sizes = [24, 128], strides = [1, 1]} : vector<28x128xf32> to vector<24x128xf32>
      %662 = vector.shape_cast %661 : vector<24x128xf32> to vector<3x8x128xf32>
      %663 = vector.extract_strided_slice %662 {offsets = [0, 0, 0], sizes = [2, 8, 128], strides = [1, 1, 1]} : vector<3x8x128xf32> to vector<2x8x128xf32>
      %c78 = arith.constant 78 : index
      %c0_181 = arith.constant 0 : index
      %c0_182 = arith.constant 0 : index
      %664 = vector.load %arg4[%c78, %c0_181, %c0_182] : memref<169x8x128xf32, #tpu.memory_space<vmem>>, vector<1x8x128xf32>
      %665 = vector.shape_cast %664 : vector<1x8x128xf32> to vector<8x128xf32>
      %666 = vector.shape_cast %665 : vector<8x128xf32> to vector<1x8x128xf32>
      %667 = vector.broadcast %666 : vector<1x8x128xf32> to vector<2x8x128xf32>
      %668 = arith.mulf %663, %667 : vector<2x8x128xf32>
      %669 = arith.addf %548, %668 : vector<2x8x128xf32>
      %670 = vector.extract_strided_slice %662 {offsets = [1, 0, 0], sizes = [2, 8, 128], strides = [1, 1, 1]} : vector<3x8x128xf32> to vector<2x8x128xf32>
      %c86 = arith.constant 86 : index
      %c0_183 = arith.constant 0 : index
      %c0_184 = arith.constant 0 : index
      %671 = vector.load %arg4[%c86, %c0_183, %c0_184] : memref<169x8x128xf32, #tpu.memory_space<vmem>>, vector<1x8x128xf32>
      %672 = vector.shape_cast %671 : vector<1x8x128xf32> to vector<8x128xf32>
      %673 = vector.shape_cast %672 : vector<8x128xf32> to vector<1x8x128xf32>
      %674 = vector.broadcast %673 : vector<1x8x128xf32> to vector<2x8x128xf32>
      %675 = arith.mulf %670, %674 : vector<2x8x128xf32>
      %676 = arith.addf %669, %675 : vector<2x8x128xf32>
      %677 = vector.extract_strided_slice %660 {offsets = [1, 0], sizes = [24, 128], strides = [1, 1]} : vector<28x128xf32> to vector<24x128xf32>
      %678 = vector.shape_cast %677 : vector<24x128xf32> to vector<3x8x128xf32>
      %679 = vector.extract_strided_slice %678 {offsets = [0, 0, 0], sizes = [2, 8, 128], strides = [1, 1, 1]} : vector<3x8x128xf32> to vector<2x8x128xf32>
      %c79 = arith.constant 79 : index
      %c0_185 = arith.constant 0 : index
      %c0_186 = arith.constant 0 : index
      %680 = vector.load %arg4[%c79, %c0_185, %c0_186] : memref<169x8x128xf32, #tpu.memory_space<vmem>>, vector<1x8x128xf32>
      %681 = vector.shape_cast %680 : vector<1x8x128xf32> to vector<8x128xf32>
      %682 = vector.shape_cast %681 : vector<8x128xf32> to vector<1x8x128xf32>
      %683 = vector.broadcast %682 : vector<1x8x128xf32> to vector<2x8x128xf32>
      %684 = arith.mulf %679, %683 : vector<2x8x128xf32>
      %685 = arith.addf %676, %684 : vector<2x8x128xf32>
      %686 = vector.extract_strided_slice %678 {offsets = [1, 0, 0], sizes = [2, 8, 128], strides = [1, 1, 1]} : vector<3x8x128xf32> to vector<2x8x128xf32>
      %c87 = arith.constant 87 : index
      %c0_187 = arith.constant 0 : index
      %c0_188 = arith.constant 0 : index
      %687 = vector.load %arg4[%c87, %c0_187, %c0_188] : memref<169x8x128xf32, #tpu.memory_space<vmem>>, vector<1x8x128xf32>
      %688 = vector.shape_cast %687 : vector<1x8x128xf32> to vector<8x128xf32>
      %689 = vector.shape_cast %688 : vector<8x128xf32> to vector<1x8x128xf32>
      %690 = vector.broadcast %689 : vector<1x8x128xf32> to vector<2x8x128xf32>
      %691 = arith.mulf %686, %690 : vector<2x8x128xf32>
      %692 = arith.addf %685, %691 : vector<2x8x128xf32>
      %693 = vector.extract_strided_slice %660 {offsets = [2, 0], sizes = [24, 128], strides = [1, 1]} : vector<28x128xf32> to vector<24x128xf32>
      %694 = vector.shape_cast %693 : vector<24x128xf32> to vector<3x8x128xf32>
      %695 = vector.extract_strided_slice %694 {offsets = [0, 0, 0], sizes = [2, 8, 128], strides = [1, 1, 1]} : vector<3x8x128xf32> to vector<2x8x128xf32>
      %c80 = arith.constant 80 : index
      %c0_189 = arith.constant 0 : index
      %c0_190 = arith.constant 0 : index
      %696 = vector.load %arg4[%c80, %c0_189, %c0_190] : memref<169x8x128xf32, #tpu.memory_space<vmem>>, vector<1x8x128xf32>
      %697 = vector.shape_cast %696 : vector<1x8x128xf32> to vector<8x128xf32>
      %698 = vector.shape_cast %697 : vector<8x128xf32> to vector<1x8x128xf32>
      %699 = vector.broadcast %698 : vector<1x8x128xf32> to vector<2x8x128xf32>
      %700 = arith.mulf %695, %699 : vector<2x8x128xf32>
      %701 = arith.addf %692, %700 : vector<2x8x128xf32>
      %702 = vector.extract_strided_slice %694 {offsets = [1, 0, 0], sizes = [2, 8, 128], strides = [1, 1, 1]} : vector<3x8x128xf32> to vector<2x8x128xf32>
      %c88 = arith.constant 88 : index
      %c0_191 = arith.constant 0 : index
      %c0_192 = arith.constant 0 : index
      %703 = vector.load %arg4[%c88, %c0_191, %c0_192] : memref<169x8x128xf32, #tpu.memory_space<vmem>>, vector<1x8x128xf32>
      %704 = vector.shape_cast %703 : vector<1x8x128xf32> to vector<8x128xf32>
      %705 = vector.shape_cast %704 : vector<8x128xf32> to vector<1x8x128xf32>
      %706 = vector.broadcast %705 : vector<1x8x128xf32> to vector<2x8x128xf32>
      %707 = arith.mulf %702, %706 : vector<2x8x128xf32>
      %708 = arith.addf %701, %707 : vector<2x8x128xf32>
      %709 = vector.extract_strided_slice %660 {offsets = [3, 0], sizes = [24, 128], strides = [1, 1]} : vector<28x128xf32> to vector<24x128xf32>
      %710 = vector.shape_cast %709 : vector<24x128xf32> to vector<3x8x128xf32>
      %711 = vector.extract_strided_slice %710 {offsets = [0, 0, 0], sizes = [2, 8, 128], strides = [1, 1, 1]} : vector<3x8x128xf32> to vector<2x8x128xf32>
      %c81 = arith.constant 81 : index
      %c0_193 = arith.constant 0 : index
      %c0_194 = arith.constant 0 : index
      %712 = vector.load %arg4[%c81, %c0_193, %c0_194] : memref<169x8x128xf32, #tpu.memory_space<vmem>>, vector<1x8x128xf32>
      %713 = vector.shape_cast %712 : vector<1x8x128xf32> to vector<8x128xf32>
      %714 = vector.shape_cast %713 : vector<8x128xf32> to vector<1x8x128xf32>
      %715 = vector.broadcast %714 : vector<1x8x128xf32> to vector<2x8x128xf32>
      %716 = arith.mulf %711, %715 : vector<2x8x128xf32>
      %717 = arith.addf %708, %716 : vector<2x8x128xf32>
      %718 = vector.extract_strided_slice %710 {offsets = [1, 0, 0], sizes = [2, 8, 128], strides = [1, 1, 1]} : vector<3x8x128xf32> to vector<2x8x128xf32>
      %c89 = arith.constant 89 : index
      %c0_195 = arith.constant 0 : index
      %c0_196 = arith.constant 0 : index
      %719 = vector.load %arg4[%c89, %c0_195, %c0_196] : memref<169x8x128xf32, #tpu.memory_space<vmem>>, vector<1x8x128xf32>
      %720 = vector.shape_cast %719 : vector<1x8x128xf32> to vector<8x128xf32>
      %721 = vector.shape_cast %720 : vector<8x128xf32> to vector<1x8x128xf32>
      %722 = vector.broadcast %721 : vector<1x8x128xf32> to vector<2x8x128xf32>
      %723 = arith.mulf %718, %722 : vector<2x8x128xf32>
      %724 = arith.addf %717, %723 : vector<2x8x128xf32>
      %725 = vector.extract_strided_slice %660 {offsets = [4, 0], sizes = [24, 128], strides = [1, 1]} : vector<28x128xf32> to vector<24x128xf32>
      %726 = vector.shape_cast %725 : vector<24x128xf32> to vector<3x8x128xf32>
      %727 = vector.extract_strided_slice %726 {offsets = [0, 0, 0], sizes = [2, 8, 128], strides = [1, 1, 1]} : vector<3x8x128xf32> to vector<2x8x128xf32>
      %c82 = arith.constant 82 : index
      %c0_197 = arith.constant 0 : index
      %c0_198 = arith.constant 0 : index
      %728 = vector.load %arg4[%c82, %c0_197, %c0_198] : memref<169x8x128xf32, #tpu.memory_space<vmem>>, vector<1x8x128xf32>
      %729 = vector.shape_cast %728 : vector<1x8x128xf32> to vector<8x128xf32>
      %730 = vector.shape_cast %729 : vector<8x128xf32> to vector<1x8x128xf32>
      %731 = vector.broadcast %730 : vector<1x8x128xf32> to vector<2x8x128xf32>
      %732 = arith.mulf %727, %731 : vector<2x8x128xf32>
      %733 = arith.addf %724, %732 : vector<2x8x128xf32>
      %734 = vector.extract_strided_slice %726 {offsets = [1, 0, 0], sizes = [2, 8, 128], strides = [1, 1, 1]} : vector<3x8x128xf32> to vector<2x8x128xf32>
      %c90 = arith.constant 90 : index
      %c0_199 = arith.constant 0 : index
      %c0_200 = arith.constant 0 : index
      %735 = vector.load %arg4[%c90, %c0_199, %c0_200] : memref<169x8x128xf32, #tpu.memory_space<vmem>>, vector<1x8x128xf32>
      %736 = vector.shape_cast %735 : vector<1x8x128xf32> to vector<8x128xf32>
      %737 = vector.shape_cast %736 : vector<8x128xf32> to vector<1x8x128xf32>
      %738 = vector.broadcast %737 : vector<1x8x128xf32> to vector<2x8x128xf32>
      %739 = arith.mulf %734, %738 : vector<2x8x128xf32>
      %740 = arith.addf %733, %739 : vector<2x8x128xf32>
      %741 = vector.extract_strided_slice %660 {offsets = [5, 0], sizes = [16, 128], strides = [1, 1]} : vector<28x128xf32> to vector<16x128xf32>
      %742 = vector.shape_cast %741 : vector<16x128xf32> to vector<2x8x128xf32>
      %c83 = arith.constant 83 : index
      %c0_201 = arith.constant 0 : index
      %c0_202 = arith.constant 0 : index
      %743 = vector.load %arg4[%c83, %c0_201, %c0_202] : memref<169x8x128xf32, #tpu.memory_space<vmem>>, vector<1x8x128xf32>
      %744 = vector.shape_cast %743 : vector<1x8x128xf32> to vector<8x128xf32>
      %745 = vector.shape_cast %744 : vector<8x128xf32> to vector<1x8x128xf32>
      %746 = vector.broadcast %745 : vector<1x8x128xf32> to vector<2x8x128xf32>
      %747 = arith.mulf %742, %746 : vector<2x8x128xf32>
      %748 = arith.addf %740, %747 : vector<2x8x128xf32>
      %749 = vector.extract_strided_slice %660 {offsets = [6, 0], sizes = [16, 128], strides = [1, 1]} : vector<28x128xf32> to vector<16x128xf32>
      %750 = vector.shape_cast %749 : vector<16x128xf32> to vector<2x8x128xf32>
      %c84 = arith.constant 84 : index
      %c0_203 = arith.constant 0 : index
      %c0_204 = arith.constant 0 : index
      %751 = vector.load %arg4[%c84, %c0_203, %c0_204] : memref<169x8x128xf32, #tpu.memory_space<vmem>>, vector<1x8x128xf32>
      %752 = vector.shape_cast %751 : vector<1x8x128xf32> to vector<8x128xf32>
      %753 = vector.shape_cast %752 : vector<8x128xf32> to vector<1x8x128xf32>
      %754 = vector.broadcast %753 : vector<1x8x128xf32> to vector<2x8x128xf32>
      %755 = arith.mulf %750, %754 : vector<2x8x128xf32>
      %756 = arith.addf %748, %755 : vector<2x8x128xf32>
      %757 = vector.extract_strided_slice %660 {offsets = [7, 0], sizes = [16, 128], strides = [1, 1]} : vector<28x128xf32> to vector<16x128xf32>
      %758 = vector.shape_cast %757 : vector<16x128xf32> to vector<2x8x128xf32>
      %c85 = arith.constant 85 : index
      %c0_205 = arith.constant 0 : index
      %c0_206 = arith.constant 0 : index
      %759 = vector.load %arg4[%c85, %c0_205, %c0_206] : memref<169x8x128xf32, #tpu.memory_space<vmem>>, vector<1x8x128xf32>
      %760 = vector.shape_cast %759 : vector<1x8x128xf32> to vector<8x128xf32>
      %761 = vector.shape_cast %760 : vector<8x128xf32> to vector<1x8x128xf32>
      %762 = vector.broadcast %761 : vector<1x8x128xf32> to vector<2x8x128xf32>
      %763 = arith.mulf %758, %762 : vector<2x8x128xf32>
      %764 = arith.addf %756, %763 : vector<2x8x128xf32>
      %c7_i32 = arith.constant 7 : i32
      %765 = arith.addi %arg9, %c7_i32 : i32
      %766 = arith.index_cast %765 : i32 to index
      %c0_207 = arith.constant 0 : index
      %c0_208 = arith.constant 0 : index
      %767 = vector.load %arg7[%766, %c0_207, %c0_208] : memref<28x28x128xf32, #tpu.memory_space<vmem>>, vector<1x28x128xf32>
      %768 = vector.shape_cast %767 : vector<1x28x128xf32> to vector<28x128xf32>
      %769 = vector.extract_strided_slice %768 {offsets = [0, 0], sizes = [24, 128], strides = [1, 1]} : vector<28x128xf32> to vector<24x128xf32>
      %770 = vector.shape_cast %769 : vector<24x128xf32> to vector<3x8x128xf32>
      %771 = vector.extract_strided_slice %770 {offsets = [0, 0, 0], sizes = [2, 8, 128], strides = [1, 1, 1]} : vector<3x8x128xf32> to vector<2x8x128xf32>
      %c91 = arith.constant 91 : index
      %c0_209 = arith.constant 0 : index
      %c0_210 = arith.constant 0 : index
      %772 = vector.load %arg4[%c91, %c0_209, %c0_210] : memref<169x8x128xf32, #tpu.memory_space<vmem>>, vector<1x8x128xf32>
      %773 = vector.shape_cast %772 : vector<1x8x128xf32> to vector<8x128xf32>
      %774 = vector.shape_cast %773 : vector<8x128xf32> to vector<1x8x128xf32>
      %775 = vector.broadcast %774 : vector<1x8x128xf32> to vector<2x8x128xf32>
      %776 = arith.mulf %771, %775 : vector<2x8x128xf32>
      %777 = arith.addf %656, %776 : vector<2x8x128xf32>
      %778 = vector.extract_strided_slice %770 {offsets = [1, 0, 0], sizes = [2, 8, 128], strides = [1, 1, 1]} : vector<3x8x128xf32> to vector<2x8x128xf32>
      %c99 = arith.constant 99 : index
      %c0_211 = arith.constant 0 : index
      %c0_212 = arith.constant 0 : index
      %779 = vector.load %arg4[%c99, %c0_211, %c0_212] : memref<169x8x128xf32, #tpu.memory_space<vmem>>, vector<1x8x128xf32>
      %780 = vector.shape_cast %779 : vector<1x8x128xf32> to vector<8x128xf32>
      %781 = vector.shape_cast %780 : vector<8x128xf32> to vector<1x8x128xf32>
      %782 = vector.broadcast %781 : vector<1x8x128xf32> to vector<2x8x128xf32>
      %783 = arith.mulf %778, %782 : vector<2x8x128xf32>
      %784 = arith.addf %777, %783 : vector<2x8x128xf32>
      %785 = vector.extract_strided_slice %768 {offsets = [1, 0], sizes = [24, 128], strides = [1, 1]} : vector<28x128xf32> to vector<24x128xf32>
      %786 = vector.shape_cast %785 : vector<24x128xf32> to vector<3x8x128xf32>
      %787 = vector.extract_strided_slice %786 {offsets = [0, 0, 0], sizes = [2, 8, 128], strides = [1, 1, 1]} : vector<3x8x128xf32> to vector<2x8x128xf32>
      %c92 = arith.constant 92 : index
      %c0_213 = arith.constant 0 : index
      %c0_214 = arith.constant 0 : index
      %788 = vector.load %arg4[%c92, %c0_213, %c0_214] : memref<169x8x128xf32, #tpu.memory_space<vmem>>, vector<1x8x128xf32>
      %789 = vector.shape_cast %788 : vector<1x8x128xf32> to vector<8x128xf32>
      %790 = vector.shape_cast %789 : vector<8x128xf32> to vector<1x8x128xf32>
      %791 = vector.broadcast %790 : vector<1x8x128xf32> to vector<2x8x128xf32>
      %792 = arith.mulf %787, %791 : vector<2x8x128xf32>
      %793 = arith.addf %784, %792 : vector<2x8x128xf32>
      %794 = vector.extract_strided_slice %786 {offsets = [1, 0, 0], sizes = [2, 8, 128], strides = [1, 1, 1]} : vector<3x8x128xf32> to vector<2x8x128xf32>
      %c100 = arith.constant 100 : index
      %c0_215 = arith.constant 0 : index
      %c0_216 = arith.constant 0 : index
      %795 = vector.load %arg4[%c100, %c0_215, %c0_216] : memref<169x8x128xf32, #tpu.memory_space<vmem>>, vector<1x8x128xf32>
      %796 = vector.shape_cast %795 : vector<1x8x128xf32> to vector<8x128xf32>
      %797 = vector.shape_cast %796 : vector<8x128xf32> to vector<1x8x128xf32>
      %798 = vector.broadcast %797 : vector<1x8x128xf32> to vector<2x8x128xf32>
      %799 = arith.mulf %794, %798 : vector<2x8x128xf32>
      %800 = arith.addf %793, %799 : vector<2x8x128xf32>
      %801 = vector.extract_strided_slice %768 {offsets = [2, 0], sizes = [24, 128], strides = [1, 1]} : vector<28x128xf32> to vector<24x128xf32>
      %802 = vector.shape_cast %801 : vector<24x128xf32> to vector<3x8x128xf32>
      %803 = vector.extract_strided_slice %802 {offsets = [0, 0, 0], sizes = [2, 8, 128], strides = [1, 1, 1]} : vector<3x8x128xf32> to vector<2x8x128xf32>
      %c93 = arith.constant 93 : index
      %c0_217 = arith.constant 0 : index
      %c0_218 = arith.constant 0 : index
      %804 = vector.load %arg4[%c93, %c0_217, %c0_218] : memref<169x8x128xf32, #tpu.memory_space<vmem>>, vector<1x8x128xf32>
      %805 = vector.shape_cast %804 : vector<1x8x128xf32> to vector<8x128xf32>
      %806 = vector.shape_cast %805 : vector<8x128xf32> to vector<1x8x128xf32>
      %807 = vector.broadcast %806 : vector<1x8x128xf32> to vector<2x8x128xf32>
      %808 = arith.mulf %803, %807 : vector<2x8x128xf32>
      %809 = arith.addf %800, %808 : vector<2x8x128xf32>
      %810 = vector.extract_strided_slice %802 {offsets = [1, 0, 0], sizes = [2, 8, 128], strides = [1, 1, 1]} : vector<3x8x128xf32> to vector<2x8x128xf32>
      %c101 = arith.constant 101 : index
      %c0_219 = arith.constant 0 : index
      %c0_220 = arith.constant 0 : index
      %811 = vector.load %arg4[%c101, %c0_219, %c0_220] : memref<169x8x128xf32, #tpu.memory_space<vmem>>, vector<1x8x128xf32>
      %812 = vector.shape_cast %811 : vector<1x8x128xf32> to vector<8x128xf32>
      %813 = vector.shape_cast %812 : vector<8x128xf32> to vector<1x8x128xf32>
      %814 = vector.broadcast %813 : vector<1x8x128xf32> to vector<2x8x128xf32>
      %815 = arith.mulf %810, %814 : vector<2x8x128xf32>
      %816 = arith.addf %809, %815 : vector<2x8x128xf32>
      %817 = vector.extract_strided_slice %768 {offsets = [3, 0], sizes = [24, 128], strides = [1, 1]} : vector<28x128xf32> to vector<24x128xf32>
      %818 = vector.shape_cast %817 : vector<24x128xf32> to vector<3x8x128xf32>
      %819 = vector.extract_strided_slice %818 {offsets = [0, 0, 0], sizes = [2, 8, 128], strides = [1, 1, 1]} : vector<3x8x128xf32> to vector<2x8x128xf32>
      %c94 = arith.constant 94 : index
      %c0_221 = arith.constant 0 : index
      %c0_222 = arith.constant 0 : index
      %820 = vector.load %arg4[%c94, %c0_221, %c0_222] : memref<169x8x128xf32, #tpu.memory_space<vmem>>, vector<1x8x128xf32>
      %821 = vector.shape_cast %820 : vector<1x8x128xf32> to vector<8x128xf32>
      %822 = vector.shape_cast %821 : vector<8x128xf32> to vector<1x8x128xf32>
      %823 = vector.broadcast %822 : vector<1x8x128xf32> to vector<2x8x128xf32>
      %824 = arith.mulf %819, %823 : vector<2x8x128xf32>
      %825 = arith.addf %816, %824 : vector<2x8x128xf32>
      %826 = vector.extract_strided_slice %818 {offsets = [1, 0, 0], sizes = [2, 8, 128], strides = [1, 1, 1]} : vector<3x8x128xf32> to vector<2x8x128xf32>
      %c102 = arith.constant 102 : index
      %c0_223 = arith.constant 0 : index
      %c0_224 = arith.constant 0 : index
      %827 = vector.load %arg4[%c102, %c0_223, %c0_224] : memref<169x8x128xf32, #tpu.memory_space<vmem>>, vector<1x8x128xf32>
      %828 = vector.shape_cast %827 : vector<1x8x128xf32> to vector<8x128xf32>
      %829 = vector.shape_cast %828 : vector<8x128xf32> to vector<1x8x128xf32>
      %830 = vector.broadcast %829 : vector<1x8x128xf32> to vector<2x8x128xf32>
      %831 = arith.mulf %826, %830 : vector<2x8x128xf32>
      %832 = arith.addf %825, %831 : vector<2x8x128xf32>
      %833 = vector.extract_strided_slice %768 {offsets = [4, 0], sizes = [24, 128], strides = [1, 1]} : vector<28x128xf32> to vector<24x128xf32>
      %834 = vector.shape_cast %833 : vector<24x128xf32> to vector<3x8x128xf32>
      %835 = vector.extract_strided_slice %834 {offsets = [0, 0, 0], sizes = [2, 8, 128], strides = [1, 1, 1]} : vector<3x8x128xf32> to vector<2x8x128xf32>
      %c95 = arith.constant 95 : index
      %c0_225 = arith.constant 0 : index
      %c0_226 = arith.constant 0 : index
      %836 = vector.load %arg4[%c95, %c0_225, %c0_226] : memref<169x8x128xf32, #tpu.memory_space<vmem>>, vector<1x8x128xf32>
      %837 = vector.shape_cast %836 : vector<1x8x128xf32> to vector<8x128xf32>
      %838 = vector.shape_cast %837 : vector<8x128xf32> to vector<1x8x128xf32>
      %839 = vector.broadcast %838 : vector<1x8x128xf32> to vector<2x8x128xf32>
      %840 = arith.mulf %835, %839 : vector<2x8x128xf32>
      %841 = arith.addf %832, %840 : vector<2x8x128xf32>
      %842 = vector.extract_strided_slice %834 {offsets = [1, 0, 0], sizes = [2, 8, 128], strides = [1, 1, 1]} : vector<3x8x128xf32> to vector<2x8x128xf32>
      %c103 = arith.constant 103 : index
      %c0_227 = arith.constant 0 : index
      %c0_228 = arith.constant 0 : index
      %843 = vector.load %arg4[%c103, %c0_227, %c0_228] : memref<169x8x128xf32, #tpu.memory_space<vmem>>, vector<1x8x128xf32>
      %844 = vector.shape_cast %843 : vector<1x8x128xf32> to vector<8x128xf32>
      %845 = vector.shape_cast %844 : vector<8x128xf32> to vector<1x8x128xf32>
      %846 = vector.broadcast %845 : vector<1x8x128xf32> to vector<2x8x128xf32>
      %847 = arith.mulf %842, %846 : vector<2x8x128xf32>
      %848 = arith.addf %841, %847 : vector<2x8x128xf32>
      %849 = vector.extract_strided_slice %768 {offsets = [5, 0], sizes = [16, 128], strides = [1, 1]} : vector<28x128xf32> to vector<16x128xf32>
      %850 = vector.shape_cast %849 : vector<16x128xf32> to vector<2x8x128xf32>
      %c96 = arith.constant 96 : index
      %c0_229 = arith.constant 0 : index
      %c0_230 = arith.constant 0 : index
      %851 = vector.load %arg4[%c96, %c0_229, %c0_230] : memref<169x8x128xf32, #tpu.memory_space<vmem>>, vector<1x8x128xf32>
      %852 = vector.shape_cast %851 : vector<1x8x128xf32> to vector<8x128xf32>
      %853 = vector.shape_cast %852 : vector<8x128xf32> to vector<1x8x128xf32>
      %854 = vector.broadcast %853 : vector<1x8x128xf32> to vector<2x8x128xf32>
      %855 = arith.mulf %850, %854 : vector<2x8x128xf32>
      %856 = arith.addf %848, %855 : vector<2x8x128xf32>
      %857 = vector.extract_strided_slice %768 {offsets = [6, 0], sizes = [16, 128], strides = [1, 1]} : vector<28x128xf32> to vector<16x128xf32>
      %858 = vector.shape_cast %857 : vector<16x128xf32> to vector<2x8x128xf32>
      %c97 = arith.constant 97 : index
      %c0_231 = arith.constant 0 : index
      %c0_232 = arith.constant 0 : index
      %859 = vector.load %arg4[%c97, %c0_231, %c0_232] : memref<169x8x128xf32, #tpu.memory_space<vmem>>, vector<1x8x128xf32>
      %860 = vector.shape_cast %859 : vector<1x8x128xf32> to vector<8x128xf32>
      %861 = vector.shape_cast %860 : vector<8x128xf32> to vector<1x8x128xf32>
      %862 = vector.broadcast %861 : vector<1x8x128xf32> to vector<2x8x128xf32>
      %863 = arith.mulf %858, %862 : vector<2x8x128xf32>
      %864 = arith.addf %856, %863 : vector<2x8x128xf32>
      %865 = vector.extract_strided_slice %768 {offsets = [7, 0], sizes = [16, 128], strides = [1, 1]} : vector<28x128xf32> to vector<16x128xf32>
      %866 = vector.shape_cast %865 : vector<16x128xf32> to vector<2x8x128xf32>
      %c98 = arith.constant 98 : index
      %c0_233 = arith.constant 0 : index
      %c0_234 = arith.constant 0 : index
      %867 = vector.load %arg4[%c98, %c0_233, %c0_234] : memref<169x8x128xf32, #tpu.memory_space<vmem>>, vector<1x8x128xf32>
      %868 = vector.shape_cast %867 : vector<1x8x128xf32> to vector<8x128xf32>
      %869 = vector.shape_cast %868 : vector<8x128xf32> to vector<1x8x128xf32>
      %870 = vector.broadcast %869 : vector<1x8x128xf32> to vector<2x8x128xf32>
      %871 = arith.mulf %866, %870 : vector<2x8x128xf32>
      %872 = arith.addf %864, %871 : vector<2x8x128xf32>
      %c8_i32 = arith.constant 8 : i32
      %873 = arith.addi %arg9, %c8_i32 : i32
      %874 = arith.index_cast %873 : i32 to index
      %c0_235 = arith.constant 0 : index
      %c0_236 = arith.constant 0 : index
      %875 = vector.load %arg7[%874, %c0_235, %c0_236] : memref<28x28x128xf32, #tpu.memory_space<vmem>>, vector<1x28x128xf32>
      %876 = vector.shape_cast %875 : vector<1x28x128xf32> to vector<28x128xf32>
      %877 = vector.extract_strided_slice %876 {offsets = [0, 0], sizes = [24, 128], strides = [1, 1]} : vector<28x128xf32> to vector<24x128xf32>
      %878 = vector.shape_cast %877 : vector<24x128xf32> to vector<3x8x128xf32>
      %879 = vector.extract_strided_slice %878 {offsets = [0, 0, 0], sizes = [2, 8, 128], strides = [1, 1, 1]} : vector<3x8x128xf32> to vector<2x8x128xf32>
      %c104 = arith.constant 104 : index
      %c0_237 = arith.constant 0 : index
      %c0_238 = arith.constant 0 : index
      %880 = vector.load %arg4[%c104, %c0_237, %c0_238] : memref<169x8x128xf32, #tpu.memory_space<vmem>>, vector<1x8x128xf32>
      %881 = vector.shape_cast %880 : vector<1x8x128xf32> to vector<8x128xf32>
      %882 = vector.shape_cast %881 : vector<8x128xf32> to vector<1x8x128xf32>
      %883 = vector.broadcast %882 : vector<1x8x128xf32> to vector<2x8x128xf32>
      %884 = arith.mulf %879, %883 : vector<2x8x128xf32>
      %885 = arith.addf %764, %884 : vector<2x8x128xf32>
      %886 = vector.extract_strided_slice %878 {offsets = [1, 0, 0], sizes = [2, 8, 128], strides = [1, 1, 1]} : vector<3x8x128xf32> to vector<2x8x128xf32>
      %c112 = arith.constant 112 : index
      %c0_239 = arith.constant 0 : index
      %c0_240 = arith.constant 0 : index
      %887 = vector.load %arg4[%c112, %c0_239, %c0_240] : memref<169x8x128xf32, #tpu.memory_space<vmem>>, vector<1x8x128xf32>
      %888 = vector.shape_cast %887 : vector<1x8x128xf32> to vector<8x128xf32>
      %889 = vector.shape_cast %888 : vector<8x128xf32> to vector<1x8x128xf32>
      %890 = vector.broadcast %889 : vector<1x8x128xf32> to vector<2x8x128xf32>
      %891 = arith.mulf %886, %890 : vector<2x8x128xf32>
      %892 = arith.addf %885, %891 : vector<2x8x128xf32>
      %893 = vector.extract_strided_slice %876 {offsets = [1, 0], sizes = [24, 128], strides = [1, 1]} : vector<28x128xf32> to vector<24x128xf32>
      %894 = vector.shape_cast %893 : vector<24x128xf32> to vector<3x8x128xf32>
      %895 = vector.extract_strided_slice %894 {offsets = [0, 0, 0], sizes = [2, 8, 128], strides = [1, 1, 1]} : vector<3x8x128xf32> to vector<2x8x128xf32>
      %c105 = arith.constant 105 : index
      %c0_241 = arith.constant 0 : index
      %c0_242 = arith.constant 0 : index
      %896 = vector.load %arg4[%c105, %c0_241, %c0_242] : memref<169x8x128xf32, #tpu.memory_space<vmem>>, vector<1x8x128xf32>
      %897 = vector.shape_cast %896 : vector<1x8x128xf32> to vector<8x128xf32>
      %898 = vector.shape_cast %897 : vector<8x128xf32> to vector<1x8x128xf32>
      %899 = vector.broadcast %898 : vector<1x8x128xf32> to vector<2x8x128xf32>
      %900 = arith.mulf %895, %899 : vector<2x8x128xf32>
      %901 = arith.addf %892, %900 : vector<2x8x128xf32>
      %902 = vector.extract_strided_slice %894 {offsets = [1, 0, 0], sizes = [2, 8, 128], strides = [1, 1, 1]} : vector<3x8x128xf32> to vector<2x8x128xf32>
      %c113 = arith.constant 113 : index
      %c0_243 = arith.constant 0 : index
      %c0_244 = arith.constant 0 : index
      %903 = vector.load %arg4[%c113, %c0_243, %c0_244] : memref<169x8x128xf32, #tpu.memory_space<vmem>>, vector<1x8x128xf32>
      %904 = vector.shape_cast %903 : vector<1x8x128xf32> to vector<8x128xf32>
      %905 = vector.shape_cast %904 : vector<8x128xf32> to vector<1x8x128xf32>
      %906 = vector.broadcast %905 : vector<1x8x128xf32> to vector<2x8x128xf32>
      %907 = arith.mulf %902, %906 : vector<2x8x128xf32>
      %908 = arith.addf %901, %907 : vector<2x8x128xf32>
      %909 = vector.extract_strided_slice %876 {offsets = [2, 0], sizes = [24, 128], strides = [1, 1]} : vector<28x128xf32> to vector<24x128xf32>
      %910 = vector.shape_cast %909 : vector<24x128xf32> to vector<3x8x128xf32>
      %911 = vector.extract_strided_slice %910 {offsets = [0, 0, 0], sizes = [2, 8, 128], strides = [1, 1, 1]} : vector<3x8x128xf32> to vector<2x8x128xf32>
      %c106 = arith.constant 106 : index
      %c0_245 = arith.constant 0 : index
      %c0_246 = arith.constant 0 : index
      %912 = vector.load %arg4[%c106, %c0_245, %c0_246] : memref<169x8x128xf32, #tpu.memory_space<vmem>>, vector<1x8x128xf32>
      %913 = vector.shape_cast %912 : vector<1x8x128xf32> to vector<8x128xf32>
      %914 = vector.shape_cast %913 : vector<8x128xf32> to vector<1x8x128xf32>
      %915 = vector.broadcast %914 : vector<1x8x128xf32> to vector<2x8x128xf32>
      %916 = arith.mulf %911, %915 : vector<2x8x128xf32>
      %917 = arith.addf %908, %916 : vector<2x8x128xf32>
      %918 = vector.extract_strided_slice %910 {offsets = [1, 0, 0], sizes = [2, 8, 128], strides = [1, 1, 1]} : vector<3x8x128xf32> to vector<2x8x128xf32>
      %c114 = arith.constant 114 : index
      %c0_247 = arith.constant 0 : index
      %c0_248 = arith.constant 0 : index
      %919 = vector.load %arg4[%c114, %c0_247, %c0_248] : memref<169x8x128xf32, #tpu.memory_space<vmem>>, vector<1x8x128xf32>
      %920 = vector.shape_cast %919 : vector<1x8x128xf32> to vector<8x128xf32>
      %921 = vector.shape_cast %920 : vector<8x128xf32> to vector<1x8x128xf32>
      %922 = vector.broadcast %921 : vector<1x8x128xf32> to vector<2x8x128xf32>
      %923 = arith.mulf %918, %922 : vector<2x8x128xf32>
      %924 = arith.addf %917, %923 : vector<2x8x128xf32>
      %925 = vector.extract_strided_slice %876 {offsets = [3, 0], sizes = [24, 128], strides = [1, 1]} : vector<28x128xf32> to vector<24x128xf32>
      %926 = vector.shape_cast %925 : vector<24x128xf32> to vector<3x8x128xf32>
      %927 = vector.extract_strided_slice %926 {offsets = [0, 0, 0], sizes = [2, 8, 128], strides = [1, 1, 1]} : vector<3x8x128xf32> to vector<2x8x128xf32>
      %c107 = arith.constant 107 : index
      %c0_249 = arith.constant 0 : index
      %c0_250 = arith.constant 0 : index
      %928 = vector.load %arg4[%c107, %c0_249, %c0_250] : memref<169x8x128xf32, #tpu.memory_space<vmem>>, vector<1x8x128xf32>
      %929 = vector.shape_cast %928 : vector<1x8x128xf32> to vector<8x128xf32>
      %930 = vector.shape_cast %929 : vector<8x128xf32> to vector<1x8x128xf32>
      %931 = vector.broadcast %930 : vector<1x8x128xf32> to vector<2x8x128xf32>
      %932 = arith.mulf %927, %931 : vector<2x8x128xf32>
      %933 = arith.addf %924, %932 : vector<2x8x128xf32>
      %934 = vector.extract_strided_slice %926 {offsets = [1, 0, 0], sizes = [2, 8, 128], strides = [1, 1, 1]} : vector<3x8x128xf32> to vector<2x8x128xf32>
      %c115 = arith.constant 115 : index
      %c0_251 = arith.constant 0 : index
      %c0_252 = arith.constant 0 : index
      %935 = vector.load %arg4[%c115, %c0_251, %c0_252] : memref<169x8x128xf32, #tpu.memory_space<vmem>>, vector<1x8x128xf32>
      %936 = vector.shape_cast %935 : vector<1x8x128xf32> to vector<8x128xf32>
      %937 = vector.shape_cast %936 : vector<8x128xf32> to vector<1x8x128xf32>
      %938 = vector.broadcast %937 : vector<1x8x128xf32> to vector<2x8x128xf32>
      %939 = arith.mulf %934, %938 : vector<2x8x128xf32>
      %940 = arith.addf %933, %939 : vector<2x8x128xf32>
      %941 = vector.extract_strided_slice %876 {offsets = [4, 0], sizes = [24, 128], strides = [1, 1]} : vector<28x128xf32> to vector<24x128xf32>
      %942 = vector.shape_cast %941 : vector<24x128xf32> to vector<3x8x128xf32>
      %943 = vector.extract_strided_slice %942 {offsets = [0, 0, 0], sizes = [2, 8, 128], strides = [1, 1, 1]} : vector<3x8x128xf32> to vector<2x8x128xf32>
      %c108 = arith.constant 108 : index
      %c0_253 = arith.constant 0 : index
      %c0_254 = arith.constant 0 : index
      %944 = vector.load %arg4[%c108, %c0_253, %c0_254] : memref<169x8x128xf32, #tpu.memory_space<vmem>>, vector<1x8x128xf32>
      %945 = vector.shape_cast %944 : vector<1x8x128xf32> to vector<8x128xf32>
      %946 = vector.shape_cast %945 : vector<8x128xf32> to vector<1x8x128xf32>
      %947 = vector.broadcast %946 : vector<1x8x128xf32> to vector<2x8x128xf32>
      %948 = arith.mulf %943, %947 : vector<2x8x128xf32>
      %949 = arith.addf %940, %948 : vector<2x8x128xf32>
      %950 = vector.extract_strided_slice %942 {offsets = [1, 0, 0], sizes = [2, 8, 128], strides = [1, 1, 1]} : vector<3x8x128xf32> to vector<2x8x128xf32>
      %c116 = arith.constant 116 : index
      %c0_255 = arith.constant 0 : index
      %c0_256 = arith.constant 0 : index
      %951 = vector.load %arg4[%c116, %c0_255, %c0_256] : memref<169x8x128xf32, #tpu.memory_space<vmem>>, vector<1x8x128xf32>
      %952 = vector.shape_cast %951 : vector<1x8x128xf32> to vector<8x128xf32>
      %953 = vector.shape_cast %952 : vector<8x128xf32> to vector<1x8x128xf32>
      %954 = vector.broadcast %953 : vector<1x8x128xf32> to vector<2x8x128xf32>
      %955 = arith.mulf %950, %954 : vector<2x8x128xf32>
      %956 = arith.addf %949, %955 : vector<2x8x128xf32>
      %957 = vector.extract_strided_slice %876 {offsets = [5, 0], sizes = [16, 128], strides = [1, 1]} : vector<28x128xf32> to vector<16x128xf32>
      %958 = vector.shape_cast %957 : vector<16x128xf32> to vector<2x8x128xf32>
      %c109 = arith.constant 109 : index
      %c0_257 = arith.constant 0 : index
      %c0_258 = arith.constant 0 : index
      %959 = vector.load %arg4[%c109, %c0_257, %c0_258] : memref<169x8x128xf32, #tpu.memory_space<vmem>>, vector<1x8x128xf32>
      %960 = vector.shape_cast %959 : vector<1x8x128xf32> to vector<8x128xf32>
      %961 = vector.shape_cast %960 : vector<8x128xf32> to vector<1x8x128xf32>
      %962 = vector.broadcast %961 : vector<1x8x128xf32> to vector<2x8x128xf32>
      %963 = arith.mulf %958, %962 : vector<2x8x128xf32>
      %964 = arith.addf %956, %963 : vector<2x8x128xf32>
      %965 = vector.extract_strided_slice %876 {offsets = [6, 0], sizes = [16, 128], strides = [1, 1]} : vector<28x128xf32> to vector<16x128xf32>
      %966 = vector.shape_cast %965 : vector<16x128xf32> to vector<2x8x128xf32>
      %c110 = arith.constant 110 : index
      %c0_259 = arith.constant 0 : index
      %c0_260 = arith.constant 0 : index
      %967 = vector.load %arg4[%c110, %c0_259, %c0_260] : memref<169x8x128xf32, #tpu.memory_space<vmem>>, vector<1x8x128xf32>
      %968 = vector.shape_cast %967 : vector<1x8x128xf32> to vector<8x128xf32>
      %969 = vector.shape_cast %968 : vector<8x128xf32> to vector<1x8x128xf32>
      %970 = vector.broadcast %969 : vector<1x8x128xf32> to vector<2x8x128xf32>
      %971 = arith.mulf %966, %970 : vector<2x8x128xf32>
      %972 = arith.addf %964, %971 : vector<2x8x128xf32>
      %973 = vector.extract_strided_slice %876 {offsets = [7, 0], sizes = [16, 128], strides = [1, 1]} : vector<28x128xf32> to vector<16x128xf32>
      %974 = vector.shape_cast %973 : vector<16x128xf32> to vector<2x8x128xf32>
      %c111 = arith.constant 111 : index
      %c0_261 = arith.constant 0 : index
      %c0_262 = arith.constant 0 : index
      %975 = vector.load %arg4[%c111, %c0_261, %c0_262] : memref<169x8x128xf32, #tpu.memory_space<vmem>>, vector<1x8x128xf32>
      %976 = vector.shape_cast %975 : vector<1x8x128xf32> to vector<8x128xf32>
      %977 = vector.shape_cast %976 : vector<8x128xf32> to vector<1x8x128xf32>
      %978 = vector.broadcast %977 : vector<1x8x128xf32> to vector<2x8x128xf32>
      %979 = arith.mulf %974, %978 : vector<2x8x128xf32>
      %980 = arith.addf %972, %979 : vector<2x8x128xf32>
      %c9_i32 = arith.constant 9 : i32
      %981 = arith.addi %arg9, %c9_i32 : i32
      %982 = arith.index_cast %981 : i32 to index
      %c0_263 = arith.constant 0 : index
      %c0_264 = arith.constant 0 : index
      %983 = vector.load %arg7[%982, %c0_263, %c0_264] : memref<28x28x128xf32, #tpu.memory_space<vmem>>, vector<1x28x128xf32>
      %984 = vector.shape_cast %983 : vector<1x28x128xf32> to vector<28x128xf32>
      %985 = vector.extract_strided_slice %984 {offsets = [0, 0], sizes = [24, 128], strides = [1, 1]} : vector<28x128xf32> to vector<24x128xf32>
      %986 = vector.shape_cast %985 : vector<24x128xf32> to vector<3x8x128xf32>
      %987 = vector.extract_strided_slice %986 {offsets = [0, 0, 0], sizes = [2, 8, 128], strides = [1, 1, 1]} : vector<3x8x128xf32> to vector<2x8x128xf32>
      %c117 = arith.constant 117 : index
      %c0_265 = arith.constant 0 : index
      %c0_266 = arith.constant 0 : index
      %988 = vector.load %arg4[%c117, %c0_265, %c0_266] : memref<169x8x128xf32, #tpu.memory_space<vmem>>, vector<1x8x128xf32>
      %989 = vector.shape_cast %988 : vector<1x8x128xf32> to vector<8x128xf32>
      %990 = vector.shape_cast %989 : vector<8x128xf32> to vector<1x8x128xf32>
      %991 = vector.broadcast %990 : vector<1x8x128xf32> to vector<2x8x128xf32>
      %992 = arith.mulf %987, %991 : vector<2x8x128xf32>
      %993 = arith.addf %872, %992 : vector<2x8x128xf32>
      %994 = vector.extract_strided_slice %986 {offsets = [1, 0, 0], sizes = [2, 8, 128], strides = [1, 1, 1]} : vector<3x8x128xf32> to vector<2x8x128xf32>
      %c125 = arith.constant 125 : index
      %c0_267 = arith.constant 0 : index
      %c0_268 = arith.constant 0 : index
      %995 = vector.load %arg4[%c125, %c0_267, %c0_268] : memref<169x8x128xf32, #tpu.memory_space<vmem>>, vector<1x8x128xf32>
      %996 = vector.shape_cast %995 : vector<1x8x128xf32> to vector<8x128xf32>
      %997 = vector.shape_cast %996 : vector<8x128xf32> to vector<1x8x128xf32>
      %998 = vector.broadcast %997 : vector<1x8x128xf32> to vector<2x8x128xf32>
      %999 = arith.mulf %994, %998 : vector<2x8x128xf32>
      %1000 = arith.addf %993, %999 : vector<2x8x128xf32>
      %1001 = vector.extract_strided_slice %984 {offsets = [1, 0], sizes = [24, 128], strides = [1, 1]} : vector<28x128xf32> to vector<24x128xf32>
      %1002 = vector.shape_cast %1001 : vector<24x128xf32> to vector<3x8x128xf32>
      %1003 = vector.extract_strided_slice %1002 {offsets = [0, 0, 0], sizes = [2, 8, 128], strides = [1, 1, 1]} : vector<3x8x128xf32> to vector<2x8x128xf32>
      %c118 = arith.constant 118 : index
      %c0_269 = arith.constant 0 : index
      %c0_270 = arith.constant 0 : index
      %1004 = vector.load %arg4[%c118, %c0_269, %c0_270] : memref<169x8x128xf32, #tpu.memory_space<vmem>>, vector<1x8x128xf32>
      %1005 = vector.shape_cast %1004 : vector<1x8x128xf32> to vector<8x128xf32>
      %1006 = vector.shape_cast %1005 : vector<8x128xf32> to vector<1x8x128xf32>
      %1007 = vector.broadcast %1006 : vector<1x8x128xf32> to vector<2x8x128xf32>
      %1008 = arith.mulf %1003, %1007 : vector<2x8x128xf32>
      %1009 = arith.addf %1000, %1008 : vector<2x8x128xf32>
      %1010 = vector.extract_strided_slice %1002 {offsets = [1, 0, 0], sizes = [2, 8, 128], strides = [1, 1, 1]} : vector<3x8x128xf32> to vector<2x8x128xf32>
      %c126 = arith.constant 126 : index
      %c0_271 = arith.constant 0 : index
      %c0_272 = arith.constant 0 : index
      %1011 = vector.load %arg4[%c126, %c0_271, %c0_272] : memref<169x8x128xf32, #tpu.memory_space<vmem>>, vector<1x8x128xf32>
      %1012 = vector.shape_cast %1011 : vector<1x8x128xf32> to vector<8x128xf32>
      %1013 = vector.shape_cast %1012 : vector<8x128xf32> to vector<1x8x128xf32>
      %1014 = vector.broadcast %1013 : vector<1x8x128xf32> to vector<2x8x128xf32>
      %1015 = arith.mulf %1010, %1014 : vector<2x8x128xf32>
      %1016 = arith.addf %1009, %1015 : vector<2x8x128xf32>
      %1017 = vector.extract_strided_slice %984 {offsets = [2, 0], sizes = [24, 128], strides = [1, 1]} : vector<28x128xf32> to vector<24x128xf32>
      %1018 = vector.shape_cast %1017 : vector<24x128xf32> to vector<3x8x128xf32>
      %1019 = vector.extract_strided_slice %1018 {offsets = [0, 0, 0], sizes = [2, 8, 128], strides = [1, 1, 1]} : vector<3x8x128xf32> to vector<2x8x128xf32>
      %c119 = arith.constant 119 : index
      %c0_273 = arith.constant 0 : index
      %c0_274 = arith.constant 0 : index
      %1020 = vector.load %arg4[%c119, %c0_273, %c0_274] : memref<169x8x128xf32, #tpu.memory_space<vmem>>, vector<1x8x128xf32>
      %1021 = vector.shape_cast %1020 : vector<1x8x128xf32> to vector<8x128xf32>
      %1022 = vector.shape_cast %1021 : vector<8x128xf32> to vector<1x8x128xf32>
      %1023 = vector.broadcast %1022 : vector<1x8x128xf32> to vector<2x8x128xf32>
      %1024 = arith.mulf %1019, %1023 : vector<2x8x128xf32>
      %1025 = arith.addf %1016, %1024 : vector<2x8x128xf32>
      %1026 = vector.extract_strided_slice %1018 {offsets = [1, 0, 0], sizes = [2, 8, 128], strides = [1, 1, 1]} : vector<3x8x128xf32> to vector<2x8x128xf32>
      %c127 = arith.constant 127 : index
      %c0_275 = arith.constant 0 : index
      %c0_276 = arith.constant 0 : index
      %1027 = vector.load %arg4[%c127, %c0_275, %c0_276] : memref<169x8x128xf32, #tpu.memory_space<vmem>>, vector<1x8x128xf32>
      %1028 = vector.shape_cast %1027 : vector<1x8x128xf32> to vector<8x128xf32>
      %1029 = vector.shape_cast %1028 : vector<8x128xf32> to vector<1x8x128xf32>
      %1030 = vector.broadcast %1029 : vector<1x8x128xf32> to vector<2x8x128xf32>
      %1031 = arith.mulf %1026, %1030 : vector<2x8x128xf32>
      %1032 = arith.addf %1025, %1031 : vector<2x8x128xf32>
      %1033 = vector.extract_strided_slice %984 {offsets = [3, 0], sizes = [24, 128], strides = [1, 1]} : vector<28x128xf32> to vector<24x128xf32>
      %1034 = vector.shape_cast %1033 : vector<24x128xf32> to vector<3x8x128xf32>
      %1035 = vector.extract_strided_slice %1034 {offsets = [0, 0, 0], sizes = [2, 8, 128], strides = [1, 1, 1]} : vector<3x8x128xf32> to vector<2x8x128xf32>
      %c120 = arith.constant 120 : index
      %c0_277 = arith.constant 0 : index
      %c0_278 = arith.constant 0 : index
      %1036 = vector.load %arg4[%c120, %c0_277, %c0_278] : memref<169x8x128xf32, #tpu.memory_space<vmem>>, vector<1x8x128xf32>
      %1037 = vector.shape_cast %1036 : vector<1x8x128xf32> to vector<8x128xf32>
      %1038 = vector.shape_cast %1037 : vector<8x128xf32> to vector<1x8x128xf32>
      %1039 = vector.broadcast %1038 : vector<1x8x128xf32> to vector<2x8x128xf32>
      %1040 = arith.mulf %1035, %1039 : vector<2x8x128xf32>
      %1041 = arith.addf %1032, %1040 : vector<2x8x128xf32>
      %1042 = vector.extract_strided_slice %1034 {offsets = [1, 0, 0], sizes = [2, 8, 128], strides = [1, 1, 1]} : vector<3x8x128xf32> to vector<2x8x128xf32>
      %c128 = arith.constant 128 : index
      %c0_279 = arith.constant 0 : index
      %c0_280 = arith.constant 0 : index
      %1043 = vector.load %arg4[%c128, %c0_279, %c0_280] : memref<169x8x128xf32, #tpu.memory_space<vmem>>, vector<1x8x128xf32>
      %1044 = vector.shape_cast %1043 : vector<1x8x128xf32> to vector<8x128xf32>
      %1045 = vector.shape_cast %1044 : vector<8x128xf32> to vector<1x8x128xf32>
      %1046 = vector.broadcast %1045 : vector<1x8x128xf32> to vector<2x8x128xf32>
      %1047 = arith.mulf %1042, %1046 : vector<2x8x128xf32>
      %1048 = arith.addf %1041, %1047 : vector<2x8x128xf32>
      %1049 = vector.extract_strided_slice %984 {offsets = [4, 0], sizes = [24, 128], strides = [1, 1]} : vector<28x128xf32> to vector<24x128xf32>
      %1050 = vector.shape_cast %1049 : vector<24x128xf32> to vector<3x8x128xf32>
      %1051 = vector.extract_strided_slice %1050 {offsets = [0, 0, 0], sizes = [2, 8, 128], strides = [1, 1, 1]} : vector<3x8x128xf32> to vector<2x8x128xf32>
      %c121 = arith.constant 121 : index
      %c0_281 = arith.constant 0 : index
      %c0_282 = arith.constant 0 : index
      %1052 = vector.load %arg4[%c121, %c0_281, %c0_282] : memref<169x8x128xf32, #tpu.memory_space<vmem>>, vector<1x8x128xf32>
      %1053 = vector.shape_cast %1052 : vector<1x8x128xf32> to vector<8x128xf32>
      %1054 = vector.shape_cast %1053 : vector<8x128xf32> to vector<1x8x128xf32>
      %1055 = vector.broadcast %1054 : vector<1x8x128xf32> to vector<2x8x128xf32>
      %1056 = arith.mulf %1051, %1055 : vector<2x8x128xf32>
      %1057 = arith.addf %1048, %1056 : vector<2x8x128xf32>
      %1058 = vector.extract_strided_slice %1050 {offsets = [1, 0, 0], sizes = [2, 8, 128], strides = [1, 1, 1]} : vector<3x8x128xf32> to vector<2x8x128xf32>
      %c129 = arith.constant 129 : index
      %c0_283 = arith.constant 0 : index
      %c0_284 = arith.constant 0 : index
      %1059 = vector.load %arg4[%c129, %c0_283, %c0_284] : memref<169x8x128xf32, #tpu.memory_space<vmem>>, vector<1x8x128xf32>
      %1060 = vector.shape_cast %1059 : vector<1x8x128xf32> to vector<8x128xf32>
      %1061 = vector.shape_cast %1060 : vector<8x128xf32> to vector<1x8x128xf32>
      %1062 = vector.broadcast %1061 : vector<1x8x128xf32> to vector<2x8x128xf32>
      %1063 = arith.mulf %1058, %1062 : vector<2x8x128xf32>
      %1064 = arith.addf %1057, %1063 : vector<2x8x128xf32>
      %1065 = vector.extract_strided_slice %984 {offsets = [5, 0], sizes = [16, 128], strides = [1, 1]} : vector<28x128xf32> to vector<16x128xf32>
      %1066 = vector.shape_cast %1065 : vector<16x128xf32> to vector<2x8x128xf32>
      %c122 = arith.constant 122 : index
      %c0_285 = arith.constant 0 : index
      %c0_286 = arith.constant 0 : index
      %1067 = vector.load %arg4[%c122, %c0_285, %c0_286] : memref<169x8x128xf32, #tpu.memory_space<vmem>>, vector<1x8x128xf32>
      %1068 = vector.shape_cast %1067 : vector<1x8x128xf32> to vector<8x128xf32>
      %1069 = vector.shape_cast %1068 : vector<8x128xf32> to vector<1x8x128xf32>
      %1070 = vector.broadcast %1069 : vector<1x8x128xf32> to vector<2x8x128xf32>
      %1071 = arith.mulf %1066, %1070 : vector<2x8x128xf32>
      %1072 = arith.addf %1064, %1071 : vector<2x8x128xf32>
      %1073 = vector.extract_strided_slice %984 {offsets = [6, 0], sizes = [16, 128], strides = [1, 1]} : vector<28x128xf32> to vector<16x128xf32>
      %1074 = vector.shape_cast %1073 : vector<16x128xf32> to vector<2x8x128xf32>
      %c123 = arith.constant 123 : index
      %c0_287 = arith.constant 0 : index
      %c0_288 = arith.constant 0 : index
      %1075 = vector.load %arg4[%c123, %c0_287, %c0_288] : memref<169x8x128xf32, #tpu.memory_space<vmem>>, vector<1x8x128xf32>
      %1076 = vector.shape_cast %1075 : vector<1x8x128xf32> to vector<8x128xf32>
      %1077 = vector.shape_cast %1076 : vector<8x128xf32> to vector<1x8x128xf32>
      %1078 = vector.broadcast %1077 : vector<1x8x128xf32> to vector<2x8x128xf32>
      %1079 = arith.mulf %1074, %1078 : vector<2x8x128xf32>
      %1080 = arith.addf %1072, %1079 : vector<2x8x128xf32>
      %1081 = vector.extract_strided_slice %984 {offsets = [7, 0], sizes = [16, 128], strides = [1, 1]} : vector<28x128xf32> to vector<16x128xf32>
      %1082 = vector.shape_cast %1081 : vector<16x128xf32> to vector<2x8x128xf32>
      %c124 = arith.constant 124 : index
      %c0_289 = arith.constant 0 : index
      %c0_290 = arith.constant 0 : index
      %1083 = vector.load %arg4[%c124, %c0_289, %c0_290] : memref<169x8x128xf32, #tpu.memory_space<vmem>>, vector<1x8x128xf32>
      %1084 = vector.shape_cast %1083 : vector<1x8x128xf32> to vector<8x128xf32>
      %1085 = vector.shape_cast %1084 : vector<8x128xf32> to vector<1x8x128xf32>
      %1086 = vector.broadcast %1085 : vector<1x8x128xf32> to vector<2x8x128xf32>
      %1087 = arith.mulf %1082, %1086 : vector<2x8x128xf32>
      %1088 = arith.addf %1080, %1087 : vector<2x8x128xf32>
      %c10_i32 = arith.constant 10 : i32
      %1089 = arith.addi %arg9, %c10_i32 : i32
      %1090 = arith.index_cast %1089 : i32 to index
      %c0_291 = arith.constant 0 : index
      %c0_292 = arith.constant 0 : index
      %1091 = vector.load %arg7[%1090, %c0_291, %c0_292] : memref<28x28x128xf32, #tpu.memory_space<vmem>>, vector<1x28x128xf32>
      %1092 = vector.shape_cast %1091 : vector<1x28x128xf32> to vector<28x128xf32>
      %1093 = vector.extract_strided_slice %1092 {offsets = [0, 0], sizes = [24, 128], strides = [1, 1]} : vector<28x128xf32> to vector<24x128xf32>
      %1094 = vector.shape_cast %1093 : vector<24x128xf32> to vector<3x8x128xf32>
      %1095 = vector.extract_strided_slice %1094 {offsets = [0, 0, 0], sizes = [2, 8, 128], strides = [1, 1, 1]} : vector<3x8x128xf32> to vector<2x8x128xf32>
      %c130 = arith.constant 130 : index
      %c0_293 = arith.constant 0 : index
      %c0_294 = arith.constant 0 : index
      %1096 = vector.load %arg4[%c130, %c0_293, %c0_294] : memref<169x8x128xf32, #tpu.memory_space<vmem>>, vector<1x8x128xf32>
      %1097 = vector.shape_cast %1096 : vector<1x8x128xf32> to vector<8x128xf32>
      %1098 = vector.shape_cast %1097 : vector<8x128xf32> to vector<1x8x128xf32>
      %1099 = vector.broadcast %1098 : vector<1x8x128xf32> to vector<2x8x128xf32>
      %1100 = arith.mulf %1095, %1099 : vector<2x8x128xf32>
      %1101 = arith.addf %980, %1100 : vector<2x8x128xf32>
      %1102 = vector.extract_strided_slice %1094 {offsets = [1, 0, 0], sizes = [2, 8, 128], strides = [1, 1, 1]} : vector<3x8x128xf32> to vector<2x8x128xf32>
      %c138 = arith.constant 138 : index
      %c0_295 = arith.constant 0 : index
      %c0_296 = arith.constant 0 : index
      %1103 = vector.load %arg4[%c138, %c0_295, %c0_296] : memref<169x8x128xf32, #tpu.memory_space<vmem>>, vector<1x8x128xf32>
      %1104 = vector.shape_cast %1103 : vector<1x8x128xf32> to vector<8x128xf32>
      %1105 = vector.shape_cast %1104 : vector<8x128xf32> to vector<1x8x128xf32>
      %1106 = vector.broadcast %1105 : vector<1x8x128xf32> to vector<2x8x128xf32>
      %1107 = arith.mulf %1102, %1106 : vector<2x8x128xf32>
      %1108 = arith.addf %1101, %1107 : vector<2x8x128xf32>
      %1109 = vector.extract_strided_slice %1092 {offsets = [1, 0], sizes = [24, 128], strides = [1, 1]} : vector<28x128xf32> to vector<24x128xf32>
      %1110 = vector.shape_cast %1109 : vector<24x128xf32> to vector<3x8x128xf32>
      %1111 = vector.extract_strided_slice %1110 {offsets = [0, 0, 0], sizes = [2, 8, 128], strides = [1, 1, 1]} : vector<3x8x128xf32> to vector<2x8x128xf32>
      %c131 = arith.constant 131 : index
      %c0_297 = arith.constant 0 : index
      %c0_298 = arith.constant 0 : index
      %1112 = vector.load %arg4[%c131, %c0_297, %c0_298] : memref<169x8x128xf32, #tpu.memory_space<vmem>>, vector<1x8x128xf32>
      %1113 = vector.shape_cast %1112 : vector<1x8x128xf32> to vector<8x128xf32>
      %1114 = vector.shape_cast %1113 : vector<8x128xf32> to vector<1x8x128xf32>
      %1115 = vector.broadcast %1114 : vector<1x8x128xf32> to vector<2x8x128xf32>
      %1116 = arith.mulf %1111, %1115 : vector<2x8x128xf32>
      %1117 = arith.addf %1108, %1116 : vector<2x8x128xf32>
      %1118 = vector.extract_strided_slice %1110 {offsets = [1, 0, 0], sizes = [2, 8, 128], strides = [1, 1, 1]} : vector<3x8x128xf32> to vector<2x8x128xf32>
      %c139 = arith.constant 139 : index
      %c0_299 = arith.constant 0 : index
      %c0_300 = arith.constant 0 : index
      %1119 = vector.load %arg4[%c139, %c0_299, %c0_300] : memref<169x8x128xf32, #tpu.memory_space<vmem>>, vector<1x8x128xf32>
      %1120 = vector.shape_cast %1119 : vector<1x8x128xf32> to vector<8x128xf32>
      %1121 = vector.shape_cast %1120 : vector<8x128xf32> to vector<1x8x128xf32>
      %1122 = vector.broadcast %1121 : vector<1x8x128xf32> to vector<2x8x128xf32>
      %1123 = arith.mulf %1118, %1122 : vector<2x8x128xf32>
      %1124 = arith.addf %1117, %1123 : vector<2x8x128xf32>
      %1125 = vector.extract_strided_slice %1092 {offsets = [2, 0], sizes = [24, 128], strides = [1, 1]} : vector<28x128xf32> to vector<24x128xf32>
      %1126 = vector.shape_cast %1125 : vector<24x128xf32> to vector<3x8x128xf32>
      %1127 = vector.extract_strided_slice %1126 {offsets = [0, 0, 0], sizes = [2, 8, 128], strides = [1, 1, 1]} : vector<3x8x128xf32> to vector<2x8x128xf32>
      %c132 = arith.constant 132 : index
      %c0_301 = arith.constant 0 : index
      %c0_302 = arith.constant 0 : index
      %1128 = vector.load %arg4[%c132, %c0_301, %c0_302] : memref<169x8x128xf32, #tpu.memory_space<vmem>>, vector<1x8x128xf32>
      %1129 = vector.shape_cast %1128 : vector<1x8x128xf32> to vector<8x128xf32>
      %1130 = vector.shape_cast %1129 : vector<8x128xf32> to vector<1x8x128xf32>
      %1131 = vector.broadcast %1130 : vector<1x8x128xf32> to vector<2x8x128xf32>
      %1132 = arith.mulf %1127, %1131 : vector<2x8x128xf32>
      %1133 = arith.addf %1124, %1132 : vector<2x8x128xf32>
      %1134 = vector.extract_strided_slice %1126 {offsets = [1, 0, 0], sizes = [2, 8, 128], strides = [1, 1, 1]} : vector<3x8x128xf32> to vector<2x8x128xf32>
      %c140 = arith.constant 140 : index
      %c0_303 = arith.constant 0 : index
      %c0_304 = arith.constant 0 : index
      %1135 = vector.load %arg4[%c140, %c0_303, %c0_304] : memref<169x8x128xf32, #tpu.memory_space<vmem>>, vector<1x8x128xf32>
      %1136 = vector.shape_cast %1135 : vector<1x8x128xf32> to vector<8x128xf32>
      %1137 = vector.shape_cast %1136 : vector<8x128xf32> to vector<1x8x128xf32>
      %1138 = vector.broadcast %1137 : vector<1x8x128xf32> to vector<2x8x128xf32>
      %1139 = arith.mulf %1134, %1138 : vector<2x8x128xf32>
      %1140 = arith.addf %1133, %1139 : vector<2x8x128xf32>
      %1141 = vector.extract_strided_slice %1092 {offsets = [3, 0], sizes = [24, 128], strides = [1, 1]} : vector<28x128xf32> to vector<24x128xf32>
      %1142 = vector.shape_cast %1141 : vector<24x128xf32> to vector<3x8x128xf32>
      %1143 = vector.extract_strided_slice %1142 {offsets = [0, 0, 0], sizes = [2, 8, 128], strides = [1, 1, 1]} : vector<3x8x128xf32> to vector<2x8x128xf32>
      %c133 = arith.constant 133 : index
      %c0_305 = arith.constant 0 : index
      %c0_306 = arith.constant 0 : index
      %1144 = vector.load %arg4[%c133, %c0_305, %c0_306] : memref<169x8x128xf32, #tpu.memory_space<vmem>>, vector<1x8x128xf32>
      %1145 = vector.shape_cast %1144 : vector<1x8x128xf32> to vector<8x128xf32>
      %1146 = vector.shape_cast %1145 : vector<8x128xf32> to vector<1x8x128xf32>
      %1147 = vector.broadcast %1146 : vector<1x8x128xf32> to vector<2x8x128xf32>
      %1148 = arith.mulf %1143, %1147 : vector<2x8x128xf32>
      %1149 = arith.addf %1140, %1148 : vector<2x8x128xf32>
      %1150 = vector.extract_strided_slice %1142 {offsets = [1, 0, 0], sizes = [2, 8, 128], strides = [1, 1, 1]} : vector<3x8x128xf32> to vector<2x8x128xf32>
      %c141 = arith.constant 141 : index
      %c0_307 = arith.constant 0 : index
      %c0_308 = arith.constant 0 : index
      %1151 = vector.load %arg4[%c141, %c0_307, %c0_308] : memref<169x8x128xf32, #tpu.memory_space<vmem>>, vector<1x8x128xf32>
      %1152 = vector.shape_cast %1151 : vector<1x8x128xf32> to vector<8x128xf32>
      %1153 = vector.shape_cast %1152 : vector<8x128xf32> to vector<1x8x128xf32>
      %1154 = vector.broadcast %1153 : vector<1x8x128xf32> to vector<2x8x128xf32>
      %1155 = arith.mulf %1150, %1154 : vector<2x8x128xf32>
      %1156 = arith.addf %1149, %1155 : vector<2x8x128xf32>
      %1157 = vector.extract_strided_slice %1092 {offsets = [4, 0], sizes = [24, 128], strides = [1, 1]} : vector<28x128xf32> to vector<24x128xf32>
      %1158 = vector.shape_cast %1157 : vector<24x128xf32> to vector<3x8x128xf32>
      %1159 = vector.extract_strided_slice %1158 {offsets = [0, 0, 0], sizes = [2, 8, 128], strides = [1, 1, 1]} : vector<3x8x128xf32> to vector<2x8x128xf32>
      %c134 = arith.constant 134 : index
      %c0_309 = arith.constant 0 : index
      %c0_310 = arith.constant 0 : index
      %1160 = vector.load %arg4[%c134, %c0_309, %c0_310] : memref<169x8x128xf32, #tpu.memory_space<vmem>>, vector<1x8x128xf32>
      %1161 = vector.shape_cast %1160 : vector<1x8x128xf32> to vector<8x128xf32>
      %1162 = vector.shape_cast %1161 : vector<8x128xf32> to vector<1x8x128xf32>
      %1163 = vector.broadcast %1162 : vector<1x8x128xf32> to vector<2x8x128xf32>
      %1164 = arith.mulf %1159, %1163 : vector<2x8x128xf32>
      %1165 = arith.addf %1156, %1164 : vector<2x8x128xf32>
      %1166 = vector.extract_strided_slice %1158 {offsets = [1, 0, 0], sizes = [2, 8, 128], strides = [1, 1, 1]} : vector<3x8x128xf32> to vector<2x8x128xf32>
      %c142 = arith.constant 142 : index
      %c0_311 = arith.constant 0 : index
      %c0_312 = arith.constant 0 : index
      %1167 = vector.load %arg4[%c142, %c0_311, %c0_312] : memref<169x8x128xf32, #tpu.memory_space<vmem>>, vector<1x8x128xf32>
      %1168 = vector.shape_cast %1167 : vector<1x8x128xf32> to vector<8x128xf32>
      %1169 = vector.shape_cast %1168 : vector<8x128xf32> to vector<1x8x128xf32>
      %1170 = vector.broadcast %1169 : vector<1x8x128xf32> to vector<2x8x128xf32>
      %1171 = arith.mulf %1166, %1170 : vector<2x8x128xf32>
      %1172 = arith.addf %1165, %1171 : vector<2x8x128xf32>
      %1173 = vector.extract_strided_slice %1092 {offsets = [5, 0], sizes = [16, 128], strides = [1, 1]} : vector<28x128xf32> to vector<16x128xf32>
      %1174 = vector.shape_cast %1173 : vector<16x128xf32> to vector<2x8x128xf32>
      %c135 = arith.constant 135 : index
      %c0_313 = arith.constant 0 : index
      %c0_314 = arith.constant 0 : index
      %1175 = vector.load %arg4[%c135, %c0_313, %c0_314] : memref<169x8x128xf32, #tpu.memory_space<vmem>>, vector<1x8x128xf32>
      %1176 = vector.shape_cast %1175 : vector<1x8x128xf32> to vector<8x128xf32>
      %1177 = vector.shape_cast %1176 : vector<8x128xf32> to vector<1x8x128xf32>
      %1178 = vector.broadcast %1177 : vector<1x8x128xf32> to vector<2x8x128xf32>
      %1179 = arith.mulf %1174, %1178 : vector<2x8x128xf32>
      %1180 = arith.addf %1172, %1179 : vector<2x8x128xf32>
      %1181 = vector.extract_strided_slice %1092 {offsets = [6, 0], sizes = [16, 128], strides = [1, 1]} : vector<28x128xf32> to vector<16x128xf32>
      %1182 = vector.shape_cast %1181 : vector<16x128xf32> to vector<2x8x128xf32>
      %c136 = arith.constant 136 : index
      %c0_315 = arith.constant 0 : index
      %c0_316 = arith.constant 0 : index
      %1183 = vector.load %arg4[%c136, %c0_315, %c0_316] : memref<169x8x128xf32, #tpu.memory_space<vmem>>, vector<1x8x128xf32>
      %1184 = vector.shape_cast %1183 : vector<1x8x128xf32> to vector<8x128xf32>
      %1185 = vector.shape_cast %1184 : vector<8x128xf32> to vector<1x8x128xf32>
      %1186 = vector.broadcast %1185 : vector<1x8x128xf32> to vector<2x8x128xf32>
      %1187 = arith.mulf %1182, %1186 : vector<2x8x128xf32>
      %1188 = arith.addf %1180, %1187 : vector<2x8x128xf32>
      %1189 = vector.extract_strided_slice %1092 {offsets = [7, 0], sizes = [16, 128], strides = [1, 1]} : vector<28x128xf32> to vector<16x128xf32>
      %1190 = vector.shape_cast %1189 : vector<16x128xf32> to vector<2x8x128xf32>
      %c137 = arith.constant 137 : index
      %c0_317 = arith.constant 0 : index
      %c0_318 = arith.constant 0 : index
      %1191 = vector.load %arg4[%c137, %c0_317, %c0_318] : memref<169x8x128xf32, #tpu.memory_space<vmem>>, vector<1x8x128xf32>
      %1192 = vector.shape_cast %1191 : vector<1x8x128xf32> to vector<8x128xf32>
      %1193 = vector.shape_cast %1192 : vector<8x128xf32> to vector<1x8x128xf32>
      %1194 = vector.broadcast %1193 : vector<1x8x128xf32> to vector<2x8x128xf32>
      %1195 = arith.mulf %1190, %1194 : vector<2x8x128xf32>
      %1196 = arith.addf %1188, %1195 : vector<2x8x128xf32>
      %c11_i32 = arith.constant 11 : i32
      %1197 = arith.addi %arg9, %c11_i32 : i32
      %1198 = arith.index_cast %1197 : i32 to index
      %c0_319 = arith.constant 0 : index
      %c0_320 = arith.constant 0 : index
      %1199 = vector.load %arg7[%1198, %c0_319, %c0_320] : memref<28x28x128xf32, #tpu.memory_space<vmem>>, vector<1x28x128xf32>
      %1200 = vector.shape_cast %1199 : vector<1x28x128xf32> to vector<28x128xf32>
      %1201 = vector.extract_strided_slice %1200 {offsets = [0, 0], sizes = [24, 128], strides = [1, 1]} : vector<28x128xf32> to vector<24x128xf32>
      %1202 = vector.shape_cast %1201 : vector<24x128xf32> to vector<3x8x128xf32>
      %1203 = vector.extract_strided_slice %1202 {offsets = [0, 0, 0], sizes = [2, 8, 128], strides = [1, 1, 1]} : vector<3x8x128xf32> to vector<2x8x128xf32>
      %c143 = arith.constant 143 : index
      %c0_321 = arith.constant 0 : index
      %c0_322 = arith.constant 0 : index
      %1204 = vector.load %arg4[%c143, %c0_321, %c0_322] : memref<169x8x128xf32, #tpu.memory_space<vmem>>, vector<1x8x128xf32>
      %1205 = vector.shape_cast %1204 : vector<1x8x128xf32> to vector<8x128xf32>
      %1206 = vector.shape_cast %1205 : vector<8x128xf32> to vector<1x8x128xf32>
      %1207 = vector.broadcast %1206 : vector<1x8x128xf32> to vector<2x8x128xf32>
      %1208 = arith.mulf %1203, %1207 : vector<2x8x128xf32>
      %1209 = arith.addf %1088, %1208 : vector<2x8x128xf32>
      %1210 = vector.extract_strided_slice %1202 {offsets = [1, 0, 0], sizes = [2, 8, 128], strides = [1, 1, 1]} : vector<3x8x128xf32> to vector<2x8x128xf32>
      %c151 = arith.constant 151 : index
      %c0_323 = arith.constant 0 : index
      %c0_324 = arith.constant 0 : index
      %1211 = vector.load %arg4[%c151, %c0_323, %c0_324] : memref<169x8x128xf32, #tpu.memory_space<vmem>>, vector<1x8x128xf32>
      %1212 = vector.shape_cast %1211 : vector<1x8x128xf32> to vector<8x128xf32>
      %1213 = vector.shape_cast %1212 : vector<8x128xf32> to vector<1x8x128xf32>
      %1214 = vector.broadcast %1213 : vector<1x8x128xf32> to vector<2x8x128xf32>
      %1215 = arith.mulf %1210, %1214 : vector<2x8x128xf32>
      %1216 = arith.addf %1209, %1215 : vector<2x8x128xf32>
      %1217 = vector.extract_strided_slice %1200 {offsets = [1, 0], sizes = [24, 128], strides = [1, 1]} : vector<28x128xf32> to vector<24x128xf32>
      %1218 = vector.shape_cast %1217 : vector<24x128xf32> to vector<3x8x128xf32>
      %1219 = vector.extract_strided_slice %1218 {offsets = [0, 0, 0], sizes = [2, 8, 128], strides = [1, 1, 1]} : vector<3x8x128xf32> to vector<2x8x128xf32>
      %c144 = arith.constant 144 : index
      %c0_325 = arith.constant 0 : index
      %c0_326 = arith.constant 0 : index
      %1220 = vector.load %arg4[%c144, %c0_325, %c0_326] : memref<169x8x128xf32, #tpu.memory_space<vmem>>, vector<1x8x128xf32>
      %1221 = vector.shape_cast %1220 : vector<1x8x128xf32> to vector<8x128xf32>
      %1222 = vector.shape_cast %1221 : vector<8x128xf32> to vector<1x8x128xf32>
      %1223 = vector.broadcast %1222 : vector<1x8x128xf32> to vector<2x8x128xf32>
      %1224 = arith.mulf %1219, %1223 : vector<2x8x128xf32>
      %1225 = arith.addf %1216, %1224 : vector<2x8x128xf32>
      %1226 = vector.extract_strided_slice %1218 {offsets = [1, 0, 0], sizes = [2, 8, 128], strides = [1, 1, 1]} : vector<3x8x128xf32> to vector<2x8x128xf32>
      %c152 = arith.constant 152 : index
      %c0_327 = arith.constant 0 : index
      %c0_328 = arith.constant 0 : index
      %1227 = vector.load %arg4[%c152, %c0_327, %c0_328] : memref<169x8x128xf32, #tpu.memory_space<vmem>>, vector<1x8x128xf32>
      %1228 = vector.shape_cast %1227 : vector<1x8x128xf32> to vector<8x128xf32>
      %1229 = vector.shape_cast %1228 : vector<8x128xf32> to vector<1x8x128xf32>
      %1230 = vector.broadcast %1229 : vector<1x8x128xf32> to vector<2x8x128xf32>
      %1231 = arith.mulf %1226, %1230 : vector<2x8x128xf32>
      %1232 = arith.addf %1225, %1231 : vector<2x8x128xf32>
      %1233 = vector.extract_strided_slice %1200 {offsets = [2, 0], sizes = [24, 128], strides = [1, 1]} : vector<28x128xf32> to vector<24x128xf32>
      %1234 = vector.shape_cast %1233 : vector<24x128xf32> to vector<3x8x128xf32>
      %1235 = vector.extract_strided_slice %1234 {offsets = [0, 0, 0], sizes = [2, 8, 128], strides = [1, 1, 1]} : vector<3x8x128xf32> to vector<2x8x128xf32>
      %c145 = arith.constant 145 : index
      %c0_329 = arith.constant 0 : index
      %c0_330 = arith.constant 0 : index
      %1236 = vector.load %arg4[%c145, %c0_329, %c0_330] : memref<169x8x128xf32, #tpu.memory_space<vmem>>, vector<1x8x128xf32>
      %1237 = vector.shape_cast %1236 : vector<1x8x128xf32> to vector<8x128xf32>
      %1238 = vector.shape_cast %1237 : vector<8x128xf32> to vector<1x8x128xf32>
      %1239 = vector.broadcast %1238 : vector<1x8x128xf32> to vector<2x8x128xf32>
      %1240 = arith.mulf %1235, %1239 : vector<2x8x128xf32>
      %1241 = arith.addf %1232, %1240 : vector<2x8x128xf32>
      %1242 = vector.extract_strided_slice %1234 {offsets = [1, 0, 0], sizes = [2, 8, 128], strides = [1, 1, 1]} : vector<3x8x128xf32> to vector<2x8x128xf32>
      %c153 = arith.constant 153 : index
      %c0_331 = arith.constant 0 : index
      %c0_332 = arith.constant 0 : index
      %1243 = vector.load %arg4[%c153, %c0_331, %c0_332] : memref<169x8x128xf32, #tpu.memory_space<vmem>>, vector<1x8x128xf32>
      %1244 = vector.shape_cast %1243 : vector<1x8x128xf32> to vector<8x128xf32>
      %1245 = vector.shape_cast %1244 : vector<8x128xf32> to vector<1x8x128xf32>
      %1246 = vector.broadcast %1245 : vector<1x8x128xf32> to vector<2x8x128xf32>
      %1247 = arith.mulf %1242, %1246 : vector<2x8x128xf32>
      %1248 = arith.addf %1241, %1247 : vector<2x8x128xf32>
      %1249 = vector.extract_strided_slice %1200 {offsets = [3, 0], sizes = [24, 128], strides = [1, 1]} : vector<28x128xf32> to vector<24x128xf32>
      %1250 = vector.shape_cast %1249 : vector<24x128xf32> to vector<3x8x128xf32>
      %1251 = vector.extract_strided_slice %1250 {offsets = [0, 0, 0], sizes = [2, 8, 128], strides = [1, 1, 1]} : vector<3x8x128xf32> to vector<2x8x128xf32>
      %c146 = arith.constant 146 : index
      %c0_333 = arith.constant 0 : index
      %c0_334 = arith.constant 0 : index
      %1252 = vector.load %arg4[%c146, %c0_333, %c0_334] : memref<169x8x128xf32, #tpu.memory_space<vmem>>, vector<1x8x128xf32>
      %1253 = vector.shape_cast %1252 : vector<1x8x128xf32> to vector<8x128xf32>
      %1254 = vector.shape_cast %1253 : vector<8x128xf32> to vector<1x8x128xf32>
      %1255 = vector.broadcast %1254 : vector<1x8x128xf32> to vector<2x8x128xf32>
      %1256 = arith.mulf %1251, %1255 : vector<2x8x128xf32>
      %1257 = arith.addf %1248, %1256 : vector<2x8x128xf32>
      %1258 = vector.extract_strided_slice %1250 {offsets = [1, 0, 0], sizes = [2, 8, 128], strides = [1, 1, 1]} : vector<3x8x128xf32> to vector<2x8x128xf32>
      %c154 = arith.constant 154 : index
      %c0_335 = arith.constant 0 : index
      %c0_336 = arith.constant 0 : index
      %1259 = vector.load %arg4[%c154, %c0_335, %c0_336] : memref<169x8x128xf32, #tpu.memory_space<vmem>>, vector<1x8x128xf32>
      %1260 = vector.shape_cast %1259 : vector<1x8x128xf32> to vector<8x128xf32>
      %1261 = vector.shape_cast %1260 : vector<8x128xf32> to vector<1x8x128xf32>
      %1262 = vector.broadcast %1261 : vector<1x8x128xf32> to vector<2x8x128xf32>
      %1263 = arith.mulf %1258, %1262 : vector<2x8x128xf32>
      %1264 = arith.addf %1257, %1263 : vector<2x8x128xf32>
      %1265 = vector.extract_strided_slice %1200 {offsets = [4, 0], sizes = [24, 128], strides = [1, 1]} : vector<28x128xf32> to vector<24x128xf32>
      %1266 = vector.shape_cast %1265 : vector<24x128xf32> to vector<3x8x128xf32>
      %1267 = vector.extract_strided_slice %1266 {offsets = [0, 0, 0], sizes = [2, 8, 128], strides = [1, 1, 1]} : vector<3x8x128xf32> to vector<2x8x128xf32>
      %c147 = arith.constant 147 : index
      %c0_337 = arith.constant 0 : index
      %c0_338 = arith.constant 0 : index
      %1268 = vector.load %arg4[%c147, %c0_337, %c0_338] : memref<169x8x128xf32, #tpu.memory_space<vmem>>, vector<1x8x128xf32>
      %1269 = vector.shape_cast %1268 : vector<1x8x128xf32> to vector<8x128xf32>
      %1270 = vector.shape_cast %1269 : vector<8x128xf32> to vector<1x8x128xf32>
      %1271 = vector.broadcast %1270 : vector<1x8x128xf32> to vector<2x8x128xf32>
      %1272 = arith.mulf %1267, %1271 : vector<2x8x128xf32>
      %1273 = arith.addf %1264, %1272 : vector<2x8x128xf32>
      %1274 = vector.extract_strided_slice %1266 {offsets = [1, 0, 0], sizes = [2, 8, 128], strides = [1, 1, 1]} : vector<3x8x128xf32> to vector<2x8x128xf32>
      %c155 = arith.constant 155 : index
      %c0_339 = arith.constant 0 : index
      %c0_340 = arith.constant 0 : index
      %1275 = vector.load %arg4[%c155, %c0_339, %c0_340] : memref<169x8x128xf32, #tpu.memory_space<vmem>>, vector<1x8x128xf32>
      %1276 = vector.shape_cast %1275 : vector<1x8x128xf32> to vector<8x128xf32>
      %1277 = vector.shape_cast %1276 : vector<8x128xf32> to vector<1x8x128xf32>
      %1278 = vector.broadcast %1277 : vector<1x8x128xf32> to vector<2x8x128xf32>
      %1279 = arith.mulf %1274, %1278 : vector<2x8x128xf32>
      %1280 = arith.addf %1273, %1279 : vector<2x8x128xf32>
      %1281 = vector.extract_strided_slice %1200 {offsets = [5, 0], sizes = [16, 128], strides = [1, 1]} : vector<28x128xf32> to vector<16x128xf32>
      %1282 = vector.shape_cast %1281 : vector<16x128xf32> to vector<2x8x128xf32>
      %c148 = arith.constant 148 : index
      %c0_341 = arith.constant 0 : index
      %c0_342 = arith.constant 0 : index
      %1283 = vector.load %arg4[%c148, %c0_341, %c0_342] : memref<169x8x128xf32, #tpu.memory_space<vmem>>, vector<1x8x128xf32>
      %1284 = vector.shape_cast %1283 : vector<1x8x128xf32> to vector<8x128xf32>
      %1285 = vector.shape_cast %1284 : vector<8x128xf32> to vector<1x8x128xf32>
      %1286 = vector.broadcast %1285 : vector<1x8x128xf32> to vector<2x8x128xf32>
      %1287 = arith.mulf %1282, %1286 : vector<2x8x128xf32>
      %1288 = arith.addf %1280, %1287 : vector<2x8x128xf32>
      %1289 = vector.extract_strided_slice %1200 {offsets = [6, 0], sizes = [16, 128], strides = [1, 1]} : vector<28x128xf32> to vector<16x128xf32>
      %1290 = vector.shape_cast %1289 : vector<16x128xf32> to vector<2x8x128xf32>
      %c149 = arith.constant 149 : index
      %c0_343 = arith.constant 0 : index
      %c0_344 = arith.constant 0 : index
      %1291 = vector.load %arg4[%c149, %c0_343, %c0_344] : memref<169x8x128xf32, #tpu.memory_space<vmem>>, vector<1x8x128xf32>
      %1292 = vector.shape_cast %1291 : vector<1x8x128xf32> to vector<8x128xf32>
      %1293 = vector.shape_cast %1292 : vector<8x128xf32> to vector<1x8x128xf32>
      %1294 = vector.broadcast %1293 : vector<1x8x128xf32> to vector<2x8x128xf32>
      %1295 = arith.mulf %1290, %1294 : vector<2x8x128xf32>
      %1296 = arith.addf %1288, %1295 : vector<2x8x128xf32>
      %1297 = vector.extract_strided_slice %1200 {offsets = [7, 0], sizes = [16, 128], strides = [1, 1]} : vector<28x128xf32> to vector<16x128xf32>
      %1298 = vector.shape_cast %1297 : vector<16x128xf32> to vector<2x8x128xf32>
      %c150 = arith.constant 150 : index
      %c0_345 = arith.constant 0 : index
      %c0_346 = arith.constant 0 : index
      %1299 = vector.load %arg4[%c150, %c0_345, %c0_346] : memref<169x8x128xf32, #tpu.memory_space<vmem>>, vector<1x8x128xf32>
      %1300 = vector.shape_cast %1299 : vector<1x8x128xf32> to vector<8x128xf32>
      %1301 = vector.shape_cast %1300 : vector<8x128xf32> to vector<1x8x128xf32>
      %1302 = vector.broadcast %1301 : vector<1x8x128xf32> to vector<2x8x128xf32>
      %1303 = arith.mulf %1298, %1302 : vector<2x8x128xf32>
      %1304 = arith.addf %1296, %1303 : vector<2x8x128xf32>
      %c12_i32 = arith.constant 12 : i32
      %1305 = arith.addi %arg9, %c12_i32 : i32
      %1306 = arith.index_cast %1305 : i32 to index
      %c0_347 = arith.constant 0 : index
      %c0_348 = arith.constant 0 : index
      %1307 = vector.load %arg7[%1306, %c0_347, %c0_348] : memref<28x28x128xf32, #tpu.memory_space<vmem>>, vector<1x28x128xf32>
      %1308 = vector.shape_cast %1307 : vector<1x28x128xf32> to vector<28x128xf32>
      %1309 = vector.extract_strided_slice %1308 {offsets = [0, 0], sizes = [24, 128], strides = [1, 1]} : vector<28x128xf32> to vector<24x128xf32>
      %1310 = vector.shape_cast %1309 : vector<24x128xf32> to vector<3x8x128xf32>
      %1311 = vector.extract_strided_slice %1310 {offsets = [0, 0, 0], sizes = [2, 8, 128], strides = [1, 1, 1]} : vector<3x8x128xf32> to vector<2x8x128xf32>
      %c156 = arith.constant 156 : index
      %c0_349 = arith.constant 0 : index
      %c0_350 = arith.constant 0 : index
      %1312 = vector.load %arg4[%c156, %c0_349, %c0_350] : memref<169x8x128xf32, #tpu.memory_space<vmem>>, vector<1x8x128xf32>
      %1313 = vector.shape_cast %1312 : vector<1x8x128xf32> to vector<8x128xf32>
      %1314 = vector.shape_cast %1313 : vector<8x128xf32> to vector<1x8x128xf32>
      %1315 = vector.broadcast %1314 : vector<1x8x128xf32> to vector<2x8x128xf32>
      %1316 = arith.mulf %1311, %1315 : vector<2x8x128xf32>
      %1317 = arith.addf %1196, %1316 : vector<2x8x128xf32>
      %1318 = vector.extract_strided_slice %1310 {offsets = [1, 0, 0], sizes = [2, 8, 128], strides = [1, 1, 1]} : vector<3x8x128xf32> to vector<2x8x128xf32>
      %c164 = arith.constant 164 : index
      %c0_351 = arith.constant 0 : index
      %c0_352 = arith.constant 0 : index
      %1319 = vector.load %arg4[%c164, %c0_351, %c0_352] : memref<169x8x128xf32, #tpu.memory_space<vmem>>, vector<1x8x128xf32>
      %1320 = vector.shape_cast %1319 : vector<1x8x128xf32> to vector<8x128xf32>
      %1321 = vector.shape_cast %1320 : vector<8x128xf32> to vector<1x8x128xf32>
      %1322 = vector.broadcast %1321 : vector<1x8x128xf32> to vector<2x8x128xf32>
      %1323 = arith.mulf %1318, %1322 : vector<2x8x128xf32>
      %1324 = arith.addf %1317, %1323 : vector<2x8x128xf32>
      %1325 = vector.extract_strided_slice %1308 {offsets = [1, 0], sizes = [24, 128], strides = [1, 1]} : vector<28x128xf32> to vector<24x128xf32>
      %1326 = vector.shape_cast %1325 : vector<24x128xf32> to vector<3x8x128xf32>
      %1327 = vector.extract_strided_slice %1326 {offsets = [0, 0, 0], sizes = [2, 8, 128], strides = [1, 1, 1]} : vector<3x8x128xf32> to vector<2x8x128xf32>
      %c157 = arith.constant 157 : index
      %c0_353 = arith.constant 0 : index
      %c0_354 = arith.constant 0 : index
      %1328 = vector.load %arg4[%c157, %c0_353, %c0_354] : memref<169x8x128xf32, #tpu.memory_space<vmem>>, vector<1x8x128xf32>
      %1329 = vector.shape_cast %1328 : vector<1x8x128xf32> to vector<8x128xf32>
      %1330 = vector.shape_cast %1329 : vector<8x128xf32> to vector<1x8x128xf32>
      %1331 = vector.broadcast %1330 : vector<1x8x128xf32> to vector<2x8x128xf32>
      %1332 = arith.mulf %1327, %1331 : vector<2x8x128xf32>
      %1333 = arith.addf %1324, %1332 : vector<2x8x128xf32>
      %1334 = vector.extract_strided_slice %1326 {offsets = [1, 0, 0], sizes = [2, 8, 128], strides = [1, 1, 1]} : vector<3x8x128xf32> to vector<2x8x128xf32>
      %c165 = arith.constant 165 : index
      %c0_355 = arith.constant 0 : index
      %c0_356 = arith.constant 0 : index
      %1335 = vector.load %arg4[%c165, %c0_355, %c0_356] : memref<169x8x128xf32, #tpu.memory_space<vmem>>, vector<1x8x128xf32>
      %1336 = vector.shape_cast %1335 : vector<1x8x128xf32> to vector<8x128xf32>
      %1337 = vector.shape_cast %1336 : vector<8x128xf32> to vector<1x8x128xf32>
      %1338 = vector.broadcast %1337 : vector<1x8x128xf32> to vector<2x8x128xf32>
      %1339 = arith.mulf %1334, %1338 : vector<2x8x128xf32>
      %1340 = arith.addf %1333, %1339 : vector<2x8x128xf32>
      %1341 = vector.extract_strided_slice %1308 {offsets = [2, 0], sizes = [24, 128], strides = [1, 1]} : vector<28x128xf32> to vector<24x128xf32>
      %1342 = vector.shape_cast %1341 : vector<24x128xf32> to vector<3x8x128xf32>
      %1343 = vector.extract_strided_slice %1342 {offsets = [0, 0, 0], sizes = [2, 8, 128], strides = [1, 1, 1]} : vector<3x8x128xf32> to vector<2x8x128xf32>
      %c158 = arith.constant 158 : index
      %c0_357 = arith.constant 0 : index
      %c0_358 = arith.constant 0 : index
      %1344 = vector.load %arg4[%c158, %c0_357, %c0_358] : memref<169x8x128xf32, #tpu.memory_space<vmem>>, vector<1x8x128xf32>
      %1345 = vector.shape_cast %1344 : vector<1x8x128xf32> to vector<8x128xf32>
      %1346 = vector.shape_cast %1345 : vector<8x128xf32> to vector<1x8x128xf32>
      %1347 = vector.broadcast %1346 : vector<1x8x128xf32> to vector<2x8x128xf32>
      %1348 = arith.mulf %1343, %1347 : vector<2x8x128xf32>
      %1349 = arith.addf %1340, %1348 : vector<2x8x128xf32>
      %1350 = vector.extract_strided_slice %1342 {offsets = [1, 0, 0], sizes = [2, 8, 128], strides = [1, 1, 1]} : vector<3x8x128xf32> to vector<2x8x128xf32>
      %c166 = arith.constant 166 : index
      %c0_359 = arith.constant 0 : index
      %c0_360 = arith.constant 0 : index
      %1351 = vector.load %arg4[%c166, %c0_359, %c0_360] : memref<169x8x128xf32, #tpu.memory_space<vmem>>, vector<1x8x128xf32>
      %1352 = vector.shape_cast %1351 : vector<1x8x128xf32> to vector<8x128xf32>
      %1353 = vector.shape_cast %1352 : vector<8x128xf32> to vector<1x8x128xf32>
      %1354 = vector.broadcast %1353 : vector<1x8x128xf32> to vector<2x8x128xf32>
      %1355 = arith.mulf %1350, %1354 : vector<2x8x128xf32>
      %1356 = arith.addf %1349, %1355 : vector<2x8x128xf32>
      %1357 = vector.extract_strided_slice %1308 {offsets = [3, 0], sizes = [24, 128], strides = [1, 1]} : vector<28x128xf32> to vector<24x128xf32>
      %1358 = vector.shape_cast %1357 : vector<24x128xf32> to vector<3x8x128xf32>
      %1359 = vector.extract_strided_slice %1358 {offsets = [0, 0, 0], sizes = [2, 8, 128], strides = [1, 1, 1]} : vector<3x8x128xf32> to vector<2x8x128xf32>
      %c159 = arith.constant 159 : index
      %c0_361 = arith.constant 0 : index
      %c0_362 = arith.constant 0 : index
      %1360 = vector.load %arg4[%c159, %c0_361, %c0_362] : memref<169x8x128xf32, #tpu.memory_space<vmem>>, vector<1x8x128xf32>
      %1361 = vector.shape_cast %1360 : vector<1x8x128xf32> to vector<8x128xf32>
      %1362 = vector.shape_cast %1361 : vector<8x128xf32> to vector<1x8x128xf32>
      %1363 = vector.broadcast %1362 : vector<1x8x128xf32> to vector<2x8x128xf32>
      %1364 = arith.mulf %1359, %1363 : vector<2x8x128xf32>
      %1365 = arith.addf %1356, %1364 : vector<2x8x128xf32>
      %1366 = vector.extract_strided_slice %1358 {offsets = [1, 0, 0], sizes = [2, 8, 128], strides = [1, 1, 1]} : vector<3x8x128xf32> to vector<2x8x128xf32>
      %c167 = arith.constant 167 : index
      %c0_363 = arith.constant 0 : index
      %c0_364 = arith.constant 0 : index
      %1367 = vector.load %arg4[%c167, %c0_363, %c0_364] : memref<169x8x128xf32, #tpu.memory_space<vmem>>, vector<1x8x128xf32>
      %1368 = vector.shape_cast %1367 : vector<1x8x128xf32> to vector<8x128xf32>
      %1369 = vector.shape_cast %1368 : vector<8x128xf32> to vector<1x8x128xf32>
      %1370 = vector.broadcast %1369 : vector<1x8x128xf32> to vector<2x8x128xf32>
      %1371 = arith.mulf %1366, %1370 : vector<2x8x128xf32>
      %1372 = arith.addf %1365, %1371 : vector<2x8x128xf32>
      %1373 = vector.extract_strided_slice %1308 {offsets = [4, 0], sizes = [24, 128], strides = [1, 1]} : vector<28x128xf32> to vector<24x128xf32>
      %1374 = vector.shape_cast %1373 : vector<24x128xf32> to vector<3x8x128xf32>
      %1375 = vector.extract_strided_slice %1374 {offsets = [0, 0, 0], sizes = [2, 8, 128], strides = [1, 1, 1]} : vector<3x8x128xf32> to vector<2x8x128xf32>
      %c160 = arith.constant 160 : index
      %c0_365 = arith.constant 0 : index
      %c0_366 = arith.constant 0 : index
      %1376 = vector.load %arg4[%c160, %c0_365, %c0_366] : memref<169x8x128xf32, #tpu.memory_space<vmem>>, vector<1x8x128xf32>
      %1377 = vector.shape_cast %1376 : vector<1x8x128xf32> to vector<8x128xf32>
      %1378 = vector.shape_cast %1377 : vector<8x128xf32> to vector<1x8x128xf32>
      %1379 = vector.broadcast %1378 : vector<1x8x128xf32> to vector<2x8x128xf32>
      %1380 = arith.mulf %1375, %1379 : vector<2x8x128xf32>
      %1381 = arith.addf %1372, %1380 : vector<2x8x128xf32>
      %1382 = vector.extract_strided_slice %1374 {offsets = [1, 0, 0], sizes = [2, 8, 128], strides = [1, 1, 1]} : vector<3x8x128xf32> to vector<2x8x128xf32>
      %c168 = arith.constant 168 : index
      %c0_367 = arith.constant 0 : index
      %c0_368 = arith.constant 0 : index
      %1383 = vector.load %arg4[%c168, %c0_367, %c0_368] : memref<169x8x128xf32, #tpu.memory_space<vmem>>, vector<1x8x128xf32>
      %1384 = vector.shape_cast %1383 : vector<1x8x128xf32> to vector<8x128xf32>
      %1385 = vector.shape_cast %1384 : vector<8x128xf32> to vector<1x8x128xf32>
      %1386 = vector.broadcast %1385 : vector<1x8x128xf32> to vector<2x8x128xf32>
      %1387 = arith.mulf %1382, %1386 : vector<2x8x128xf32>
      %1388 = arith.addf %1381, %1387 : vector<2x8x128xf32>
      %1389 = vector.extract_strided_slice %1308 {offsets = [5, 0], sizes = [16, 128], strides = [1, 1]} : vector<28x128xf32> to vector<16x128xf32>
      %1390 = vector.shape_cast %1389 : vector<16x128xf32> to vector<2x8x128xf32>
      %c161 = arith.constant 161 : index
      %c0_369 = arith.constant 0 : index
      %c0_370 = arith.constant 0 : index
      %1391 = vector.load %arg4[%c161, %c0_369, %c0_370] : memref<169x8x128xf32, #tpu.memory_space<vmem>>, vector<1x8x128xf32>
      %1392 = vector.shape_cast %1391 : vector<1x8x128xf32> to vector<8x128xf32>
      %1393 = vector.shape_cast %1392 : vector<8x128xf32> to vector<1x8x128xf32>
      %1394 = vector.broadcast %1393 : vector<1x8x128xf32> to vector<2x8x128xf32>
      %1395 = arith.mulf %1390, %1394 : vector<2x8x128xf32>
      %1396 = arith.addf %1388, %1395 : vector<2x8x128xf32>
      %1397 = vector.extract_strided_slice %1308 {offsets = [6, 0], sizes = [16, 128], strides = [1, 1]} : vector<28x128xf32> to vector<16x128xf32>
      %1398 = vector.shape_cast %1397 : vector<16x128xf32> to vector<2x8x128xf32>
      %c162 = arith.constant 162 : index
      %c0_371 = arith.constant 0 : index
      %c0_372 = arith.constant 0 : index
      %1399 = vector.load %arg4[%c162, %c0_371, %c0_372] : memref<169x8x128xf32, #tpu.memory_space<vmem>>, vector<1x8x128xf32>
      %1400 = vector.shape_cast %1399 : vector<1x8x128xf32> to vector<8x128xf32>
      %1401 = vector.shape_cast %1400 : vector<8x128xf32> to vector<1x8x128xf32>
      %1402 = vector.broadcast %1401 : vector<1x8x128xf32> to vector<2x8x128xf32>
      %1403 = arith.mulf %1398, %1402 : vector<2x8x128xf32>
      %1404 = arith.addf %1396, %1403 : vector<2x8x128xf32>
      %1405 = vector.extract_strided_slice %1308 {offsets = [7, 0], sizes = [16, 128], strides = [1, 1]} : vector<28x128xf32> to vector<16x128xf32>
      %1406 = vector.shape_cast %1405 : vector<16x128xf32> to vector<2x8x128xf32>
      %c163 = arith.constant 163 : index
      %c0_373 = arith.constant 0 : index
      %c0_374 = arith.constant 0 : index
      %1407 = vector.load %arg4[%c163, %c0_373, %c0_374] : memref<169x8x128xf32, #tpu.memory_space<vmem>>, vector<1x8x128xf32>
      %1408 = vector.shape_cast %1407 : vector<1x8x128xf32> to vector<8x128xf32>
      %1409 = vector.shape_cast %1408 : vector<8x128xf32> to vector<1x8x128xf32>
      %1410 = vector.broadcast %1409 : vector<1x8x128xf32> to vector<2x8x128xf32>
      %1411 = arith.mulf %1406, %1410 : vector<2x8x128xf32>
      %1412 = arith.addf %1404, %1411 : vector<2x8x128xf32>
      %1413 = arith.addf %1412, %1304 : vector<2x8x128xf32>
      %1414 = vector.shape_cast %3 : vector<8x128xf32> to vector<1x8x128xf32>
      %1415 = vector.broadcast %1414 : vector<1x8x128xf32> to vector<2x8x128xf32>
      %1416 = arith.addf %1413, %1415 : vector<2x8x128xf32>
      %1417 = vector.shape_cast %1416 : vector<2x8x128xf32> to vector<16x128xf32>
      %c0_375 = arith.constant 0 : index
      %1418 = arith.index_cast %arg9 : i32 to index
      %c0_376 = arith.constant 0 : index
      %c0_377 = arith.constant 0 : index
      %1419 = vector.load %arg6[%c0_375, %1418, %c0_376, %c0_377] : memref<1x16x16x128xf32, #tpu.memory_space<vmem>>, vector<1x1x16x128xf32>
      %1420 = vector.shape_cast %1419 : vector<1x1x16x128xf32> to vector<16x128xf32>
      %1421 = vector.shape_cast %1417 : vector<16x128xf32> to vector<1x1x16x128xf32>
      tpu.vector_store %arg6[%c0_375, %1418, %c0_376, %c0_377], %1421 {strides = array<i32>} : memref<1x16x16x128xf32, #tpu.memory_space<vmem>>, vector<1x1x16x128xf32>,
    }
    %c16_i32_6 = arith.constant 16 : i32
    return
  }
  func.func @transform_1(%arg0: i32, %arg1: i32, %arg2: i32) -> (i32, i32, i32) {
    %c0_i32 = arith.constant 0 : i32
    %c0_i32_0 = arith.constant 0 : i32
    %c0_i32_1 = arith.constant 0 : i32
    return %c0_i32, %c0_i32_0, %arg1 : i32, i32, i32
  }
  func.func @transform_2(%arg0: i32, %arg1: i32, %arg2: i32) -> (i32, i32) {
    %c0_i32 = arith.constant 0 : i32
    %c0_i32_0 = arith.constant 0 : i32
    return %c0_i32, %arg1 : i32, i32
  }
  func.func @transform_3(%arg0: i32, %arg1: i32, %arg2: i32) -> (i32, i32, i32, i32) {
    %c0_i32 = arith.constant 0 : i32
    %c0_i32_0 = arith.constant 0 : i32
    return %arg0, %arg2, %c0_i32, %arg1 : i32, i32, i32, i32
  }
}

</mosaic_0001>

<llo_original>
// kernel: tile.14
$region0: #{tile.14}
  #allocation0 [shape = 's32[1]{0}', space=sflag, size = 0x4, scoped, tag = 'scoped memory for tile.14']
  %s0 = inlined_call_operand.vmem [shape: f32[8], index: 0, kind: input, shape index: {}]
  %s1 = inlined_call_operand.vmem [shape: f32[2,8], index: 1, kind: output, shape index: {}]
  // Predicated region
  $region2: #{tile.14} parent=0 // pred_check
    _
  $region3: #{tile.14} parent=0 // pred_check_branch
    %3 = sbr.rel (0) target = $region5
  $region4: #{tile.14} parent=0 // pred_region
    _
  $region5: #{tile.14} parent=0 // pred_fallthru
    _
  %v4 = vld [vmem:[%s0] ss:$0 sm:$0xff]
  %5 = vst [vmem:[%s1] sm:$0x3] %v4

// kernel: tile.15
$region0: #{tile.15}
  %s0 = inlined_call_operand.vmem [shape: f32[2,8], index: 0, kind: input, shape index: {}]
  %s1 = inlined_call_operand.vmem [shape: f32[16], index: 1, kind: output, shape index: {}]
  $region1: #{tile.15} parent=0
    #allocation0 [shape = 'u8[4096]{0}', space=vmem, size = 0x1000, scoped, tag = 'scoped mem for output reshape']
    #allocation1 [shape = 'u8[4096]{0}', space=vmem, size = 0x1000, scoped, tag = 'scoped mem for input reshape']
    %s3 = ssub.s32 4, 1
    %v4 = vld [vmem:[%s0] sm:%s3]
    %5 = vst [vmem:[#allocation1] sm:%s3] %v4
    %v6 = vld [vmem:[#allocation1] sm:$0x1]
    %vm7 = vcmask 64512
    %8 = vst.msk [vmem:[#allocation0] sm:$0x1] %vm7, %v6
    %s9 = scalar_lea.vmem [#allocation1], 1
    %v10 = vld [vmem:[%s9] sm:$0x1]
    %11 = vrot.lane.b32.xlu0 %v10, 8
    %v12 = vpop.permute.xlu0 %11
    %vm13 = vcmask 130112
    %14 = vst.msk [vmem:[#allocation0] sm:$0x1] %vm13, %v12
    %s16 = ssub.s32 2, 1
    %v17 = vld [vmem:[#allocation0] sm:%s16]
    %s19 = ssub.s32 2, 1
    %20 = vst [vmem:[%s1] sm:%s19] %v17

// kernel: _lambda_.1
$region0: #{_lambda_.1}
  #allocation0 [shape = 'u32[]', space=smem, size = 0x4, offset = 0x4, fixed_abs, tag = 'smem constant byte address 0x4 - core index']
  #allocation1 [shape = 'u32[72,128]{1,0:T(1,128)}', space=vmem, size = 0x9000, scoped, tag = 'internal scratch']
  #allocation2 [shape = 'f32[28,28,128]{2,1,0:T(8,128)}', space=vmem, size = 0x70000, scoped, tag = 'scratch operand']
  #allocation3 [shape = 's32[1]{0}', space=sflag, size = 0x4, scoped, tag = 'scratch operand']
  #allocation4 [shape = 's32[]', space=sflag, size = 0x4, offset = 0, fixed_abs, tag = 'sflag constant byte address 0x0 - dummy sync flag']
  %s0 = inlined_call_operand.vmem [shape: f32[1,1,28,28,128], index: 0, kind: input, shape index: {}]
  %s1 = inlined_call_operand.vmem [shape: f32[169,8,128], index: 1, kind: input, shape index: {}]
  %s2 = inlined_call_operand.vmem [shape: f32[8,128], index: 2, kind: input, shape index: {}]
  %s3 = inlined_call_operand.vmem [shape: f32[1,16,16,128], index: 3, kind: output, shape index: {}]
  %s4 = sld [smem:[#allocation0]]
  $region47: #{_lambda_.1} parent=0
    _
  %s6 = ssub.s32 1, %s4
  %s7 = scalar_select 0, %s6, %s4
  // Predicated region
  $region2: #{_lambda_.1} parent=0 // pred_check
    _
  $region3: #{_lambda_.1} parent=0 // pred_check_branch
    %9 = sbr.rel (0) target = $region5
  $region4: #{_lambda_.1} parent=0 // pred_region
    _
  $region5: #{_lambda_.1} parent=0 // pred_fallthru
    _
  // Predicated region
  $region6: #{_lambda_.1} parent=0 // pred_check
    _
  $region7: #{_lambda_.1} parent=0 // pred_check_branch
    %11 = sbr.rel (0) target = $region9
  $region8: #{_lambda_.1} parent=0 // pred_region
    _
  $region9: #{_lambda_.1} parent=0 // pred_fallthru
    _
  %s12 = smul.u32 0, 16
  %s13 = smul.u32 %s12, 32
  %s14 = smul.u32 0, 896
  %s15 = sadd.s32 %s13, %s14
  %s16 = smul.u32 0, 896
  %s17 = sadd.s32 %s15, %s16
  %s18 = scalar_lea.vmem %s0, %s17
  // Predicated region
  $region10: #{_lambda_.1} parent=0 // pred_check
    _
  $region11: #{_lambda_.1} parent=0 // pred_check_branch
    %20 = sbr.rel (0) target = $region13
  $region12: #{_lambda_.1} parent=0 // pred_region
    %s21 = scalar_lea.vmem %s18, 24
    %s22 = scalar_lea.vmem [#allocation2], 24
    loop: start=0, step=1, limit=1
    $region14: #{_lambda_.1} parent=12 // loop_pre_header
      _
    $region15: #{_lambda_.1} parent=12 // loop_header
      %s24 = sphi 0, %s28
      %p25 = scmp.ge.s32.totalorder %s24, 1
      %s29 = sphi %s18, %s18
      %s30 = sphi [#allocation2], [#allocation2]
    $region16: #{_lambda_.1} parent=12 // loop_header_branch
      %27 = sbr.rel (%p25) target = $region20
    $region17: #{_lambda_.1} parent=12 // loop_body
      %v31 = vld [vmem:[%s29] sm:$0xff]
      %32 = vst [vmem:[%s30] sm:$0xff] %v31
      %v33 = vld [vmem:[%s29 + $0x8] sm:$0xff]
      %34 = vst [vmem:[%s30 + $0x8] sm:$0xff] %v33
      %v35 = vld [vmem:[%s29 + $0x10] sm:$0xff]
      %36 = vst [vmem:[%s30 + $0x10] sm:$0xff] %v35
      %v37 = vld [vmem:[%s29 + $0x20] sm:$0xff]
      %38 = vst [vmem:[%s30 + $0x20] sm:$0xff] %v37
      %v39 = vld [vmem:[%s29 + $0x28] sm:$0xff]
      %40 = vst [vmem:[%s30 + $0x28] sm:$0xff] %v39
      %v41 = vld [vmem:[%s29 + $0x30] sm:$0xff]
      %42 = vst [vmem:[%s30 + $0x30] sm:$0xff] %v41
      %v43 = vld [vmem:[%s29 + $0x40] sm:$0xff]
      %44 = vst [vmem:[%s30 + $0x40] sm:$0xff] %v43
      %v45 = vld [vmem:[%s29 + $0x48] sm:$0xff]
      %46 = vst [vmem:[%s30 + $0x48] sm:$0xff] %v45
      %v47 = vld [vmem:[%s29 + $0x50] sm:$0xff]
      %48 = vst [vmem:[%s30 + $0x50] sm:$0xff] %v47
      %v49 = vld [vmem:[%s29 + $0x60] sm:$0xff]
      %50 = vst [vmem:[%s30 + $0x60] sm:$0xff] %v49
      %v51 = vld [vmem:[%s29 + $0x68] sm:$0xff]
      %52 = vst [vmem:[%s30 + $0x68] sm:$0xff] %v51
      %v53 = vld [vmem:[%s29 + $0x70] sm:$0xff]
      %54 = vst [vmem:[%s30 + $0x70] sm:$0xff] %v53
      %v55 = vld [vmem:[%s29 + $0x80] sm:$0xff]
      %56 = vst [vmem:[%s30 + $0x80] sm:$0xff] %v55
      %v57 = vld [vmem:[%s29 + $0x88] sm:$0xff]
      %58 = vst [vmem:[%s30 + $0x88] sm:$0xff] %v57
      %v59 = vld [vmem:[%s29 + $0x90] sm:$0xff]
      %60 = vst [vmem:[%s30 + $0x90] sm:$0xff] %v59
      %v61 = vld [vmem:[%s29 + $0xa0] sm:$0xff]
      %62 = vst [vmem:[%s30 + $0xa0] sm:$0xff] %v61
      %v63 = vld [vmem:[%s29 + $0xa8] sm:$0xff]
      %64 = vst [vmem:[%s30 + $0xa8] sm:$0xff] %v63
      %v65 = vld [vmem:[%s29 + $0xb0] sm:$0xff]
      %66 = vst [vmem:[%s30 + $0xb0] sm:$0xff] %v65
      %v67 = vld [vmem:[%s29 + $0xc0] sm:$0xff]
      %68 = vst [vmem:[%s30 + $0xc0] sm:$0xff] %v67
      %v69 = vld [vmem:[%s29 + $0xc8] sm:$0xff]
      %70 = vst [vmem:[%s30 + $0xc8] sm:$0xff] %v69
      %v71 = vld [vmem:[%s29 + $0xd0] sm:$0xff]
      %72 = vst [vmem:[%s30 + $0xd0] sm:$0xff] %v71
      %v73 = vld [vmem:[%s29 + $0xe0] sm:$0xff]
      %74 = vst [vmem:[%s30 + $0xe0] sm:$0xff] %v73
      %v75 = vld [vmem:[%s29 + $0xe8] sm:$0xff]
      %76 = vst [vmem:[%s30 + $0xe8] sm:$0xff] %v75
      %v77 = vld [vmem:[%s29 + $0xf0] sm:$0xff]
      %78 = vst [vmem:[%s30 + $0xf0] sm:$0xff] %v77
      %v79 = vld [vmem:[%s29 + $0x100] sm:$0xff]
      %80 = vst [vmem:[%s30 + $0x100] sm:$0xff] %v79
      %v81 = vld [vmem:[%s29 + $0x108] sm:$0xff]
      %82 = vst [vmem:[%s30 + $0x108] sm:$0xff] %v81
      %v83 = vld [vmem:[%s29 + $0x110] sm:$0xff]
      %84 = vst [vmem:[%s30 + $0x110] sm:$0xff] %v83
      %v85 = vld [vmem:[%s29 + $0x120] sm:$0xff]
      %86 = vst [vmem:[%s30 + $0x120] sm:$0xff] %v85
      %v87 = vld [vmem:[%s29 + $0x128] sm:$0xff]
      %88 = vst [vmem:[%s30 + $0x128] sm:$0xff] %v87
      %v89 = vld [vmem:[%s29 + $0x130] sm:$0xff]
      %90 = vst [vmem:[%s30 + $0x130] sm:$0xff] %v89
      %v91 = vld [vmem:[%s29 + $0x140] sm:$0xff]
      %92 = vst [vmem:[%s30 + $0x140] sm:$0xff] %v91
      %v93 = vld [vmem:[%s29 + $0x148] sm:$0xff]
      %94 = vst [vmem:[%s30 + $0x148] sm:$0xff] %v93
      %v95 = vld [vmem:[%s29 + $0x150] sm:$0xff]
      %96 = vst [vmem:[%s30 + $0x150] sm:$0xff] %v95
      %v97 = vld [vmem:[%s29 + $0x160] sm:$0xff]
      %98 = vst [vmem:[%s30 + $0x160] sm:$0xff] %v97
      %v99 = vld [vmem:[%s29 + $0x168] sm:$0xff]
      %100 = vst [vmem:[%s30 + $0x168] sm:$0xff] %v99
      %v101 = vld [vmem:[%s29 + $0x170] sm:$0xff]
      %102 = vst [vmem:[%s30 + $0x170] sm:$0xff] %v101
      %v103 = vld [vmem:[%s29 + $0x180] sm:$0xff]
      %104 = vst [vmem:[%s30 + $0x180] sm:$0xff] %v103
      %v105 = vld [vmem:[%s29 + $0x188] sm:$0xff]
      %106 = vst [vmem:[%s30 + $0x188] sm:$0xff] %v105
      %v107 = vld [vmem:[%s29 + $0x190] sm:$0xff]
      %108 = vst [vmem:[%s30 + $0x190] sm:$0xff] %v107
      %v109 = vld [vmem:[%s29 + $0x1a0] sm:$0xff]
      %110 = vst [vmem:[%s30 + $0x1a0] sm:$0xff] %v109
      %v111 = vld [vmem:[%s29 + $0x1a8] sm:$0xff]
      %112 = vst [vmem:[%s30 + $0x1a8] sm:$0xff] %v111
      %v113 = vld [vmem:[%s29 + $0x1b0] sm:$0xff]
      %114 = vst [vmem:[%s30 + $0x1b0] sm:$0xff] %v113
      %v115 = vld [vmem:[%s29 + $0x1c0] sm:$0xff]
      %116 = vst [vmem:[%s30 + $0x1c0] sm:$0xff] %v115
      %v117 = vld [vmem:[%s29 + $0x1c8] sm:$0xff]
      %118 = vst [vmem:[%s30 + $0x1c8] sm:$0xff] %v117
      %v119 = vld [vmem:[%s29 + $0x1d0] sm:$0xff]
      %120 = vst [vmem:[%s30 + $0x1d0] sm:$0xff] %v119
      %v121 = vld [vmem:[%s29 + $0x1e0] sm:$0xff]
      %122 = vst [vmem:[%s30 + $0x1e0] sm:$0xff] %v121
      %v123 = vld [vmem:[%s29 + $0x1e8] sm:$0xff]
      %124 = vst [vmem:[%s30 + $0x1e8] sm:$0xff] %v123
      %v125 = vld [vmem:[%s29 + $0x1f0] sm:$0xff]
      %126 = vst [vmem:[%s30 + $0x1f0] sm:$0xff] %v125
      %v127 = vld [vmem:[%s29 + $0x200] sm:$0xff]
      %128 = vst [vmem:[%s30 + $0x200] sm:$0xff] %v127
      %v129 = vld [vmem:[%s29 + $0x208] sm:$0xff]
      %130 = vst [vmem:[%s30 + $0x208] sm:$0xff] %v129
      %v131 = vld [vmem:[%s29 + $0x210] sm:$0xff]
      %132 = vst [vmem:[%s30 + $0x210] sm:$0xff] %v131
      %v133 = vld [vmem:[%s29 + $0x220] sm:$0xff]
      %134 = vst [vmem:[%s30 + $0x220] sm:$0xff] %v133
      %v135 = vld [vmem:[%s29 + $0x228] sm:$0xff]
      %136 = vst [vmem:[%s30 + $0x228] sm:$0xff] %v135
      %v137 = vld [vmem:[%s29 + $0x230] sm:$0xff]
      %138 = vst [vmem:[%s30 + $0x230] sm:$0xff] %v137
      %v139 = vld [vmem:[%s29 + $0x240] sm:$0xff]
      %140 = vst [vmem:[%s30 + $0x240] sm:$0xff] %v139
      %v141 = vld [vmem:[%s29 + $0x248] sm:$0xff]
      %142 = vst [vmem:[%s30 + $0x248] sm:$0xff] %v141
      %v143 = vld [vmem:[%s29 + $0x250] sm:$0xff]
      %144 = vst [vmem:[%s30 + $0x250] sm:$0xff] %v143
      %v145 = vld [vmem:[%s29 + $0x260] sm:$0xff]
      %146 = vst [vmem:[%s30 + $0x260] sm:$0xff] %v145
      %v147 = vld [vmem:[%s29 + $0x268] sm:$0xff]
      %148 = vst [vmem:[%s30 + $0x268] sm:$0xff] %v147
      %v149 = vld [vmem:[%s29 + $0x270] sm:$0xff]
      %150 = vst [vmem:[%s30 + $0x270] sm:$0xff] %v149
      %v151 = vld [vmem:[%s29 + $0x280] sm:$0xff]
      %152 = vst [vmem:[%s30 + $0x280] sm:$0xff] %v151
      %v153 = vld [vmem:[%s29 + $0x288] sm:$0xff]
      %154 = vst [vmem:[%s30 + $0x288] sm:$0xff] %v153
      %v155 = vld [vmem:[%s29 + $0x290] sm:$0xff]
      %156 = vst [vmem:[%s30 + $0x290] sm:$0xff] %v155
      %v157 = vld [vmem:[%s29 + $0x2a0] sm:$0xff]
      %158 = vst [vmem:[%s30 + $0x2a0] sm:$0xff] %v157
      %v159 = vld [vmem:[%s29 + $0x2a8] sm:$0xff]
      %160 = vst [vmem:[%s30 + $0x2a8] sm:$0xff] %v159
      %v161 = vld [vmem:[%s29 + $0x2b0] sm:$0xff]
      %162 = vst [vmem:[%s30 + $0x2b0] sm:$0xff] %v161
      %v163 = vld [vmem:[%s29 + $0x2c0] sm:$0xff]
      %164 = vst [vmem:[%s30 + $0x2c0] sm:$0xff] %v163
      %v165 = vld [vmem:[%s29 + $0x2c8] sm:$0xff]
      %166 = vst [vmem:[%s30 + $0x2c8] sm:$0xff] %v165
      %v167 = vld [vmem:[%s29 + $0x2d0] sm:$0xff]
      %168 = vst [vmem:[%s30 + $0x2d0] sm:$0xff] %v167
      %v169 = vld [vmem:[%s29 + $0x2e0] sm:$0xff]
      %170 = vst [vmem:[%s30 + $0x2e0] sm:$0xff] %v169
      %v171 = vld [vmem:[%s29 + $0x2e8] sm:$0xff]
      %172 = vst [vmem:[%s30 + $0x2e8] sm:$0xff] %v171
      %v173 = vld [vmem:[%s29 + $0x2f0] sm:$0xff]
      %174 = vst [vmem:[%s30 + $0x2f0] sm:$0xff] %v173
      %v175 = vld [vmem:[%s29 + $0x300] sm:$0xff]
      %176 = vst [vmem:[%s30 + $0x300] sm:$0xff] %v175
      %v177 = vld [vmem:[%s29 + $0x308] sm:$0xff]
      %178 = vst [vmem:[%s30 + $0x308] sm:$0xff] %v177
      %v179 = vld [vmem:[%s29 + $0x310] sm:$0xff]
      %180 = vst [vmem:[%s30 + $0x310] sm:$0xff] %v179
      %v181 = vld [vmem:[%s29 + $0x320] sm:$0xff]
      %182 = vst [vmem:[%s30 + $0x320] sm:$0xff] %v181
      %v183 = vld [vmem:[%s29 + $0x328] sm:$0xff]
      %184 = vst [vmem:[%s30 + $0x328] sm:$0xff] %v183
      %v185 = vld [vmem:[%s29 + $0x330] sm:$0xff]
      %186 = vst [vmem:[%s30 + $0x330] sm:$0xff] %v185
      %v187 = vld [vmem:[%s29 + $0x340] sm:$0xff]
      %188 = vst [vmem:[%s30 + $0x340] sm:$0xff] %v187
      %v189 = vld [vmem:[%s29 + $0x348] sm:$0xff]
      %190 = vst [vmem:[%s30 + $0x348] sm:$0xff] %v189
      %v191 = vld [vmem:[%s29 + $0x350] sm:$0xff]
      %192 = vst [vmem:[%s30 + $0x350] sm:$0xff] %v191
      %v193 = vld [vmem:[%s29 + $0x360] sm:$0xff]
      %194 = vst [vmem:[%s30 + $0x360] sm:$0xff] %v193
      %v195 = vld [vmem:[%s29 + $0x368] sm:$0xff]
      %196 = vst [vmem:[%s30 + $0x368] sm:$0xff] %v195
      %v197 = vld [vmem:[%s29 + $0x370] sm:$0xff]
      %198 = vst [vmem:[%s30 + $0x370] sm:$0xff] %v197
    $region18: #{_lambda_.1} parent=12 // loop_footer
      %s28 = sadd.s32 1, %s24
    $region19: #{_lambda_.1} parent=12 // loop_footer_branch
      %23 = sbr.rel target = $region15
    $region20: #{_lambda_.1} parent=12 // loop_exit
      _
    %s200 = ssub.s32 16, 1
    loop: start=0, step=1, limit=1
    $region21: #{_lambda_.1} parent=12 // loop_pre_header
      _
    $region22: #{_lambda_.1} parent=12 // loop_header
      %s202 = sphi 0, %s206
      %p203 = scmp.ge.s32.totalorder %s202, 1
      %s207 = sphi %s21, %s21
      %s208 = sphi %s22, %s22
    $region23: #{_lambda_.1} parent=12 // loop_header_branch
      %205 = sbr.rel (%p203) target = $region27
    $region24: #{_lambda_.1} parent=12 // loop_body
      %v209 = vld [vmem:[%s207] sm:%s200]
      %210 = vst [vmem:[%s208] sm:%s200] %v209
      %v211 = vld [vmem:[%s207 + $0x20] sm:%s200]
      %212 = vst [vmem:[%s208 + $0x20] sm:%s200] %v211
      %v213 = vld [vmem:[%s207 + $0x40] sm:%s200]
      %214 = vst [vmem:[%s208 + $0x40] sm:%s200] %v213
      %v215 = vld [vmem:[%s207 + $0x60] sm:%s200]
      %216 = vst [vmem:[%s208 + $0x60] sm:%s200] %v215
      %v217 = vld [vmem:[%s207 + $0x80] sm:%s200]
      %218 = vst [vmem:[%s208 + $0x80] sm:%s200] %v217
      %v219 = vld [vmem:[%s207 + $0xa0] sm:%s200]
      %220 = vst [vmem:[%s208 + $0xa0] sm:%s200] %v219
      %v221 = vld [vmem:[%s207 + $0xc0] sm:%s200]
      %222 = vst [vmem:[%s208 + $0xc0] sm:%s200] %v221
      %v223 = vld [vmem:[%s207 + $0xe0] sm:%s200]
      %224 = vst [vmem:[%s208 + $0xe0] sm:%s200] %v223
      %v225 = vld [vmem:[%s207 + $0x100] sm:%s200]
      %226 = vst [vmem:[%s208 + $0x100] sm:%s200] %v225
      %v227 = vld [vmem:[%s207 + $0x120] sm:%s200]
      %228 = vst [vmem:[%s208 + $0x120] sm:%s200] %v227
      %v229 = vld [vmem:[%s207 + $0x140] sm:%s200]
      %230 = vst [vmem:[%s208 + $0x140] sm:%s200] %v229
      %v231 = vld [vmem:[%s207 + $0x160] sm:%s200]
      %232 = vst [vmem:[%s208 + $0x160] sm:%s200] %v231
      %v233 = vld [vmem:[%s207 + $0x180] sm:%s200]
      %234 = vst [vmem:[%s208 + $0x180] sm:%s200] %v233
      %v235 = vld [vmem:[%s207 + $0x1a0] sm:%s200]
      %236 = vst [vmem:[%s208 + $0x1a0] sm:%s200] %v235
      %v237 = vld [vmem:[%s207 + $0x1c0] sm:%s200]
      %238 = vst [vmem:[%s208 + $0x1c0] sm:%s200] %v237
      %v239 = vld [vmem:[%s207 + $0x1e0] sm:%s200]
      %240 = vst [vmem:[%s208 + $0x1e0] sm:%s200] %v239
      %v241 = vld [vmem:[%s207 + $0x200] sm:%s200]
      %242 = vst [vmem:[%s208 + $0x200] sm:%s200] %v241
      %v243 = vld [vmem:[%s207 + $0x220] sm:%s200]
      %244 = vst [vmem:[%s208 + $0x220] sm:%s200] %v243
      %v245 = vld [vmem:[%s207 + $0x240] sm:%s200]
      %246 = vst [vmem:[%s208 + $0x240] sm:%s200] %v245
      %v247 = vld [vmem:[%s207 + $0x260] sm:%s200]
      %248 = vst [vmem:[%s208 + $0x260] sm:%s200] %v247
      %v249 = vld [vmem:[%s207 + $0x280] sm:%s200]
      %250 = vst [vmem:[%s208 + $0x280] sm:%s200] %v249
      %v251 = vld [vmem:[%s207 + $0x2a0] sm:%s200]
      %252 = vst [vmem:[%s208 + $0x2a0] sm:%s200] %v251
      %v253 = vld [vmem:[%s207 + $0x2c0] sm:%s200]
      %254 = vst [vmem:[%s208 + $0x2c0] sm:%s200] %v253
      %v255 = vld [vmem:[%s207 + $0x2e0] sm:%s200]
      %256 = vst [vmem:[%s208 + $0x2e0] sm:%s200] %v255
      %v257 = vld [vmem:[%s207 + $0x300] sm:%s200]
      %258 = vst [vmem:[%s208 + $0x300] sm:%s200] %v257
      %v259 = vld [vmem:[%s207 + $0x320] sm:%s200]
      %260 = vst [vmem:[%s208 + $0x320] sm:%s200] %v259
      %v261 = vld [vmem:[%s207 + $0x340] sm:%s200]
      %262 = vst [vmem:[%s208 + $0x340] sm:%s200] %v261
      %v263 = vld [vmem:[%s207 + $0x360] sm:%s200]
      %264 = vst [vmem:[%s208 + $0x360] sm:%s200] %v263
    $region25: #{_lambda_.1} parent=12 // loop_footer
      %s206 = sadd.s32 1, %s202
    $region26: #{_lambda_.1} parent=12 // loop_footer_branch
      %201 = sbr.rel target = $region22
    $region27: #{_lambda_.1} parent=12 // loop_exit
      _
  $region13: #{_lambda_.1} parent=0 // pred_fallthru
    _
  // Predicated region
  $region28: #{_lambda_.1} parent=0 // pred_check
    _
  $region29: #{_lambda_.1} parent=0 // pred_check_branch
    %267 = sbr.rel (0) target = $region31
  $region30: #{_lambda_.1} parent=0 // pred_region
    %268 = vsyncadd [#allocation3], 12544
  $region31: #{_lambda_.1} parent=0 // pred_fallthru
    _
  %v269 = vld [vmem:[%s2] sm:$0xff]
  %s270 = smul.u32 28, 28
  %s271 = smul.u32 %s270, 1
  %s272 = sshll.u32 %s271, 4
  %273 = dma.done [#allocation3], %s272
  loop: start=0, step=1, limit=16
  $region32: #{_lambda_.1} parent=0 // loop_pre_header
    _
  $region33: #{_lambda_.1} parent=0 // loop_header
    %s275 = sphi 0, %s279
    %p276 = scmp.ge.s32.totalorder %s275, 16
  $region34: #{_lambda_.1} parent=0 // loop_header_branch
    %278 = sbr.rel (%p276) target = $region38
  $region35: #{_lambda_.1} parent=0 // loop_body
    %s280 = smul.u32 %s275, 32
    %s281 = scalar_lea.vmem [#allocation2], %s280
    %v282 = vld [vmem:[%s281] sm:$0xff]
    %v283 = vld [vmem:[%s281 + $0x8] sm:$0xff]
    %v284 = vld [vmem:[%s281 + $0x10] sm:$0xff]
    %v285 = vld [vmem:[%s281 + $0x18] sm:$0xf]
    %v286 = vld [vmem:[%s1] sm:$0xff]
    %v287 = vmul.f32 %v282, %v286
    %v288 = vmul.f32 %v283, %v286
    %v289 = vadd.f32 %v287, 0.0
    %v290 = vadd.f32 %v288, 0.0
    %s291 = scalar_lea.vmem %s1, 64
    %v292 = vld [vmem:[%s291] sm:$0xff]
    %v293 = vmul.f32 %v283, %v292
    %v294 = vmul.f32 %v284, %v292
    %v295 = vadd.f32 %v289, %v293
    %v296 = vadd.f32 %v290, %v294
    %vm301 = vcmask 1046528
    %v302 = vrot.slane %v282, 1
    %v303 = vrot.slane %v283, 1
    %v304 = vsel %vm301, %v302, %v303
    %v305 = vrot.slane %v284, 1
    %v306 = vsel %vm301, %v303, %v305
    %v307 = vrot.slane %v285, 1
    %v308 = vsel %vm301, %v305, %v307
    %s312 = scalar_lea.vmem %s1, 8
    %v313 = vld [vmem:[%s312] sm:$0xff]
    %v314 = vmul.f32 %v304, %v313
    %v315 = vmul.f32 %v306, %v313
    %v316 = vadd.f32 %v295, %v314
    %v317 = vadd.f32 %v296, %v315
    %s318 = scalar_lea.vmem %s1, 72
    %v319 = vld [vmem:[%s318] sm:$0xff]
    %v320 = vmul.f32 %v306, %v319
    %v321 = vmul.f32 %v308, %v319
    %v322 = vadd.f32 %v316, %v320
    %v323 = vadd.f32 %v317, %v321
    %vm324 = vcmask 1045504
    %v325 = vrot.slane %v282, 2
    %v326 = vrot.slane %v283, 2
    %v327 = vsel %vm324, %v325, %v326
    %v328 = vrot.slane %v284, 2
    %v329 = vsel %vm324, %v326, %v328
    %v330 = vrot.slane %v285, 2
    %v331 = vsel %vm324, %v328, %v330
    %s335 = scalar_lea.vmem %s1, 16
    %v336 = vld [vmem:[%s335] sm:$0xff]
    %v337 = vmul.f32 %v327, %v336
    %v338 = vmul.f32 %v329, %v336
    %v339 = vadd.f32 %v322, %v337
    %v340 = vadd.f32 %v323, %v338
    %s341 = scalar_lea.vmem %s1, 80
    %v342 = vld [vmem:[%s341] sm:$0xff]
    %v343 = vmul.f32 %v329, %v342
    %v344 = vmul.f32 %v331, %v342
    %v345 = vadd.f32 %v339, %v343
    %v346 = vadd.f32 %v340, %v344
    %vm347 = vcmask 1044480
    %v348 = vrot.slane %v282, 3
    %v349 = vrot.slane %v283, 3
    %v350 = vsel %vm347, %v348, %v349
    %v351 = vrot.slane %v284, 3
    %v352 = vsel %vm347, %v349, %v351
    %v353 = vrot.slane %v285, 3
    %v354 = vsel %vm347, %v351, %v353
    %s358 = scalar_lea.vmem %s1, 24
    %v359 = vld [vmem:[%s358] sm:$0xff]
    %v360 = vmul.f32 %v350, %v359
    %v361 = vmul.f32 %v352, %v359
    %v362 = vadd.f32 %v345, %v360
    %v363 = vadd.f32 %v346, %v361
    %s364 = scalar_lea.vmem %s1, 88
    %v365 = vld [vmem:[%s364] sm:$0xff]
    %v366 = vmul.f32 %v352, %v365
    %v367 = vmul.f32 %v354, %v365
    %v368 = vadd.f32 %v362, %v366
    %v369 = vadd.f32 %v363, %v367
    %vm370 = vcmask 1043456
    %v371 = vrot.slane %v282, 4
    %v372 = vrot.slane %v283, 4
    %v373 = vsel %vm370, %v371, %v372
    %v374 = vrot.slane %v284, 4
    %v375 = vsel %vm370, %v372, %v374
    %v376 = vrot.slane %v285, 4
    %v377 = vsel %vm370, %v374, %v376
    %s381 = scalar_lea.vmem %s1, 32
    %v382 = vld [vmem:[%s381] sm:$0xff]
    %v383 = vmul.f32 %v373, %v382
    %v384 = vmul.f32 %v375, %v382
    %v385 = vadd.f32 %v368, %v383
    %v386 = vadd.f32 %v369, %v384
    %s387 = scalar_lea.vmem %s1, 96
    %v388 = vld [vmem:[%s387] sm:$0xff]
    %v389 = vmul.f32 %v375, %v388
    %v390 = vmul.f32 %v377, %v388
    %v391 = vadd.f32 %v385, %v389
    %v392 = vadd.f32 %v386, %v390
    %vm393 = vcmask 1042432
    %v394 = vrot.slane %v282, 5
    %v395 = vrot.slane %v283, 5
    %v396 = vsel %vm393, %v394, %v395
    %v397 = vrot.slane %v284, 5
    %v398 = vsel %vm393, %v395, %v397
    %s401 = scalar_lea.vmem %s1, 40
    %v402 = vld [vmem:[%s401] sm:$0xff]
    %v403 = vmul.f32 %v396, %v402
    %v404 = vmul.f32 %v398, %v402
    %v405 = vadd.f32 %v391, %v403
    %v406 = vadd.f32 %v392, %v404
    %vm407 = vcmask 1041408
    %v408 = vrot.slane %v282, 6
    %v409 = vrot.slane %v283, 6
    %v410 = vsel %vm407, %v408, %v409
    %v411 = vrot.slane %v284, 6
    %v412 = vsel %vm407, %v409, %v411
    %s415 = scalar_lea.vmem %s1, 48
    %v416 = vld [vmem:[%s415] sm:$0xff]
    %v417 = vmul.f32 %v410, %v416
    %v418 = vmul.f32 %v412, %v416
    %v419 = vadd.f32 %v405, %v417
    %v420 = vadd.f32 %v406, %v418
    %vm421 = vcmask 1040384
    %v422 = vrot.slane %v282, 7
    %v423 = vrot.slane %v283, 7
    %v424 = vsel %vm421, %v422, %v423
    %v425 = vrot.slane %v284, 7
    %v426 = vsel %vm421, %v423, %v425
    %s429 = scalar_lea.vmem %s1, 56
    %v430 = vld [vmem:[%s429] sm:$0xff]
    %v431 = vmul.f32 %v424, %v430
    %v432 = vmul.f32 %v426, %v430
    %v433 = vadd.f32 %v419, %v431
    %v434 = vadd.f32 %v420, %v432
    %s435 = sadd.s32 %s275, 1
    %s436 = smul.u32 %s435, 32
    %s437 = scalar_lea.vmem [#allocation2], %s436
    %v438 = vld [vmem:[%s437] sm:$0xff]
    %v439 = vld [vmem:[%s437 + $0x8] sm:$0xff]
    %v440 = vld [vmem:[%s437 + $0x10] sm:$0xff]
    %v441 = vld [vmem:[%s437 + $0x18] sm:$0xf]
    %s442 = scalar_lea.vmem %s1, 104
    %v443 = vld [vmem:[%s442] sm:$0xff]
    %v444 = vmul.f32 %v438, %v443
    %v445 = vmul.f32 %v439, %v443
    %v446 = vadd.f32 %v444, 0.0
    %v447 = vadd.f32 %v445, 0.0
    %s448 = scalar_lea.vmem %s1, 168
    %v449 = vld [vmem:[%s448] sm:$0xff]
    %v450 = vmul.f32 %v439, %v449
    %v451 = vmul.f32 %v440, %v449
    %v452 = vadd.f32 %v446, %v450
    %v453 = vadd.f32 %v447, %v451
    %v458 = vrot.slane %v438, 1
    %v459 = vrot.slane %v439, 1
    %v460 = vsel %vm301, %v458, %v459
    %v461 = vrot.slane %v440, 1
    %v462 = vsel %vm301, %v459, %v461
    %v463 = vrot.slane %v441, 1
    %v464 = vsel %vm301, %v461, %v463
    %s468 = scalar_lea.vmem %s1, 112
    %v469 = vld [vmem:[%s468] sm:$0xff]
    %v470 = vmul.f32 %v460, %v469
    %v471 = vmul.f32 %v462, %v469
    %v472 = vadd.f32 %v452, %v470
    %v473 = vadd.f32 %v453, %v471
    %s474 = scalar_lea.vmem %s1, 176
    %v475 = vld [vmem:[%s474] sm:$0xff]
    %v476 = vmul.f32 %v462, %v475
    %v477 = vmul.f32 %v464, %v475
    %v478 = vadd.f32 %v472, %v476
    %v479 = vadd.f32 %v473, %v477
    %v480 = vrot.slane %v438, 2
    %v481 = vrot.slane %v439, 2
    %v482 = vsel %vm324, %v480, %v481
    %v483 = vrot.slane %v440, 2
    %v484 = vsel %vm324, %v481, %v483
    %v485 = vrot.slane %v441, 2
    %v486 = vsel %vm324, %v483, %v485
    %s490 = scalar_lea.vmem %s1, 120
    %v491 = vld [vmem:[%s490] sm:$0xff]
    %v492 = vmul.f32 %v482, %v491
    %v493 = vmul.f32 %v484, %v491
    %v494 = vadd.f32 %v478, %v492
    %v495 = vadd.f32 %v479, %v493
    %s496 = scalar_lea.vmem %s1, 184
    %v497 = vld [vmem:[%s496] sm:$0xff]
    %v498 = vmul.f32 %v484, %v497
    %v499 = vmul.f32 %v486, %v497
    %v500 = vadd.f32 %v494, %v498
    %v501 = vadd.f32 %v495, %v499
    %v502 = vrot.slane %v438, 3
    %v503 = vrot.slane %v439, 3
    %v504 = vsel %vm347, %v502, %v503
    %v505 = vrot.slane %v440, 3
    %v506 = vsel %vm347, %v503, %v505
    %v507 = vrot.slane %v441, 3
    %v508 = vsel %vm347, %v505, %v507
    %s512 = scalar_lea.vmem %s1, 128
    %v513 = vld [vmem:[%s512] sm:$0xff]
    %v514 = vmul.f32 %v504, %v513
    %v515 = vmul.f32 %v506, %v513
    %v516 = vadd.f32 %v500, %v514
    %v517 = vadd.f32 %v501, %v515
    %s518 = scalar_lea.vmem %s1, 192
    %v519 = vld [vmem:[%s518] sm:$0xff]
    %v520 = vmul.f32 %v506, %v519
    %v521 = vmul.f32 %v508, %v519
    %v522 = vadd.f32 %v516, %v520
    %v523 = vadd.f32 %v517, %v521
    %v524 = vrot.slane %v438, 4
    %v525 = vrot.slane %v439, 4
    %v526 = vsel %vm370, %v524, %v525
    %v527 = vrot.slane %v440, 4
    %v528 = vsel %vm370, %v525, %v527
    %v529 = vrot.slane %v441, 4
    %v530 = vsel %vm370, %v527, %v529
    %s534 = scalar_lea.vmem %s1, 136
    %v535 = vld [vmem:[%s534] sm:$0xff]
    %v536 = vmul.f32 %v526, %v535
    %v537 = vmul.f32 %v528, %v535
    %v538 = vadd.f32 %v522, %v536
    %v539 = vadd.f32 %v523, %v537
    %s540 = scalar_lea.vmem %s1, 200
    %v541 = vld [vmem:[%s540] sm:$0xff]
    %v542 = vmul.f32 %v528, %v541
    %v543 = vmul.f32 %v530, %v541
    %v544 = vadd.f32 %v538, %v542
    %v545 = vadd.f32 %v539, %v543
    %v546 = vrot.slane %v438, 5
    %v547 = vrot.slane %v439, 5
    %v548 = vsel %vm393, %v546, %v547
    %v549 = vrot.slane %v440, 5
    %v550 = vsel %vm393, %v547, %v549
    %s553 = scalar_lea.vmem %s1, 144
    %v554 = vld [vmem:[%s553] sm:$0xff]
    %v555 = vmul.f32 %v548, %v554
    %v556 = vmul.f32 %v550, %v554
    %v557 = vadd.f32 %v544, %v555
    %v558 = vadd.f32 %v545, %v556
    %v559 = vrot.slane %v438, 6
    %v560 = vrot.slane %v439, 6
    %v561 = vsel %vm407, %v559, %v560
    %v562 = vrot.slane %v440, 6
    %v563 = vsel %vm407, %v560, %v562
    %s566 = scalar_lea.vmem %s1, 152
    %v567 = vld [vmem:[%s566] sm:$0xff]
    %v568 = vmul.f32 %v561, %v567
    %v569 = vmul.f32 %v563, %v567
    %v570 = vadd.f32 %v557, %v568
    %v571 = vadd.f32 %v558, %v569
    %v572 = vrot.slane %v438, 7
    %v573 = vrot.slane %v439, 7
    %v574 = vsel %vm421, %v572, %v573
    %v575 = vrot.slane %v440, 7
    %v576 = vsel %vm421, %v573, %v575
    %s579 = scalar_lea.vmem %s1, 160
    %v580 = vld [vmem:[%s579] sm:$0xff]
    %v581 = vmul.f32 %v574, %v580
    %v582 = vmul.f32 %v576, %v580
    %v583 = vadd.f32 %v570, %v581
    %v584 = vadd.f32 %v571, %v582
    %s585 = sadd.s32 %s275, 2
    %s586 = smul.u32 %s585, 32
    %s587 = scalar_lea.vmem [#allocation2], %s586
    %v588 = vld [vmem:[%s587] sm:$0xff]
    %v589 = vld [vmem:[%s587 + $0x8] sm:$0xff]
    %v590 = vld [vmem:[%s587 + $0x10] sm:$0xff]
    %v591 = vld [vmem:[%s587 + $0x18] sm:$0xf]
    %s592 = scalar_lea.vmem %s1, 208
    %v593 = vld [vmem:[%s592] sm:$0xff]
    %v594 = vmul.f32 %v588, %v593
    %v595 = vmul.f32 %v589, %v593
    %v596 = vadd.f32 %v433, %v594
    %v597 = vadd.f32 %v434, %v595
    %s598 = scalar_lea.vmem %s1, 272
    %v599 = vld [vmem:[%s598] sm:$0xff]
    %v600 = vmul.f32 %v589, %v599
    %v601 = vmul.f32 %v590, %v599
    %v602 = vadd.f32 %v596, %v600
    %v603 = vadd.f32 %v597, %v601
    %v608 = vrot.slane %v588, 1
    %v609 = vrot.slane %v589, 1
    %v610 = vsel %vm301, %v608, %v609
    %v611 = vrot.slane %v590, 1
    %v612 = vsel %vm301, %v609, %v611
    %v613 = vrot.slane %v591, 1
    %v614 = vsel %vm301, %v611, %v613
    %s618 = scalar_lea.vmem %s1, 216
    %v619 = vld [vmem:[%s618] sm:$0xff]
    %v620 = vmul.f32 %v610, %v619
    %v621 = vmul.f32 %v612, %v619
    %v622 = vadd.f32 %v602, %v620
    %v623 = vadd.f32 %v603, %v621
    %s624 = scalar_lea.vmem %s1, 280
    %v625 = vld [vmem:[%s624] sm:$0xff]
    %v626 = vmul.f32 %v612, %v625
    %v627 = vmul.f32 %v614, %v625
    %v628 = vadd.f32 %v622, %v626
    %v629 = vadd.f32 %v623, %v627
    %v630 = vrot.slane %v588, 2
    %v631 = vrot.slane %v589, 2
    %v632 = vsel %vm324, %v630, %v631
    %v633 = vrot.slane %v590, 2
    %v634 = vsel %vm324, %v631, %v633
    %v635 = vrot.slane %v591, 2
    %v636 = vsel %vm324, %v633, %v635
    %s640 = scalar_lea.vmem %s1, 224
    %v641 = vld [vmem:[%s640] sm:$0xff]
    %v642 = vmul.f32 %v632, %v641
    %v643 = vmul.f32 %v634, %v641
    %v644 = vadd.f32 %v628, %v642
    %v645 = vadd.f32 %v629, %v643
    %s646 = scalar_lea.vmem %s1, 288
    %v647 = vld [vmem:[%s646] sm:$0xff]
    %v648 = vmul.f32 %v634, %v647
    %v649 = vmul.f32 %v636, %v647
    %v650 = vadd.f32 %v644, %v648
    %v651 = vadd.f32 %v645, %v649
    %v652 = vrot.slane %v588, 3
    %v653 = vrot.slane %v589, 3
    %v654 = vsel %vm347, %v652, %v653
    %v655 = vrot.slane %v590, 3
    %v656 = vsel %vm347, %v653, %v655
    %v657 = vrot.slane %v591, 3
    %v658 = vsel %vm347, %v655, %v657
    %s662 = scalar_lea.vmem %s1, 232
    %v663 = vld [vmem:[%s662] sm:$0xff]
    %v664 = vmul.f32 %v654, %v663
    %v665 = vmul.f32 %v656, %v663
    %v666 = vadd.f32 %v650, %v664
    %v667 = vadd.f32 %v651, %v665
    %s668 = scalar_lea.vmem %s1, 296
    %v669 = vld [vmem:[%s668] sm:$0xff]
    %v670 = vmul.f32 %v656, %v669
    %v671 = vmul.f32 %v658, %v669
    %v672 = vadd.f32 %v666, %v670
    %v673 = vadd.f32 %v667, %v671
    %v674 = vrot.slane %v588, 4
    %v675 = vrot.slane %v589, 4
    %v676 = vsel %vm370, %v674, %v675
    %v677 = vrot.slane %v590, 4
    %v678 = vsel %vm370, %v675, %v677
    %v679 = vrot.slane %v591, 4
    %v680 = vsel %vm370, %v677, %v679
    %s684 = scalar_lea.vmem %s1, 240
    %v685 = vld [vmem:[%s684] sm:$0xff]
    %v686 = vmul.f32 %v676, %v685
    %v687 = vmul.f32 %v678, %v685
    %v688 = vadd.f32 %v672, %v686
    %v689 = vadd.f32 %v673, %v687
    %s690 = scalar_lea.vmem %s1, 304
    %v691 = vld [vmem:[%s690] sm:$0xff]
    %v692 = vmul.f32 %v678, %v691
    %v693 = vmul.f32 %v680, %v691
    %v694 = vadd.f32 %v688, %v692
    %v695 = vadd.f32 %v689, %v693
    %v696 = vrot.slane %v588, 5
    %v697 = vrot.slane %v589, 5
    %v698 = vsel %vm393, %v696, %v697
    %v699 = vrot.slane %v590, 5
    %v700 = vsel %vm393, %v697, %v699
    %s703 = scalar_lea.vmem %s1, 248
    %v704 = vld [vmem:[%s703] sm:$0xff]
    %v705 = vmul.f32 %v698, %v704
    %v706 = vmul.f32 %v700, %v704
    %v707 = vadd.f32 %v694, %v705
    %v708 = vadd.f32 %v695, %v706
    %v709 = vrot.slane %v588, 6
    %v710 = vrot.slane %v589, 6
    %v711 = vsel %vm407, %v709, %v710
    %v712 = vrot.slane %v590, 6
    %v713 = vsel %vm407, %v710, %v712
    %s716 = scalar_lea.vmem %s1, 256
    %v717 = vld [vmem:[%s716] sm:$0xff]
    %v718 = vmul.f32 %v711, %v717
    %v719 = vmul.f32 %v713, %v717
    %v720 = vadd.f32 %v707, %v718
    %v721 = vadd.f32 %v708, %v719
    %v722 = vrot.slane %v588, 7
    %v723 = vrot.slane %v589, 7
    %v724 = vsel %vm421, %v722, %v723
    %v725 = vrot.slane %v590, 7
    %v726 = vsel %vm421, %v723, %v725
    %s729 = scalar_lea.vmem %s1, 264
    %v730 = vld [vmem:[%s729] sm:$0xff]
    %v731 = vmul.f32 %v724, %v730
    %v732 = vmul.f32 %v726, %v730
    %v733 = vadd.f32 %v720, %v731
    %v734 = vadd.f32 %v721, %v732
    %s735 = sadd.s32 %s275, 3
    %s736 = smul.u32 %s735, 32
    %s737 = scalar_lea.vmem [#allocation2], %s736
    %v738 = vld [vmem:[%s737] sm:$0xff]
    %v739 = vld [vmem:[%s737 + $0x8] sm:$0xff]
    %v740 = vld [vmem:[%s737 + $0x10] sm:$0xff]
    %v741 = vld [vmem:[%s737 + $0x18] sm:$0xf]
    %s742 = scalar_lea.vmem %s1, 312
    %v743 = vld [vmem:[%s742] sm:$0xff]
    %v744 = vmul.f32 %v738, %v743
    %v745 = vmul.f32 %v739, %v743
    %v746 = vadd.f32 %v583, %v744
    %v747 = vadd.f32 %v584, %v745
    %s748 = scalar_lea.vmem %s1, 376
    %v749 = vld [vmem:[%s748] sm:$0xff]
    %v750 = vmul.f32 %v739, %v749
    %v751 = vmul.f32 %v740, %v749
    %v752 = vadd.f32 %v746, %v750
    %v753 = vadd.f32 %v747, %v751
    %v758 = vrot.slane %v738, 1
    %v759 = vrot.slane %v739, 1
    %v760 = vsel %vm301, %v758, %v759
    %v761 = vrot.slane %v740, 1
    %v762 = vsel %vm301, %v759, %v761
    %v763 = vrot.slane %v741, 1
    %v764 = vsel %vm301, %v761, %v763
    %s768 = scalar_lea.vmem %s1, 320
    %v769 = vld [vmem:[%s768] sm:$0xff]
    %v770 = vmul.f32 %v760, %v769
    %v771 = vmul.f32 %v762, %v769
    %v772 = vadd.f32 %v752, %v770
    %v773 = vadd.f32 %v753, %v771
    %s774 = scalar_lea.vmem %s1, 384
    %v775 = vld [vmem:[%s774] sm:$0xff]
    %v776 = vmul.f32 %v762, %v775
    %v777 = vmul.f32 %v764, %v775
    %v778 = vadd.f32 %v772, %v776
    %v779 = vadd.f32 %v773, %v777
    %v780 = vrot.slane %v738, 2
    %v781 = vrot.slane %v739, 2
    %v782 = vsel %vm324, %v780, %v781
    %v783 = vrot.slane %v740, 2
    %v784 = vsel %vm324, %v781, %v783
    %v785 = vrot.slane %v741, 2
    %v786 = vsel %vm324, %v783, %v785
    %s790 = scalar_lea.vmem %s1, 328
    %v791 = vld [vmem:[%s790] sm:$0xff]
    %v792 = vmul.f32 %v782, %v791
    %v793 = vmul.f32 %v784, %v791
    %v794 = vadd.f32 %v778, %v792
    %v795 = vadd.f32 %v779, %v793
    %s796 = scalar_lea.vmem %s1, 392
    %v797 = vld [vmem:[%s796] sm:$0xff]
    %v798 = vmul.f32 %v784, %v797
    %v799 = vmul.f32 %v786, %v797
    %v800 = vadd.f32 %v794, %v798
    %v801 = vadd.f32 %v795, %v799
    %v802 = vrot.slane %v738, 3
    %v803 = vrot.slane %v739, 3
    %v804 = vsel %vm347, %v802, %v803
    %v805 = vrot.slane %v740, 3
    %v806 = vsel %vm347, %v803, %v805
    %v807 = vrot.slane %v741, 3
    %v808 = vsel %vm347, %v805, %v807
    %s812 = scalar_lea.vmem %s1, 336
    %v813 = vld [vmem:[%s812] sm:$0xff]
    %v814 = vmul.f32 %v804, %v813
    %v815 = vmul.f32 %v806, %v813
    %v816 = vadd.f32 %v800, %v814
    %v817 = vadd.f32 %v801, %v815
    %s818 = scalar_lea.vmem %s1, 400
    %v819 = vld [vmem:[%s818] sm:$0xff]
    %v820 = vmul.f32 %v806, %v819
    %v821 = vmul.f32 %v808, %v819
    %v822 = vadd.f32 %v816, %v820
    %v823 = vadd.f32 %v817, %v821
    %v824 = vrot.slane %v738, 4
    %v825 = vrot.slane %v739, 4
    %v826 = vsel %vm370, %v824, %v825
    %v827 = vrot.slane %v740, 4
    %v828 = vsel %vm370, %v825, %v827
    %v829 = vrot.slane %v741, 4
    %v830 = vsel %vm370, %v827, %v829
    %s834 = scalar_lea.vmem %s1, 344
    %v835 = vld [vmem:[%s834] sm:$0xff]
    %v836 = vmul.f32 %v826, %v835
    %v837 = vmul.f32 %v828, %v835
    %v838 = vadd.f32 %v822, %v836
    %v839 = vadd.f32 %v823, %v837
    %s840 = scalar_lea.vmem %s1, 408
    %v841 = vld [vmem:[%s840] sm:$0xff]
    %v842 = vmul.f32 %v828, %v841
    %v843 = vmul.f32 %v830, %v841
    %v844 = vadd.f32 %v838, %v842
    %v845 = vadd.f32 %v839, %v843
    %v846 = vrot.slane %v738, 5
    %v847 = vrot.slane %v739, 5
    %v848 = vsel %vm393, %v846, %v847
    %v849 = vrot.slane %v740, 5
    %v850 = vsel %vm393, %v847, %v849
    %s853 = scalar_lea.vmem %s1, 352
    %v854 = vld [vmem:[%s853] sm:$0xff]
    %v855 = vmul.f32 %v848, %v854
    %v856 = vmul.f32 %v850, %v854
    %v857 = vadd.f32 %v844, %v855
    %v858 = vadd.f32 %v845, %v856
    %v859 = vrot.slane %v738, 6
    %v860 = vrot.slane %v739, 6
    %v861 = vsel %vm407, %v859, %v860
    %v862 = vrot.slane %v740, 6
    %v863 = vsel %vm407, %v860, %v862
    %s866 = scalar_lea.vmem %s1, 360
    %v867 = vld [vmem:[%s866] sm:$0xff]
    %v868 = vmul.f32 %v861, %v867
    %v869 = vmul.f32 %v863, %v867
    %v870 = vadd.f32 %v857, %v868
    %v871 = vadd.f32 %v858, %v869
    %v872 = vrot.slane %v738, 7
    %v873 = vrot.slane %v739, 7
    %v874 = vsel %vm421, %v872, %v873
    %v875 = vrot.slane %v740, 7
    %v876 = vsel %vm421, %v873, %v875
    %s879 = scalar_lea.vmem %s1, 368
    %v880 = vld [vmem:[%s879] sm:$0xff]
    %v881 = vmul.f32 %v874, %v880
    %v882 = vmul.f32 %v876, %v880
    %v883 = vadd.f32 %v870, %v881
    %v884 = vadd.f32 %v871, %v882
    %s885 = sadd.s32 %s275, 4
    %s886 = smul.u32 %s885, 32
    %s887 = scalar_lea.vmem [#allocation2], %s886
    %v888 = vld [vmem:[%s887] sm:$0xff]
    %v889 = vld [vmem:[%s887 + $0x8] sm:$0xff]
    %v890 = vld [vmem:[%s887 + $0x10] sm:$0xff]
    %v891 = vld [vmem:[%s887 + $0x18] sm:$0xf]
    %s892 = scalar_lea.vmem %s1, 416
    %v893 = vld [vmem:[%s892] sm:$0xff]
    %v894 = vmul.f32 %v888, %v893
    %v895 = vmul.f32 %v889, %v893
    %v896 = vadd.f32 %v733, %v894
    %v897 = vadd.f32 %v734, %v895
    %s898 = scalar_lea.vmem %s1, 480
    %v899 = vld [vmem:[%s898] sm:$0xff]
    %v900 = vmul.f32 %v889, %v899
    %v901 = vmul.f32 %v890, %v899
    %v902 = vadd.f32 %v896, %v900
    %v903 = vadd.f32 %v897, %v901
    %v908 = vrot.slane %v888, 1
    %v909 = vrot.slane %v889, 1
    %v910 = vsel %vm301, %v908, %v909
    %v911 = vrot.slane %v890, 1
    %v912 = vsel %vm301, %v909, %v911
    %v913 = vrot.slane %v891, 1
    %v914 = vsel %vm301, %v911, %v913
    %s918 = scalar_lea.vmem %s1, 424
    %v919 = vld [vmem:[%s918] sm:$0xff]
    %v920 = vmul.f32 %v910, %v919
    %v921 = vmul.f32 %v912, %v919
    %v922 = vadd.f32 %v902, %v920
    %v923 = vadd.f32 %v903, %v921
    %s924 = scalar_lea.vmem %s1, 488
    %v925 = vld [vmem:[%s924] sm:$0xff]
    %v926 = vmul.f32 %v912, %v925
    %v927 = vmul.f32 %v914, %v925
    %v928 = vadd.f32 %v922, %v926
    %v929 = vadd.f32 %v923, %v927
    %v930 = vrot.slane %v888, 2
    %v931 = vrot.slane %v889, 2
    %v932 = vsel %vm324, %v930, %v931
    %v933 = vrot.slane %v890, 2
    %v934 = vsel %vm324, %v931, %v933
    %v935 = vrot.slane %v891, 2
    %v936 = vsel %vm324, %v933, %v935
    %s940 = scalar_lea.vmem %s1, 432
    %v941 = vld [vmem:[%s940] sm:$0xff]
    %v942 = vmul.f32 %v932, %v941
    %v943 = vmul.f32 %v934, %v941
    %v944 = vadd.f32 %v928, %v942
    %v945 = vadd.f32 %v929, %v943
    %s946 = scalar_lea.vmem %s1, 496
    %v947 = vld [vmem:[%s946] sm:$0xff]
    %v948 = vmul.f32 %v934, %v947
    %v949 = vmul.f32 %v936, %v947
    %v950 = vadd.f32 %v944, %v948
    %v951 = vadd.f32 %v945, %v949
    %v952 = vrot.slane %v888, 3
    %v953 = vrot.slane %v889, 3
    %v954 = vsel %vm347, %v952, %v953
    %v955 = vrot.slane %v890, 3
    %v956 = vsel %vm347, %v953, %v955
    %v957 = vrot.slane %v891, 3
    %v958 = vsel %vm347, %v955, %v957
    %s962 = scalar_lea.vmem %s1, 440
    %v963 = vld [vmem:[%s962] sm:$0xff]
    %v964 = vmul.f32 %v954, %v963
    %v965 = vmul.f32 %v956, %v963
    %v966 = vadd.f32 %v950, %v964
    %v967 = vadd.f32 %v951, %v965
    %s968 = scalar_lea.vmem %s1, 504
    %v969 = vld [vmem:[%s968] sm:$0xff]
    %v970 = vmul.f32 %v956, %v969
    %v971 = vmul.f32 %v958, %v969
    %v972 = vadd.f32 %v966, %v970
    %v973 = vadd.f32 %v967, %v971
    %v974 = vrot.slane %v888, 4
    %v975 = vrot.slane %v889, 4
    %v976 = vsel %vm370, %v974, %v975
    %v977 = vrot.slane %v890, 4
    %v978 = vsel %vm370, %v975, %v977
    %v979 = vrot.slane %v891, 4
    %v980 = vsel %vm370, %v977, %v979
    %s984 = scalar_lea.vmem %s1, 448
    %v985 = vld [vmem:[%s984] sm:$0xff]
    %v986 = vmul.f32 %v976, %v985
    %v987 = vmul.f32 %v978, %v985
    %v988 = vadd.f32 %v972, %v986
    %v989 = vadd.f32 %v973, %v987
    %s990 = scalar_lea.vmem %s1, 512
    %v991 = vld [vmem:[%s990] sm:$0xff]
    %v992 = vmul.f32 %v978, %v991
    %v993 = vmul.f32 %v980, %v991
    %v994 = vadd.f32 %v988, %v992
    %v995 = vadd.f32 %v989, %v993
    %v996 = vrot.slane %v888, 5
    %v997 = vrot.slane %v889, 5
    %v998 = vsel %vm393, %v996, %v997
    %v999 = vrot.slane %v890, 5
    %v1000 = vsel %vm393, %v997, %v999
    %s1003 = scalar_lea.vmem %s1, 456
    %v1004 = vld [vmem:[%s1003] sm:$0xff]
    %v1005 = vmul.f32 %v998, %v1004
    %v1006 = vmul.f32 %v1000, %v1004
    %v1007 = vadd.f32 %v994, %v1005
    %v1008 = vadd.f32 %v995, %v1006
    %v1009 = vrot.slane %v888, 6
    %v1010 = vrot.slane %v889, 6
    %v1011 = vsel %vm407, %v1009, %v1010
    %v1012 = vrot.slane %v890, 6
    %v1013 = vsel %vm407, %v1010, %v1012
    %s1016 = scalar_lea.vmem %s1, 464
    %v1017 = vld [vmem:[%s1016] sm:$0xff]
    %v1018 = vmul.f32 %v1011, %v1017
    %v1019 = vmul.f32 %v1013, %v1017
    %v1020 = vadd.f32 %v1007, %v1018
    %v1021 = vadd.f32 %v1008, %v1019
    %v1022 = vrot.slane %v888, 7
    %v1023 = vrot.slane %v889, 7
    %v1024 = vsel %vm421, %v1022, %v1023
    %v1025 = vrot.slane %v890, 7
    %v1026 = vsel %vm421, %v1023, %v1025
    %s1029 = scalar_lea.vmem %s1, 472
    %v1030 = vld [vmem:[%s1029] sm:$0xff]
    %v1031 = vmul.f32 %v1024, %v1030
    %v1032 = vmul.f32 %v1026, %v1030
    %v1033 = vadd.f32 %v1020, %v1031
    %v1034 = vadd.f32 %v1021, %v1032
    %s1035 = sadd.s32 %s275, 5
    %s1036 = smul.u32 %s1035, 32
    %s1037 = scalar_lea.vmem [#allocation2], %s1036
    %v1038 = vld [vmem:[%s1037] sm:$0xff]
    %v1039 = vld [vmem:[%s1037 + $0x8] sm:$0xff]
    %v1040 = vld [vmem:[%s1037 + $0x10] sm:$0xff]
    %v1041 = vld [vmem:[%s1037 + $0x18] sm:$0xf]
    %s1042 = scalar_lea.vmem %s1, 520
    %v1043 = vld [vmem:[%s1042] sm:$0xff]
    %v1044 = vmul.f32 %v1038, %v1043
    %v1045 = vmul.f32 %v1039, %v1043
    %v1046 = vadd.f32 %v883, %v1044
    %v1047 = vadd.f32 %v884, %v1045
    %s1048 = scalar_lea.vmem %s1, 584
    %v1049 = vld [vmem:[%s1048] sm:$0xff]
    %v1050 = vmul.f32 %v1039, %v1049
    %v1051 = vmul.f32 %v1040, %v1049
    %v1052 = vadd.f32 %v1046, %v1050
    %v1053 = vadd.f32 %v1047, %v1051
    %v1058 = vrot.slane %v1038, 1
    %v1059 = vrot.slane %v1039, 1
    %v1060 = vsel %vm301, %v1058, %v1059
    %v1061 = vrot.slane %v1040, 1
    %v1062 = vsel %vm301, %v1059, %v1061
    %v1063 = vrot.slane %v1041, 1
    %v1064 = vsel %vm301, %v1061, %v1063
    %s1068 = scalar_lea.vmem %s1, 528
    %v1069 = vld [vmem:[%s1068] sm:$0xff]
    %v1070 = vmul.f32 %v1060, %v1069
    %v1071 = vmul.f32 %v1062, %v1069
    %v1072 = vadd.f32 %v1052, %v1070
    %v1073 = vadd.f32 %v1053, %v1071
    %s1074 = scalar_lea.vmem %s1, 592
    %v1075 = vld [vmem:[%s1074] sm:$0xff]
    %v1076 = vmul.f32 %v1062, %v1075
    %v1077 = vmul.f32 %v1064, %v1075
    %v1078 = vadd.f32 %v1072, %v1076
    %v1079 = vadd.f32 %v1073, %v1077
    %v1080 = vrot.slane %v1038, 2
    %v1081 = vrot.slane %v1039, 2
    %v1082 = vsel %vm324, %v1080, %v1081
    %v1083 = vrot.slane %v1040, 2
    %v1084 = vsel %vm324, %v1081, %v1083
    %v1085 = vrot.slane %v1041, 2
    %v1086 = vsel %vm324, %v1083, %v1085
    %s1090 = scalar_lea.vmem %s1, 536
    %v1091 = vld [vmem:[%s1090] sm:$0xff]
    %v1092 = vmul.f32 %v1082, %v1091
    %v1093 = vmul.f32 %v1084, %v1091
    %v1094 = vadd.f32 %v1078, %v1092
    %v1095 = vadd.f32 %v1079, %v1093
    %s1096 = scalar_lea.vmem %s1, 600
    %v1097 = vld [vmem:[%s1096] sm:$0xff]
    %v1098 = vmul.f32 %v1084, %v1097
    %v1099 = vmul.f32 %v1086, %v1097
    %v1100 = vadd.f32 %v1094, %v1098
    %v1101 = vadd.f32 %v1095, %v1099
    %v1102 = vrot.slane %v1038, 3
    %v1103 = vrot.slane %v1039, 3
    %v1104 = vsel %vm347, %v1102, %v1103
    %v1105 = vrot.slane %v1040, 3
    %v1106 = vsel %vm347, %v1103, %v1105
    %v1107 = vrot.slane %v1041, 3
    %v1108 = vsel %vm347, %v1105, %v1107
    %s1112 = scalar_lea.vmem %s1, 544
    %v1113 = vld [vmem:[%s1112] sm:$0xff]
    %v1114 = vmul.f32 %v1104, %v1113
    %v1115 = vmul.f32 %v1106, %v1113
    %v1116 = vadd.f32 %v1100, %v1114
    %v1117 = vadd.f32 %v1101, %v1115
    %s1118 = scalar_lea.vmem %s1, 608
    %v1119 = vld [vmem:[%s1118] sm:$0xff]
    %v1120 = vmul.f32 %v1106, %v1119
    %v1121 = vmul.f32 %v1108, %v1119
    %v1122 = vadd.f32 %v1116, %v1120
    %v1123 = vadd.f32 %v1117, %v1121
    %v1124 = vrot.slane %v1038, 4
    %v1125 = vrot.slane %v1039, 4
    %v1126 = vsel %vm370, %v1124, %v1125
    %v1127 = vrot.slane %v1040, 4
    %v1128 = vsel %vm370, %v1125, %v1127
    %v1129 = vrot.slane %v1041, 4
    %v1130 = vsel %vm370, %v1127, %v1129
    %s1134 = scalar_lea.vmem %s1, 552
    %v1135 = vld [vmem:[%s1134] sm:$0xff]
    %v1136 = vmul.f32 %v1126, %v1135
    %v1137 = vmul.f32 %v1128, %v1135
    %v1138 = vadd.f32 %v1122, %v1136
    %v1139 = vadd.f32 %v1123, %v1137
    %s1140 = scalar_lea.vmem %s1, 616
    %v1141 = vld [vmem:[%s1140] sm:$0xff]
    %v1142 = vmul.f32 %v1128, %v1141
    %v1143 = vmul.f32 %v1130, %v1141
    %v1144 = vadd.f32 %v1138, %v1142
    %v1145 = vadd.f32 %v1139, %v1143
    %v1146 = vrot.slane %v1038, 5
    %v1147 = vrot.slane %v1039, 5
    %v1148 = vsel %vm393, %v1146, %v1147
    %v1149 = vrot.slane %v1040, 5
    %v1150 = vsel %vm393, %v1147, %v1149
    %s1153 = scalar_lea.vmem %s1, 560
    %v1154 = vld [vmem:[%s1153] sm:$0xff]
    %v1155 = vmul.f32 %v1148, %v1154
    %v1156 = vmul.f32 %v1150, %v1154
    %v1157 = vadd.f32 %v1144, %v1155
    %v1158 = vadd.f32 %v1145, %v1156
    %v1159 = vrot.slane %v1038, 6
    %v1160 = vrot.slane %v1039, 6
    %v1161 = vsel %vm407, %v1159, %v1160
    %v1162 = vrot.slane %v1040, 6
    %v1163 = vsel %vm407, %v1160, %v1162
    %s1166 = scalar_lea.vmem %s1, 568
    %v1167 = vld [vmem:[%s1166] sm:$0xff]
    %v1168 = vmul.f32 %v1161, %v1167
    %v1169 = vmul.f32 %v1163, %v1167
    %v1170 = vadd.f32 %v1157, %v1168
    %v1171 = vadd.f32 %v1158, %v1169
    %v1172 = vrot.slane %v1038, 7
    %v1173 = vrot.slane %v1039, 7
    %v1174 = vsel %vm421, %v1172, %v1173
    %v1175 = vrot.slane %v1040, 7
    %v1176 = vsel %vm421, %v1173, %v1175
    %s1179 = scalar_lea.vmem %s1, 576
    %v1180 = vld [vmem:[%s1179] sm:$0xff]
    %v1181 = vmul.f32 %v1174, %v1180
    %v1182 = vmul.f32 %v1176, %v1180
    %v1183 = vadd.f32 %v1170, %v1181
    %v1184 = vadd.f32 %v1171, %v1182
    %s1185 = sadd.s32 %s275, 6
    %s1186 = smul.u32 %s1185, 32
    %s1187 = scalar_lea.vmem [#allocation2], %s1186
    %v1188 = vld [vmem:[%s1187] sm:$0xff]
    %v1189 = vld [vmem:[%s1187 + $0x8] sm:$0xff]
    %v1190 = vld [vmem:[%s1187 + $0x10] sm:$0xff]
    %v1191 = vld [vmem:[%s1187 + $0x18] sm:$0xf]
    %s1192 = scalar_lea.vmem %s1, 624
    %v1193 = vld [vmem:[%s1192] sm:$0xff]
    %v1194 = vmul.f32 %v1188, %v1193
    %v1195 = vmul.f32 %v1189, %v1193
    %v1196 = vadd.f32 %v1033, %v1194
    %v1197 = vadd.f32 %v1034, %v1195
    %s1198 = scalar_lea.vmem %s1, 688
    %v1199 = vld [vmem:[%s1198] sm:$0xff]
    %v1200 = vmul.f32 %v1189, %v1199
    %v1201 = vmul.f32 %v1190, %v1199
    %v1202 = vadd.f32 %v1196, %v1200
    %v1203 = vadd.f32 %v1197, %v1201
    %v1208 = vrot.slane %v1188, 1
    %v1209 = vrot.slane %v1189, 1
    %v1210 = vsel %vm301, %v1208, %v1209
    %v1211 = vrot.slane %v1190, 1
    %v1212 = vsel %vm301, %v1209, %v1211
    %v1213 = vrot.slane %v1191, 1
    %v1214 = vsel %vm301, %v1211, %v1213
    %s1218 = scalar_lea.vmem %s1, 632
    %v1219 = vld [vmem:[%s1218] sm:$0xff]
    %v1220 = vmul.f32 %v1210, %v1219
    %v1221 = vmul.f32 %v1212, %v1219
    %v1222 = vadd.f32 %v1202, %v1220
    %v1223 = vadd.f32 %v1203, %v1221
    %s1224 = scalar_lea.vmem %s1, 696
    %v1225 = vld [vmem:[%s1224] sm:$0xff]
    %v1226 = vmul.f32 %v1212, %v1225
    %v1227 = vmul.f32 %v1214, %v1225
    %v1228 = vadd.f32 %v1222, %v1226
    %v1229 = vadd.f32 %v1223, %v1227
    %v1230 = vrot.slane %v1188, 2
    %v1231 = vrot.slane %v1189, 2
    %v1232 = vsel %vm324, %v1230, %v1231
    %v1233 = vrot.slane %v1190, 2
    %v1234 = vsel %vm324, %v1231, %v1233
    %v1235 = vrot.slane %v1191, 2
    %v1236 = vsel %vm324, %v1233, %v1235
    %s1240 = scalar_lea.vmem %s1, 640
    %v1241 = vld [vmem:[%s1240] sm:$0xff]
    %v1242 = vmul.f32 %v1232, %v1241
    %v1243 = vmul.f32 %v1234, %v1241
    %v1244 = vadd.f32 %v1228, %v1242
    %v1245 = vadd.f32 %v1229, %v1243
    %s1246 = scalar_lea.vmem %s1, 704
    %v1247 = vld [vmem:[%s1246] sm:$0xff]
    %v1248 = vmul.f32 %v1234, %v1247
    %v1249 = vmul.f32 %v1236, %v1247
    %v1250 = vadd.f32 %v1244, %v1248
    %v1251 = vadd.f32 %v1245, %v1249
    %v1252 = vrot.slane %v1188, 3
    %v1253 = vrot.slane %v1189, 3
    %v1254 = vsel %vm347, %v1252, %v1253
    %v1255 = vrot.slane %v1190, 3
    %v1256 = vsel %vm347, %v1253, %v1255
    %v1257 = vrot.slane %v1191, 3
    %v1258 = vsel %vm347, %v1255, %v1257
    %s1262 = scalar_lea.vmem %s1, 648
    %v1263 = vld [vmem:[%s1262] sm:$0xff]
    %v1264 = vmul.f32 %v1254, %v1263
    %v1265 = vmul.f32 %v1256, %v1263
    %v1266 = vadd.f32 %v1250, %v1264
    %v1267 = vadd.f32 %v1251, %v1265
    %s1268 = scalar_lea.vmem %s1, 712
    %v1269 = vld [vmem:[%s1268] sm:$0xff]
    %v1270 = vmul.f32 %v1256, %v1269
    %v1271 = vmul.f32 %v1258, %v1269
    %v1272 = vadd.f32 %v1266, %v1270
    %v1273 = vadd.f32 %v1267, %v1271
    %v1274 = vrot.slane %v1188, 4
    %v1275 = vrot.slane %v1189, 4
    %v1276 = vsel %vm370, %v1274, %v1275
    %v1277 = vrot.slane %v1190, 4
    %v1278 = vsel %vm370, %v1275, %v1277
    %v1279 = vrot.slane %v1191, 4
    %v1280 = vsel %vm370, %v1277, %v1279
    %s1284 = scalar_lea.vmem %s1, 656
    %v1285 = vld [vmem:[%s1284] sm:$0xff]
    %v1286 = vmul.f32 %v1276, %v1285
    %v1287 = vmul.f32 %v1278, %v1285
    %v1288 = vadd.f32 %v1272, %v1286
    %v1289 = vadd.f32 %v1273, %v1287
    %s1290 = scalar_lea.vmem %s1, 720
    %v1291 = vld [vmem:[%s1290] sm:$0xff]
    %v1292 = vmul.f32 %v1278, %v1291
    %v1293 = vmul.f32 %v1280, %v1291
    %v1294 = vadd.f32 %v1288, %v1292
    %v1295 = vadd.f32 %v1289, %v1293
    %v1296 = vrot.slane %v1188, 5
    %v1297 = vrot.slane %v1189, 5
    %v1298 = vsel %vm393, %v1296, %v1297
    %v1299 = vrot.slane %v1190, 5
    %v1300 = vsel %vm393, %v1297, %v1299
    %s1303 = scalar_lea.vmem %s1, 664
    %v1304 = vld [vmem:[%s1303] sm:$0xff]
    %v1305 = vmul.f32 %v1298, %v1304
    %v1306 = vmul.f32 %v1300, %v1304
    %v1307 = vadd.f32 %v1294, %v1305
    %v1308 = vadd.f32 %v1295, %v1306
    %v1309 = vrot.slane %v1188, 6
    %v1310 = vrot.slane %v1189, 6
    %v1311 = vsel %vm407, %v1309, %v1310
    %v1312 = vrot.slane %v1190, 6
    %v1313 = vsel %vm407, %v1310, %v1312
    %s1316 = scalar_lea.vmem %s1, 672
    %v1317 = vld [vmem:[%s1316] sm:$0xff]
    %v1318 = vmul.f32 %v1311, %v1317
    %v1319 = vmul.f32 %v1313, %v1317
    %v1320 = vadd.f32 %v1307, %v1318
    %v1321 = vadd.f32 %v1308, %v1319
    %v1322 = vrot.slane %v1188, 7
    %v1323 = vrot.slane %v1189, 7
    %v1324 = vsel %vm421, %v1322, %v1323
    %v1325 = vrot.slane %v1190, 7
    %v1326 = vsel %vm421, %v1323, %v1325
    %s1329 = scalar_lea.vmem %s1, 680
    %v1330 = vld [vmem:[%s1329] sm:$0xff]
    %v1331 = vmul.f32 %v1324, %v1330
    %v1332 = vmul.f32 %v1326, %v1330
    %v1333 = vadd.f32 %v1320, %v1331
    %v1334 = vadd.f32 %v1321, %v1332
    %s1335 = sadd.s32 %s275, 7
    %s1336 = smul.u32 %s1335, 32
    %s1337 = scalar_lea.vmem [#allocation2], %s1336
    %v1338 = vld [vmem:[%s1337] sm:$0xff]
    %v1339 = vld [vmem:[%s1337 + $0x8] sm:$0xff]
    %v1340 = vld [vmem:[%s1337 + $0x10] sm:$0xff]
    %v1341 = vld [vmem:[%s1337 + $0x18] sm:$0xf]
    %s1342 = scalar_lea.vmem %s1, 728
    %v1343 = vld [vmem:[%s1342] sm:$0xff]
    %v1344 = vmul.f32 %v1338, %v1343
    %v1345 = vmul.f32 %v1339, %v1343
    %v1346 = vadd.f32 %v1183, %v1344
    %v1347 = vadd.f32 %v1184, %v1345
    %s1348 = scalar_lea.vmem %s1, 792
    %v1349 = vld [vmem:[%s1348] sm:$0xff]
    %v1350 = vmul.f32 %v1339, %v1349
    %v1351 = vmul.f32 %v1340, %v1349
    %v1352 = vadd.f32 %v1346, %v1350
    %v1353 = vadd.f32 %v1347, %v1351
    %v1358 = vrot.slane %v1338, 1
    %v1359 = vrot.slane %v1339, 1
    %v1360 = vsel %vm301, %v1358, %v1359
    %v1361 = vrot.slane %v1340, 1
    %v1362 = vsel %vm301, %v1359, %v1361
    %v1363 = vrot.slane %v1341, 1
    %v1364 = vsel %vm301, %v1361, %v1363
    %s1368 = scalar_lea.vmem %s1, 736
    %v1369 = vld [vmem:[%s1368] sm:$0xff]
    %v1370 = vmul.f32 %v1360, %v1369
    %v1371 = vmul.f32 %v1362, %v1369
    %v1372 = vadd.f32 %v1352, %v1370
    %v1373 = vadd.f32 %v1353, %v1371
    %s1374 = scalar_lea.vmem %s1, 800
    %v1375 = vld [vmem:[%s1374] sm:$0xff]
    %v1376 = vmul.f32 %v1362, %v1375
    %v1377 = vmul.f32 %v1364, %v1375
    %v1378 = vadd.f32 %v1372, %v1376
    %v1379 = vadd.f32 %v1373, %v1377
    %v1380 = vrot.slane %v1338, 2
    %v1381 = vrot.slane %v1339, 2
    %v1382 = vsel %vm324, %v1380, %v1381
    %v1383 = vrot.slane %v1340, 2
    %v1384 = vsel %vm324, %v1381, %v1383
    %v1385 = vrot.slane %v1341, 2
    %v1386 = vsel %vm324, %v1383, %v1385
    %s1390 = scalar_lea.vmem %s1, 744
    %v1391 = vld [vmem:[%s1390] sm:$0xff]
    %v1392 = vmul.f32 %v1382, %v1391
    %v1393 = vmul.f32 %v1384, %v1391
    %v1394 = vadd.f32 %v1378, %v1392
    %v1395 = vadd.f32 %v1379, %v1393
    %s1396 = scalar_lea.vmem %s1, 808
    %v1397 = vld [vmem:[%s1396] sm:$0xff]
    %v1398 = vmul.f32 %v1384, %v1397
    %v1399 = vmul.f32 %v1386, %v1397
    %v1400 = vadd.f32 %v1394, %v1398
    %v1401 = vadd.f32 %v1395, %v1399
    %v1402 = vrot.slane %v1338, 3
    %v1403 = vrot.slane %v1339, 3
    %v1404 = vsel %vm347, %v1402, %v1403
    %v1405 = vrot.slane %v1340, 3
    %v1406 = vsel %vm347, %v1403, %v1405
    %v1407 = vrot.slane %v1341, 3
    %v1408 = vsel %vm347, %v1405, %v1407
    %s1412 = scalar_lea.vmem %s1, 752
    %v1413 = vld [vmem:[%s1412] sm:$0xff]
    %v1414 = vmul.f32 %v1404, %v1413
    %v1415 = vmul.f32 %v1406, %v1413
    %v1416 = vadd.f32 %v1400, %v1414
    %v1417 = vadd.f32 %v1401, %v1415
    %s1418 = scalar_lea.vmem %s1, 816
    %v1419 = vld [vmem:[%s1418] sm:$0xff]
    %v1420 = vmul.f32 %v1406, %v1419
    %v1421 = vmul.f32 %v1408, %v1419
    %v1422 = vadd.f32 %v1416, %v1420
    %v1423 = vadd.f32 %v1417, %v1421
    %v1424 = vrot.slane %v1338, 4
    %v1425 = vrot.slane %v1339, 4
    %v1426 = vsel %vm370, %v1424, %v1425
    %v1427 = vrot.slane %v1340, 4
    %v1428 = vsel %vm370, %v1425, %v1427
    %v1429 = vrot.slane %v1341, 4
    %v1430 = vsel %vm370, %v1427, %v1429
    %s1434 = scalar_lea.vmem %s1, 760
    %v1435 = vld [vmem:[%s1434] sm:$0xff]
    %v1436 = vmul.f32 %v1426, %v1435
    %v1437 = vmul.f32 %v1428, %v1435
    %v1438 = vadd.f32 %v1422, %v1436
    %v1439 = vadd.f32 %v1423, %v1437
    %s1440 = scalar_lea.vmem %s1, 824
    %v1441 = vld [vmem:[%s1440] sm:$0xff]
    %v1442 = vmul.f32 %v1428, %v1441
    %v1443 = vmul.f32 %v1430, %v1441
    %v1444 = vadd.f32 %v1438, %v1442
    %v1445 = vadd.f32 %v1439, %v1443
    %v1446 = vrot.slane %v1338, 5
    %v1447 = vrot.slane %v1339, 5
    %v1448 = vsel %vm393, %v1446, %v1447
    %v1449 = vrot.slane %v1340, 5
    %v1450 = vsel %vm393, %v1447, %v1449
    %s1453 = scalar_lea.vmem %s1, 768
    %v1454 = vld [vmem:[%s1453] sm:$0xff]
    %v1455 = vmul.f32 %v1448, %v1454
    %v1456 = vmul.f32 %v1450, %v1454
    %v1457 = vadd.f32 %v1444, %v1455
    %v1458 = vadd.f32 %v1445, %v1456
    %v1459 = vrot.slane %v1338, 6
    %v1460 = vrot.slane %v1339, 6
    %v1461 = vsel %vm407, %v1459, %v1460
    %v1462 = vrot.slane %v1340, 6
    %v1463 = vsel %vm407, %v1460, %v1462
    %s1466 = scalar_lea.vmem %s1, 776
    %v1467 = vld [vmem:[%s1466] sm:$0xff]
    %v1468 = vmul.f32 %v1461, %v1467
    %v1469 = vmul.f32 %v1463, %v1467
    %v1470 = vadd.f32 %v1457, %v1468
    %v1471 = vadd.f32 %v1458, %v1469
    %v1472 = vrot.slane %v1338, 7
    %v1473 = vrot.slane %v1339, 7
    %v1474 = vsel %vm421, %v1472, %v1473
    %v1475 = vrot.slane %v1340, 7
    %v1476 = vsel %vm421, %v1473, %v1475
    %s1479 = scalar_lea.vmem %s1, 784
    %v1480 = vld [vmem:[%s1479] sm:$0xff]
    %v1481 = vmul.f32 %v1474, %v1480
    %v1482 = vmul.f32 %v1476, %v1480
    %v1483 = vadd.f32 %v1470, %v1481
    %v1484 = vadd.f32 %v1471, %v1482
    %s1485 = sadd.s32 %s275, 8
    %s1486 = smul.u32 %s1485, 32
    %s1487 = scalar_lea.vmem [#allocation2], %s1486
    %v1488 = vld [vmem:[%s1487] sm:$0xff]
    %v1489 = vld [vmem:[%s1487 + $0x8] sm:$0xff]
    %v1490 = vld [vmem:[%s1487 + $0x10] sm:$0xff]
    %v1491 = vld [vmem:[%s1487 + $0x18] sm:$0xf]
    %s1492 = scalar_lea.vmem %s1, 832
    %v1493 = vld [vmem:[%s1492] sm:$0xff]
    %v1494 = vmul.f32 %v1488, %v1493
    %v1495 = vmul.f32 %v1489, %v1493
    %v1496 = vadd.f32 %v1333, %v1494
    %v1497 = vadd.f32 %v1334, %v1495
    %s1498 = scalar_lea.vmem %s1, 896
    %v1499 = vld [vmem:[%s1498] sm:$0xff]
    %v1500 = vmul.f32 %v1489, %v1499
    %v1501 = vmul.f32 %v1490, %v1499
    %v1502 = vadd.f32 %v1496, %v1500
    %v1503 = vadd.f32 %v1497, %v1501
    %v1508 = vrot.slane %v1488, 1
    %v1509 = vrot.slane %v1489, 1
    %v1510 = vsel %vm301, %v1508, %v1509
    %v1511 = vrot.slane %v1490, 1
    %v1512 = vsel %vm301, %v1509, %v1511
    %v1513 = vrot.slane %v1491, 1
    %v1514 = vsel %vm301, %v1511, %v1513
    %s1518 = scalar_lea.vmem %s1, 840
    %v1519 = vld [vmem:[%s1518] sm:$0xff]
    %v1520 = vmul.f32 %v1510, %v1519
    %v1521 = vmul.f32 %v1512, %v1519
    %v1522 = vadd.f32 %v1502, %v1520
    %v1523 = vadd.f32 %v1503, %v1521
    %s1524 = scalar_lea.vmem %s1, 904
    %v1525 = vld [vmem:[%s1524] sm:$0xff]
    %v1526 = vmul.f32 %v1512, %v1525
    %v1527 = vmul.f32 %v1514, %v1525
    %v1528 = vadd.f32 %v1522, %v1526
    %v1529 = vadd.f32 %v1523, %v1527
    %v1530 = vrot.slane %v1488, 2
    %v1531 = vrot.slane %v1489, 2
    %v1532 = vsel %vm324, %v1530, %v1531
    %v1533 = vrot.slane %v1490, 2
    %v1534 = vsel %vm324, %v1531, %v1533
    %v1535 = vrot.slane %v1491, 2
    %v1536 = vsel %vm324, %v1533, %v1535
    %s1540 = scalar_lea.vmem %s1, 848
    %v1541 = vld [vmem:[%s1540] sm:$0xff]
    %v1542 = vmul.f32 %v1532, %v1541
    %v1543 = vmul.f32 %v1534, %v1541
    %v1544 = vadd.f32 %v1528, %v1542
    %v1545 = vadd.f32 %v1529, %v1543
    %s1546 = scalar_lea.vmem %s1, 912
    %v1547 = vld [vmem:[%s1546] sm:$0xff]
    %v1548 = vmul.f32 %v1534, %v1547
    %v1549 = vmul.f32 %v1536, %v1547
    %v1550 = vadd.f32 %v1544, %v1548
    %v1551 = vadd.f32 %v1545, %v1549
    %v1552 = vrot.slane %v1488, 3
    %v1553 = vrot.slane %v1489, 3
    %v1554 = vsel %vm347, %v1552, %v1553
    %v1555 = vrot.slane %v1490, 3
    %v1556 = vsel %vm347, %v1553, %v1555
    %v1557 = vrot.slane %v1491, 3
    %v1558 = vsel %vm347, %v1555, %v1557
    %s1562 = scalar_lea.vmem %s1, 856
    %v1563 = vld [vmem:[%s1562] sm:$0xff]
    %v1564 = vmul.f32 %v1554, %v1563
    %v1565 = vmul.f32 %v1556, %v1563
    %v1566 = vadd.f32 %v1550, %v1564
    %v1567 = vadd.f32 %v1551, %v1565
    %s1568 = scalar_lea.vmem %s1, 920
    %v1569 = vld [vmem:[%s1568] sm:$0xff]
    %v1570 = vmul.f32 %v1556, %v1569
    %v1571 = vmul.f32 %v1558, %v1569
    %v1572 = vadd.f32 %v1566, %v1570
    %v1573 = vadd.f32 %v1567, %v1571
    %v1574 = vrot.slane %v1488, 4
    %v1575 = vrot.slane %v1489, 4
    %v1576 = vsel %vm370, %v1574, %v1575
    %v1577 = vrot.slane %v1490, 4
    %v1578 = vsel %vm370, %v1575, %v1577
    %v1579 = vrot.slane %v1491, 4
    %v1580 = vsel %vm370, %v1577, %v1579
    %s1584 = scalar_lea.vmem %s1, 864
    %v1585 = vld [vmem:[%s1584] sm:$0xff]
    %v1586 = vmul.f32 %v1576, %v1585
    %v1587 = vmul.f32 %v1578, %v1585
    %v1588 = vadd.f32 %v1572, %v1586
    %v1589 = vadd.f32 %v1573, %v1587
    %s1590 = scalar_lea.vmem %s1, 928
    %v1591 = vld [vmem:[%s1590] sm:$0xff]
    %v1592 = vmul.f32 %v1578, %v1591
    %v1593 = vmul.f32 %v1580, %v1591
    %v1594 = vadd.f32 %v1588, %v1592
    %v1595 = vadd.f32 %v1589, %v1593
    %v1596 = vrot.slane %v1488, 5
    %v1597 = vrot.slane %v1489, 5
    %v1598 = vsel %vm393, %v1596, %v1597
    %v1599 = vrot.slane %v1490, 5
    %v1600 = vsel %vm393, %v1597, %v1599
    %s1603 = scalar_lea.vmem %s1, 872
    %v1604 = vld [vmem:[%s1603] sm:$0xff]
    %v1605 = vmul.f32 %v1598, %v1604
    %v1606 = vmul.f32 %v1600, %v1604
    %v1607 = vadd.f32 %v1594, %v1605
    %v1608 = vadd.f32 %v1595, %v1606
    %v1609 = vrot.slane %v1488, 6
    %v1610 = vrot.slane %v1489, 6
    %v1611 = vsel %vm407, %v1609, %v1610
    %v1612 = vrot.slane %v1490, 6
    %v1613 = vsel %vm407, %v1610, %v1612
    %s1616 = scalar_lea.vmem %s1, 880
    %v1617 = vld [vmem:[%s1616] sm:$0xff]
    %v1618 = vmul.f32 %v1611, %v1617
    %v1619 = vmul.f32 %v1613, %v1617
    %v1620 = vadd.f32 %v1607, %v1618
    %v1621 = vadd.f32 %v1608, %v1619
    %v1622 = vrot.slane %v1488, 7
    %v1623 = vrot.slane %v1489, 7
    %v1624 = vsel %vm421, %v1622, %v1623
    %v1625 = vrot.slane %v1490, 7
    %v1626 = vsel %vm421, %v1623, %v1625
    %s1629 = scalar_lea.vmem %s1, 888
    %v1630 = vld [vmem:[%s1629] sm:$0xff]
    %v1631 = vmul.f32 %v1624, %v1630
    %v1632 = vmul.f32 %v1626, %v1630
    %v1633 = vadd.f32 %v1620, %v1631
    %v1634 = vadd.f32 %v1621, %v1632
    %s1635 = sadd.s32 %s275, 9
    %s1636 = smul.u32 %s1635, 32
    %s1637 = scalar_lea.vmem [#allocation2], %s1636
    %v1638 = vld [vmem:[%s1637] sm:$0xff]
    %v1639 = vld [vmem:[%s1637 + $0x8] sm:$0xff]
    %v1640 = vld [vmem:[%s1637 + $0x10] sm:$0xff]
    %v1641 = vld [vmem:[%s1637 + $0x18] sm:$0xf]
    %s1642 = scalar_lea.vmem %s1, 936
    %v1643 = vld [vmem:[%s1642] sm:$0xff]
    %v1644 = vmul.f32 %v1638, %v1643
    %v1645 = vmul.f32 %v1639, %v1643
    %v1646 = vadd.f32 %v1483, %v1644
    %v1647 = vadd.f32 %v1484, %v1645
    %s1648 = scalar_lea.vmem %s1, 1000
    %v1649 = vld [vmem:[%s1648] sm:$0xff]
    %v1650 = vmul.f32 %v1639, %v1649
    %v1651 = vmul.f32 %v1640, %v1649
    %v1652 = vadd.f32 %v1646, %v1650
    %v1653 = vadd.f32 %v1647, %v1651
    %v1658 = vrot.slane %v1638, 1
    %v1659 = vrot.slane %v1639, 1
    %v1660 = vsel %vm301, %v1658, %v1659
    %v1661 = vrot.slane %v1640, 1
    %v1662 = vsel %vm301, %v1659, %v1661
    %v1663 = vrot.slane %v1641, 1
    %v1664 = vsel %vm301, %v1661, %v1663
    %s1668 = scalar_lea.vmem %s1, 944
    %v1669 = vld [vmem:[%s1668] sm:$0xff]
    %v1670 = vmul.f32 %v1660, %v1669
    %v1671 = vmul.f32 %v1662, %v1669
    %v1672 = vadd.f32 %v1652, %v1670
    %v1673 = vadd.f32 %v1653, %v1671
    %s1674 = scalar_lea.vmem %s1, 1008
    %v1675 = vld [vmem:[%s1674] sm:$0xff]
    %v1676 = vmul.f32 %v1662, %v1675
    %v1677 = vmul.f32 %v1664, %v1675
    %v1678 = vadd.f32 %v1672, %v1676
    %v1679 = vadd.f32 %v1673, %v1677
    %v1680 = vrot.slane %v1638, 2
    %v1681 = vrot.slane %v1639, 2
    %v1682 = vsel %vm324, %v1680, %v1681
    %v1683 = vrot.slane %v1640, 2
    %v1684 = vsel %vm324, %v1681, %v1683
    %v1685 = vrot.slane %v1641, 2
    %v1686 = vsel %vm324, %v1683, %v1685
    %s1690 = scalar_lea.vmem %s1, 952
    %v1691 = vld [vmem:[%s1690] sm:$0xff]
    %v1692 = vmul.f32 %v1682, %v1691
    %v1693 = vmul.f32 %v1684, %v1691
    %v1694 = vadd.f32 %v1678, %v1692
    %v1695 = vadd.f32 %v1679, %v1693
    %s1696 = scalar_lea.vmem %s1, 1016
    %v1697 = vld [vmem:[%s1696] sm:$0xff]
    %v1698 = vmul.f32 %v1684, %v1697
    %v1699 = vmul.f32 %v1686, %v1697
    %v1700 = vadd.f32 %v1694, %v1698
    %v1701 = vadd.f32 %v1695, %v1699
    %v1702 = vrot.slane %v1638, 3
    %v1703 = vrot.slane %v1639, 3
    %v1704 = vsel %vm347, %v1702, %v1703
    %v1705 = vrot.slane %v1640, 3
    %v1706 = vsel %vm347, %v1703, %v1705
    %v1707 = vrot.slane %v1641, 3
    %v1708 = vsel %vm347, %v1705, %v1707
    %s1712 = scalar_lea.vmem %s1, 960
    %v1713 = vld [vmem:[%s1712] sm:$0xff]
    %v1714 = vmul.f32 %v1704, %v1713
    %v1715 = vmul.f32 %v1706, %v1713
    %v1716 = vadd.f32 %v1700, %v1714
    %v1717 = vadd.f32 %v1701, %v1715
    %s1718 = scalar_lea.vmem %s1, 1024
    %v1719 = vld [vmem:[%s1718] sm:$0xff]
    %v1720 = vmul.f32 %v1706, %v1719
    %v1721 = vmul.f32 %v1708, %v1719
    %v1722 = vadd.f32 %v1716, %v1720
    %v1723 = vadd.f32 %v1717, %v1721
    %v1724 = vrot.slane %v1638, 4
    %v1725 = vrot.slane %v1639, 4
    %v1726 = vsel %vm370, %v1724, %v1725
    %v1727 = vrot.slane %v1640, 4
    %v1728 = vsel %vm370, %v1725, %v1727
    %v1729 = vrot.slane %v1641, 4
    %v1730 = vsel %vm370, %v1727, %v1729
    %s1734 = scalar_lea.vmem %s1, 968
    %v1735 = vld [vmem:[%s1734] sm:$0xff]
    %v1736 = vmul.f32 %v1726, %v1735
    %v1737 = vmul.f32 %v1728, %v1735
    %v1738 = vadd.f32 %v1722, %v1736
    %v1739 = vadd.f32 %v1723, %v1737
    %s1740 = scalar_lea.vmem %s1, 1032
    %v1741 = vld [vmem:[%s1740] sm:$0xff]
    %v1742 = vmul.f32 %v1728, %v1741
    %v1743 = vmul.f32 %v1730, %v1741
    %v1744 = vadd.f32 %v1738, %v1742
    %v1745 = vadd.f32 %v1739, %v1743
    %v1746 = vrot.slane %v1638, 5
    %v1747 = vrot.slane %v1639, 5
    %v1748 = vsel %vm393, %v1746, %v1747
    %v1749 = vrot.slane %v1640, 5
    %v1750 = vsel %vm393, %v1747, %v1749
    %s1753 = scalar_lea.vmem %s1, 976
    %v1754 = vld [vmem:[%s1753] sm:$0xff]
    %v1755 = vmul.f32 %v1748, %v1754
    %v1756 = vmul.f32 %v1750, %v1754
    %v1757 = vadd.f32 %v1744, %v1755
    %v1758 = vadd.f32 %v1745, %v1756
    %v1759 = vrot.slane %v1638, 6
    %v1760 = vrot.slane %v1639, 6
    %v1761 = vsel %vm407, %v1759, %v1760
    %v1762 = vrot.slane %v1640, 6
    %v1763 = vsel %vm407, %v1760, %v1762
    %s1766 = scalar_lea.vmem %s1, 984
    %v1767 = vld [vmem:[%s1766] sm:$0xff]
    %v1768 = vmul.f32 %v1761, %v1767
    %v1769 = vmul.f32 %v1763, %v1767
    %v1770 = vadd.f32 %v1757, %v1768
    %v1771 = vadd.f32 %v1758, %v1769
    %v1772 = vrot.slane %v1638, 7
    %v1773 = vrot.slane %v1639, 7
    %v1774 = vsel %vm421, %v1772, %v1773
    %v1775 = vrot.slane %v1640, 7
    %v1776 = vsel %vm421, %v1773, %v1775
    %s1779 = scalar_lea.vmem %s1, 992
    %v1780 = vld [vmem:[%s1779] sm:$0xff]
    %v1781 = vmul.f32 %v1774, %v1780
    %v1782 = vmul.f32 %v1776, %v1780
    %v1783 = vadd.f32 %v1770, %v1781
    %v1784 = vadd.f32 %v1771, %v1782
    %s1785 = sadd.s32 %s275, 10
    %s1786 = smul.u32 %s1785, 32
    %s1787 = scalar_lea.vmem [#allocation2], %s1786
    %v1788 = vld [vmem:[%s1787] sm:$0xff]
    %v1789 = vld [vmem:[%s1787 + $0x8] sm:$0xff]
    %v1790 = vld [vmem:[%s1787 + $0x10] sm:$0xff]
    %v1791 = vld [vmem:[%s1787 + $0x18] sm:$0xf]
    %s1792 = scalar_lea.vmem %s1, 1040
    %v1793 = vld [vmem:[%s1792] sm:$0xff]
    %v1794 = vmul.f32 %v1788, %v1793
    %v1795 = vmul.f32 %v1789, %v1793
    %v1796 = vadd.f32 %v1633, %v1794
    %v1797 = vadd.f32 %v1634, %v1795
    %s1798 = scalar_lea.vmem %s1, 1104
    %v1799 = vld [vmem:[%s1798] sm:$0xff]
    %v1800 = vmul.f32 %v1789, %v1799
    %v1801 = vmul.f32 %v1790, %v1799
    %v1802 = vadd.f32 %v1796, %v1800
    %v1803 = vadd.f32 %v1797, %v1801
    %v1808 = vrot.slane %v1788, 1
    %v1809 = vrot.slane %v1789, 1
    %v1810 = vsel %vm301, %v1808, %v1809
    %v1811 = vrot.slane %v1790, 1
    %v1812 = vsel %vm301, %v1809, %v1811
    %v1813 = vrot.slane %v1791, 1
    %v1814 = vsel %vm301, %v1811, %v1813
    %s1818 = scalar_lea.vmem %s1, 1048
    %v1819 = vld [vmem:[%s1818] sm:$0xff]
    %v1820 = vmul.f32 %v1810, %v1819
    %v1821 = vmul.f32 %v1812, %v1819
    %v1822 = vadd.f32 %v1802, %v1820
    %v1823 = vadd.f32 %v1803, %v1821
    %s1824 = scalar_lea.vmem %s1, 1112
    %v1825 = vld [vmem:[%s1824] sm:$0xff]
    %v1826 = vmul.f32 %v1812, %v1825
    %v1827 = vmul.f32 %v1814, %v1825
    %v1828 = vadd.f32 %v1822, %v1826
    %v1829 = vadd.f32 %v1823, %v1827
    %v1830 = vrot.slane %v1788, 2
    %v1831 = vrot.slane %v1789, 2
    %v1832 = vsel %vm324, %v1830, %v1831
    %v1833 = vrot.slane %v1790, 2
    %v1834 = vsel %vm324, %v1831, %v1833
    %v1835 = vrot.slane %v1791, 2
    %v1836 = vsel %vm324, %v1833, %v1835
    %s1840 = scalar_lea.vmem %s1, 1056
    %v1841 = vld [vmem:[%s1840] sm:$0xff]
    %v1842 = vmul.f32 %v1832, %v1841
    %v1843 = vmul.f32 %v1834, %v1841
    %v1844 = vadd.f32 %v1828, %v1842
    %v1845 = vadd.f32 %v1829, %v1843
    %s1846 = scalar_lea.vmem %s1, 1120
    %v1847 = vld [vmem:[%s1846] sm:$0xff]
    %v1848 = vmul.f32 %v1834, %v1847
    %v1849 = vmul.f32 %v1836, %v1847
    %v1850 = vadd.f32 %v1844, %v1848
    %v1851 = vadd.f32 %v1845, %v1849
    %v1852 = vrot.slane %v1788, 3
    %v1853 = vrot.slane %v1789, 3
    %v1854 = vsel %vm347, %v1852, %v1853
    %v1855 = vrot.slane %v1790, 3
    %v1856 = vsel %vm347, %v1853, %v1855
    %v1857 = vrot.slane %v1791, 3
    %v1858 = vsel %vm347, %v1855, %v1857
    %s1862 = scalar_lea.vmem %s1, 1064
    %v1863 = vld [vmem:[%s1862] sm:$0xff]
    %v1864 = vmul.f32 %v1854, %v1863
    %v1865 = vmul.f32 %v1856, %v1863
    %v1866 = vadd.f32 %v1850, %v1864
    %v1867 = vadd.f32 %v1851, %v1865
    %s1868 = scalar_lea.vmem %s1, 1128
    %v1869 = vld [vmem:[%s1868] sm:$0xff]
    %v1870 = vmul.f32 %v1856, %v1869
    %v1871 = vmul.f32 %v1858, %v1869
    %v1872 = vadd.f32 %v1866, %v1870
    %v1873 = vadd.f32 %v1867, %v1871
    %v1874 = vrot.slane %v1788, 4
    %v1875 = vrot.slane %v1789, 4
    %v1876 = vsel %vm370, %v1874, %v1875
    %v1877 = vrot.slane %v1790, 4
    %v1878 = vsel %vm370, %v1875, %v1877
    %v1879 = vrot.slane %v1791, 4
    %v1880 = vsel %vm370, %v1877, %v1879
    %s1884 = scalar_lea.vmem %s1, 1072
    %v1885 = vld [vmem:[%s1884] sm:$0xff]
    %v1886 = vmul.f32 %v1876, %v1885
    %v1887 = vmul.f32 %v1878, %v1885
    %v1888 = vadd.f32 %v1872, %v1886
    %v1889 = vadd.f32 %v1873, %v1887
    %s1890 = scalar_lea.vmem %s1, 1136
    %v1891 = vld [vmem:[%s1890] sm:$0xff]
    %v1892 = vmul.f32 %v1878, %v1891
    %v1893 = vmul.f32 %v1880, %v1891
    %v1894 = vadd.f32 %v1888, %v1892
    %v1895 = vadd.f32 %v1889, %v1893
    %v1896 = vrot.slane %v1788, 5
    %v1897 = vrot.slane %v1789, 5
    %v1898 = vsel %vm393, %v1896, %v1897
    %v1899 = vrot.slane %v1790, 5
    %v1900 = vsel %vm393, %v1897, %v1899
    %s1903 = scalar_lea.vmem %s1, 1080
    %v1904 = vld [vmem:[%s1903] sm:$0xff]
    %v1905 = vmul.f32 %v1898, %v1904
    %v1906 = vmul.f32 %v1900, %v1904
    %v1907 = vadd.f32 %v1894, %v1905
    %v1908 = vadd.f32 %v1895, %v1906
    %v1909 = vrot.slane %v1788, 6
    %v1910 = vrot.slane %v1789, 6
    %v1911 = vsel %vm407, %v1909, %v1910
    %v1912 = vrot.slane %v1790, 6
    %v1913 = vsel %vm407, %v1910, %v1912
    %s1916 = scalar_lea.vmem %s1, 1088
    %v1917 = vld [vmem:[%s1916] sm:$0xff]
    %v1918 = vmul.f32 %v1911, %v1917
    %v1919 = vmul.f32 %v1913, %v1917
    %v1920 = vadd.f32 %v1907, %v1918
    %v1921 = vadd.f32 %v1908, %v1919
    %v1922 = vrot.slane %v1788, 7
    %v1923 = vrot.slane %v1789, 7
    %v1924 = vsel %vm421, %v1922, %v1923
    %v1925 = vrot.slane %v1790, 7
    %v1926 = vsel %vm421, %v1923, %v1925
    %s1929 = scalar_lea.vmem %s1, 1096
    %v1930 = vld [vmem:[%s1929] sm:$0xff]
    %v1931 = vmul.f32 %v1924, %v1930
    %v1932 = vmul.f32 %v1926, %v1930
    %v1933 = vadd.f32 %v1920, %v1931
    %v1934 = vadd.f32 %v1921, %v1932
    %s1935 = sadd.s32 %s275, 11
    %s1936 = smul.u32 %s1935, 32
    %s1937 = scalar_lea.vmem [#allocation2], %s1936
    %v1938 = vld [vmem:[%s1937] sm:$0xff]
    %v1939 = vld [vmem:[%s1937 + $0x8] sm:$0xff]
    %v1940 = vld [vmem:[%s1937 + $0x10] sm:$0xff]
    %v1941 = vld [vmem:[%s1937 + $0x18] sm:$0xf]
    %s1942 = scalar_lea.vmem %s1, 1144
    %v1943 = vld [vmem:[%s1942] sm:$0xff]
    %v1944 = vmul.f32 %v1938, %v1943
    %v1945 = vmul.f32 %v1939, %v1943
    %v1946 = vadd.f32 %v1783, %v1944
    %v1947 = vadd.f32 %v1784, %v1945
    %s1948 = scalar_lea.vmem %s1, 1208
    %v1949 = vld [vmem:[%s1948] sm:$0xff]
    %v1950 = vmul.f32 %v1939, %v1949
    %v1951 = vmul.f32 %v1940, %v1949
    %v1952 = vadd.f32 %v1946, %v1950
    %v1953 = vadd.f32 %v1947, %v1951
    %v1958 = vrot.slane %v1938, 1
    %v1959 = vrot.slane %v1939, 1
    %v1960 = vsel %vm301, %v1958, %v1959
    %v1961 = vrot.slane %v1940, 1
    %v1962 = vsel %vm301, %v1959, %v1961
    %v1963 = vrot.slane %v1941, 1
    %v1964 = vsel %vm301, %v1961, %v1963
    %s1968 = scalar_lea.vmem %s1, 1152
    %v1969 = vld [vmem:[%s1968] sm:$0xff]
    %v1970 = vmul.f32 %v1960, %v1969
    %v1971 = vmul.f32 %v1962, %v1969
    %v1972 = vadd.f32 %v1952, %v1970
    %v1973 = vadd.f32 %v1953, %v1971
    %s1974 = scalar_lea.vmem %s1, 1216
    %v1975 = vld [vmem:[%s1974] sm:$0xff]
    %v1976 = vmul.f32 %v1962, %v1975
    %v1977 = vmul.f32 %v1964, %v1975
    %v1978 = vadd.f32 %v1972, %v1976
    %v1979 = vadd.f32 %v1973, %v1977
    %v1980 = vrot.slane %v1938, 2
    %v1981 = vrot.slane %v1939, 2
    %v1982 = vsel %vm324, %v1980, %v1981
    %v1983 = vrot.slane %v1940, 2
    %v1984 = vsel %vm324, %v1981, %v1983
    %v1985 = vrot.slane %v1941, 2
    %v1986 = vsel %vm324, %v1983, %v1985
    %s1990 = scalar_lea.vmem %s1, 1160
    %v1991 = vld [vmem:[%s1990] sm:$0xff]
    %v1992 = vmul.f32 %v1982, %v1991
    %v1993 = vmul.f32 %v1984, %v1991
    %v1994 = vadd.f32 %v1978, %v1992
    %v1995 = vadd.f32 %v1979, %v1993
    %s1996 = scalar_lea.vmem %s1, 1224
    %v1997 = vld [vmem:[%s1996] sm:$0xff]
    %v1998 = vmul.f32 %v1984, %v1997
    %v1999 = vmul.f32 %v1986, %v1997
    %v2000 = vadd.f32 %v1994, %v1998
    %v2001 = vadd.f32 %v1995, %v1999
    %v2002 = vrot.slane %v1938, 3
    %v2003 = vrot.slane %v1939, 3
    %v2004 = vsel %vm347, %v2002, %v2003
    %v2005 = vrot.slane %v1940, 3
    %v2006 = vsel %vm347, %v2003, %v2005
    %v2007 = vrot.slane %v1941, 3
    %v2008 = vsel %vm347, %v2005, %v2007
    %s2012 = scalar_lea.vmem %s1, 1168
    %v2013 = vld [vmem:[%s2012] sm:$0xff]
    %v2014 = vmul.f32 %v2004, %v2013
    %v2015 = vmul.f32 %v2006, %v2013
    %v2016 = vadd.f32 %v2000, %v2014
    %v2017 = vadd.f32 %v2001, %v2015
    %s2018 = scalar_lea.vmem %s1, 1232
    %v2019 = vld [vmem:[%s2018] sm:$0xff]
    %v2020 = vmul.f32 %v2006, %v2019
    %v2021 = vmul.f32 %v2008, %v2019
    %v2022 = vadd.f32 %v2016, %v2020
    %v2023 = vadd.f32 %v2017, %v2021
    %v2024 = vrot.slane %v1938, 4
    %v2025 = vrot.slane %v1939, 4
    %v2026 = vsel %vm370, %v2024, %v2025
    %v2027 = vrot.slane %v1940, 4
    %v2028 = vsel %vm370, %v2025, %v2027
    %v2029 = vrot.slane %v1941, 4
    %v2030 = vsel %vm370, %v2027, %v2029
    %s2034 = scalar_lea.vmem %s1, 1176
    %v2035 = vld [vmem:[%s2034] sm:$0xff]
    %v2036 = vmul.f32 %v2026, %v2035
    %v2037 = vmul.f32 %v2028, %v2035
    %v2038 = vadd.f32 %v2022, %v2036
    %v2039 = vadd.f32 %v2023, %v2037
    %s2040 = scalar_lea.vmem %s1, 1240
    %v2041 = vld [vmem:[%s2040] sm:$0xff]
    %v2042 = vmul.f32 %v2028, %v2041
    %v2043 = vmul.f32 %v2030, %v2041
    %v2044 = vadd.f32 %v2038, %v2042
    %v2045 = vadd.f32 %v2039, %v2043
    %v2046 = vrot.slane %v1938, 5
    %v2047 = vrot.slane %v1939, 5
    %v2048 = vsel %vm393, %v2046, %v2047
    %v2049 = vrot.slane %v1940, 5
    %v2050 = vsel %vm393, %v2047, %v2049
    %s2053 = scalar_lea.vmem %s1, 1184
    %v2054 = vld [vmem:[%s2053] sm:$0xff]
    %v2055 = vmul.f32 %v2048, %v2054
    %v2056 = vmul.f32 %v2050, %v2054
    %v2057 = vadd.f32 %v2044, %v2055
    %v2058 = vadd.f32 %v2045, %v2056
    %v2059 = vrot.slane %v1938, 6
    %v2060 = vrot.slane %v1939, 6
    %v2061 = vsel %vm407, %v2059, %v2060
    %v2062 = vrot.slane %v1940, 6
    %v2063 = vsel %vm407, %v2060, %v2062
    %s2066 = scalar_lea.vmem %s1, 1192
    %v2067 = vld [vmem:[%s2066] sm:$0xff]
    %v2068 = vmul.f32 %v2061, %v2067
    %v2069 = vmul.f32 %v2063, %v2067
    %v2070 = vadd.f32 %v2057, %v2068
    %v2071 = vadd.f32 %v2058, %v2069
    %v2072 = vrot.slane %v1938, 7
    %v2073 = vrot.slane %v1939, 7
    %v2074 = vsel %vm421, %v2072, %v2073
    %v2075 = vrot.slane %v1940, 7
    %v2076 = vsel %vm421, %v2073, %v2075
    %s2079 = scalar_lea.vmem %s1, 1200
    %v2080 = vld [vmem:[%s2079] sm:$0xff]
    %v2081 = vmul.f32 %v2074, %v2080
    %v2082 = vmul.f32 %v2076, %v2080
    %v2083 = vadd.f32 %v2070, %v2081
    %v2084 = vadd.f32 %v2071, %v2082
    %s2085 = sadd.s32 %s275, 12
    %s2086 = smul.u32 %s2085, 32
    %s2087 = scalar_lea.vmem [#allocation2], %s2086
    %v2088 = vld [vmem:[%s2087] sm:$0xff]
    %v2089 = vld [vmem:[%s2087 + $0x8] sm:$0xff]
    %v2090 = vld [vmem:[%s2087 + $0x10] sm:$0xff]
    %v2091 = vld [vmem:[%s2087 + $0x18] sm:$0xf]
    %s2092 = scalar_lea.vmem %s1, 1248
    %v2093 = vld [vmem:[%s2092] sm:$0xff]
    %v2094 = vmul.f32 %v2088, %v2093
    %v2095 = vmul.f32 %v2089, %v2093
    %v2096 = vadd.f32 %v1933, %v2094
    %v2097 = vadd.f32 %v1934, %v2095
    %s2098 = scalar_lea.vmem %s1, 1312
    %v2099 = vld [vmem:[%s2098] sm:$0xff]
    %v2100 = vmul.f32 %v2089, %v2099
    %v2101 = vmul.f32 %v2090, %v2099
    %v2102 = vadd.f32 %v2096, %v2100
    %v2103 = vadd.f32 %v2097, %v2101
    %v2108 = vrot.slane %v2088, 1
    %v2109 = vrot.slane %v2089, 1
    %v2110 = vsel %vm301, %v2108, %v2109
    %v2111 = vrot.slane %v2090, 1
    %v2112 = vsel %vm301, %v2109, %v2111
    %v2113 = vrot.slane %v2091, 1
    %v2114 = vsel %vm301, %v2111, %v2113
    %s2118 = scalar_lea.vmem %s1, 1256
    %v2119 = vld [vmem:[%s2118] sm:$0xff]
    %v2120 = vmul.f32 %v2110, %v2119
    %v2121 = vmul.f32 %v2112, %v2119
    %v2122 = vadd.f32 %v2102, %v2120
    %v2123 = vadd.f32 %v2103, %v2121
    %s2124 = scalar_lea.vmem %s1, 1320
    %v2125 = vld [vmem:[%s2124] sm:$0xff]
    %v2126 = vmul.f32 %v2112, %v2125
    %v2127 = vmul.f32 %v2114, %v2125
    %v2128 = vadd.f32 %v2122, %v2126
    %v2129 = vadd.f32 %v2123, %v2127
    %v2130 = vrot.slane %v2088, 2
    %v2131 = vrot.slane %v2089, 2
    %v2132 = vsel %vm324, %v2130, %v2131
    %v2133 = vrot.slane %v2090, 2
    %v2134 = vsel %vm324, %v2131, %v2133
    %v2135 = vrot.slane %v2091, 2
    %v2136 = vsel %vm324, %v2133, %v2135
    %s2140 = scalar_lea.vmem %s1, 1264
    %v2141 = vld [vmem:[%s2140] sm:$0xff]
    %v2142 = vmul.f32 %v2132, %v2141
    %v2143 = vmul.f32 %v2134, %v2141
    %v2144 = vadd.f32 %v2128, %v2142
    %v2145 = vadd.f32 %v2129, %v2143
    %s2146 = scalar_lea.vmem %s1, 1328
    %v2147 = vld [vmem:[%s2146] sm:$0xff]
    %v2148 = vmul.f32 %v2134, %v2147
    %v2149 = vmul.f32 %v2136, %v2147
    %v2150 = vadd.f32 %v2144, %v2148
    %v2151 = vadd.f32 %v2145, %v2149
    %v2152 = vrot.slane %v2088, 3
    %v2153 = vrot.slane %v2089, 3
    %v2154 = vsel %vm347, %v2152, %v2153
    %v2155 = vrot.slane %v2090, 3
    %v2156 = vsel %vm347, %v2153, %v2155
    %v2157 = vrot.slane %v2091, 3
    %v2158 = vsel %vm347, %v2155, %v2157
    %s2162 = scalar_lea.vmem %s1, 1272
    %v2163 = vld [vmem:[%s2162] sm:$0xff]
    %v2164 = vmul.f32 %v2154, %v2163
    %v2165 = vmul.f32 %v2156, %v2163
    %v2166 = vadd.f32 %v2150, %v2164
    %v2167 = vadd.f32 %v2151, %v2165
    %s2168 = scalar_lea.vmem %s1, 1336
    %v2169 = vld [vmem:[%s2168] sm:$0xff]
    %v2170 = vmul.f32 %v2156, %v2169
    %v2171 = vmul.f32 %v2158, %v2169
    %v2172 = vadd.f32 %v2166, %v2170
    %v2173 = vadd.f32 %v2167, %v2171
    %v2174 = vrot.slane %v2088, 4
    %v2175 = vrot.slane %v2089, 4
    %v2176 = vsel %vm370, %v2174, %v2175
    %v2177 = vrot.slane %v2090, 4
    %v2178 = vsel %vm370, %v2175, %v2177
    %v2179 = vrot.slane %v2091, 4
    %v2180 = vsel %vm370, %v2177, %v2179
    %s2184 = scalar_lea.vmem %s1, 1280
    %v2185 = vld [vmem:[%s2184] sm:$0xff]
    %v2186 = vmul.f32 %v2176, %v2185
    %v2187 = vmul.f32 %v2178, %v2185
    %v2188 = vadd.f32 %v2172, %v2186
    %v2189 = vadd.f32 %v2173, %v2187
    %s2190 = scalar_lea.vmem %s1, 1344
    %v2191 = vld [vmem:[%s2190] sm:$0xff]
    %v2192 = vmul.f32 %v2178, %v2191
    %v2193 = vmul.f32 %v2180, %v2191
    %v2194 = vadd.f32 %v2188, %v2192
    %v2195 = vadd.f32 %v2189, %v2193
    %v2196 = vrot.slane %v2088, 5
    %v2197 = vrot.slane %v2089, 5
    %v2198 = vsel %vm393, %v2196, %v2197
    %v2199 = vrot.slane %v2090, 5
    %v2200 = vsel %vm393, %v2197, %v2199
    %s2203 = scalar_lea.vmem %s1, 1288
    %v2204 = vld [vmem:[%s2203] sm:$0xff]
    %v2205 = vmul.f32 %v2198, %v2204
    %v2206 = vmul.f32 %v2200, %v2204
    %v2207 = vadd.f32 %v2194, %v2205
    %v2208 = vadd.f32 %v2195, %v2206
    %v2209 = vrot.slane %v2088, 6
    %v2210 = vrot.slane %v2089, 6
    %v2211 = vsel %vm407, %v2209, %v2210
    %v2212 = vrot.slane %v2090, 6
    %v2213 = vsel %vm407, %v2210, %v2212
    %s2216 = scalar_lea.vmem %s1, 1296
    %v2217 = vld [vmem:[%s2216] sm:$0xff]
    %v2218 = vmul.f32 %v2211, %v2217
    %v2219 = vmul.f32 %v2213, %v2217
    %v2220 = vadd.f32 %v2207, %v2218
    %v2221 = vadd.f32 %v2208, %v2219
    %v2222 = vrot.slane %v2088, 7
    %v2223 = vrot.slane %v2089, 7
    %v2224 = vsel %vm421, %v2222, %v2223
    %v2225 = vrot.slane %v2090, 7
    %v2226 = vsel %vm421, %v2223, %v2225
    %s2229 = scalar_lea.vmem %s1, 1304
    %v2230 = vld [vmem:[%s2229] sm:$0xff]
    %v2231 = vmul.f32 %v2224, %v2230
    %v2232 = vmul.f32 %v2226, %v2230
    %v2233 = vadd.f32 %v2220, %v2231
    %v2234 = vadd.f32 %v2221, %v2232
    %v2235 = vadd.f32 %v2233, %v2083
    %v2236 = vadd.f32 %v2234, %v2084
    %v2237 = vadd.f32 %v2235, %v269
    %v2238 = vadd.f32 %v2236, %v269
    %s2239 = smul.u32 %s275, 16
    %s2240 = scalar_lea.vmem %s3, %s2239
    %2241 = vst [vmem:[%s2240] sm:$0xff] %v2237
    %2242 = vst [vmem:[%s2240 + $0x8] sm:$0xff] %v2238
  $region36: #{_lambda_.1} parent=0 // loop_footer
    %s279 = sadd.s32 1, %s275
  $region37: #{_lambda_.1} parent=0 // loop_footer_branch
    %274 = sbr.rel target = $region33
  $region38: #{_lambda_.1} parent=0 // loop_exit
    _
  // Predicated region
  $region39: #{_lambda_.1} parent=0 // pred_check
    _
  $region40: #{_lambda_.1} parent=0 // pred_check_branch
    %2244 = sbr.rel (0) target = $region42
  $region41: #{_lambda_.1} parent=0 // pred_region
    _
  $region42: #{_lambda_.1} parent=0 // pred_fallthru
    _
  // Predicated region
  $region43: #{_lambda_.1} parent=0 // pred_check
    _
  $region44: #{_lambda_.1} parent=0 // pred_check_branch
    %2246 = sbr.rel (0) target = $region46
  $region45: #{_lambda_.1} parent=0 // pred_region
    _
  $region46: #{_lambda_.1} parent=0 // pred_fallthru
    _
  %2247 = vsyncmov [#allocation3]
  %s2248 = vpop.sfrf %2247
  %p2249 = scmp.eq.s32.totalorder %s2248, 0
  %p2250 = pneg %p2249
  %2252 = shalt.err (%p2250)

</llo_original>
